<compile_context>
chip_gen: v7x
topology: tpu7x:2x2x1
jax: 0.10.0
libtpu: 0.0.40
codegen_flags: <defaults>
</compile_context>

<pallas_src>
import jax
import jax.numpy as jnp
from jax import lax
from jax.experimental import pallas as pl
from jax.experimental.pallas import tpu as pltpu


def fused_basic_block_kernel(x_ref, w1_ref, b1_ref, w2_ref, b2_ref, o_ref,
                             band_ref, acc_ref):
    """Fused conv1+bn1+relu -> conv2+bn2 -> +residual -> relu, one batch elem.

    x_ref   : (1, H, W, Cp)   f32   input, channels padded to Cp (mult. of 128)
    w*_ref  : (3, 3*Cp, Cp)   bf16  BN-folded weights, kw taps concat'd on K
    b*_ref  : (1, Cp)         f32   BN-folded biases
    o_ref   : (1, H, W, C)    f32   unpadded output channels
    band_ref: (H+2, W, 3*Cp)  bf16  scratch: the 3 kw taps packed on lanes
    acc_ref : (H*W, Cp)       f32   scratch: MXU accumulator
    """
    _, H, W, Cp = x_ref.shape
    C = o_ref.shape[-1]
    HW = H * W

    # ---- zero ONLY the band border (never written by either stage). -------
    # A few vector stores per batch element (vs. a full-scratch memset).
    # Done every iteration so correctness never depends on scratch persistence
    # across grid steps / TensorCores.
    band_ref[0] = jnp.zeros((W, 3 * Cp), jnp.bfloat16)            # top pad row
    band_ref[H + 1] = jnp.zeros((W, 3 * Cp), jnp.bfloat16)        # bottom pad row
    zcol = jnp.zeros((H, 1, Cp), jnp.bfloat16)
    band_ref[1:H + 1, 0:1, 0:Cp] = zcol                           # kw=0 left pad col
    band_ref[1:H + 1, W - 1:W, 2 * Cp:3 * Cp] = zcol              # kw=2 right pad col

    def write_band(a3):
        # a3: (H, W, Cp) bf16 stage input. Pack the three kw-shifted views
        # side by side on the lane axis, directly (no padded-copy scratch).
        band_ref[1:H + 1, 1:W, 0:Cp] = a3[:, 0:W - 1, :]          # kw = 0
        band_ref[1:H + 1, :, Cp:2 * Cp] = a3                      # kw = 1
        band_ref[1:H + 1, 0:W - 1, 2 * Cp:3 * Cp] = a3[:, 1:W, :]  # kw = 2

    def conv_stage(w_ref):
        # Three fat MXU matmuls (M=H*W, K=3*Cp, N=Cp), f32 VMEM accumulation.
        for kh in range(3):
            slab = band_ref[kh:kh + H].reshape(HW, 3 * Cp)
            part = jnp.dot(slab, w_ref[kh], preferred_element_type=jnp.float32)
            if kh == 0:
                acc_ref[...] = part
            else:
                acc_ref[...] += part

    # ---- stage 1: conv1 + bn1 + relu ---------------------------------------
    write_band(x_ref[0].astype(jnp.bfloat16))
    conv_stage(w1_ref)
    # Fused epilogue: bias + relu + bf16 cast, written straight into the
    # reused band as the stage-2 input taps (padded out-channels stay 0).
    y = jnp.maximum(acc_ref[...] + b1_ref[...], 0.0).astype(jnp.bfloat16)
    write_band(y.reshape(H, W, Cp))

    # ---- stage 2: conv2 + bn2 + residual + relu ----------------------------
    conv_stage(w2_ref)
    z3 = (acc_ref[...] + b2_ref[...]).reshape(H, W, Cp)
    o_ref[0] = jnp.maximum(z3[:, :, 0:C] + x_ref[0, :, :, 0:C],
                           0.0).astype(o_ref.dtype)


def _fold_bn(gamma, beta, mean, var, eps=1e-5):
    scale = gamma / jnp.sqrt(var + eps)
    bias = beta - mean * scale
    return scale, bias


def basic_block_forward(x_nchw, params):
    """BasicBlock forward. x_nchw: (N, C, H, W) like PyTorch."""
    x = jnp.transpose(x_nchw, (0, 2, 3, 1))                  # NCHW -> NHWC
    N, H, W, C = x.shape
    # Keeps every (H,W)<->H*W reshape a pure sublane relabeling.
    assert W % 8 == 0, "pad W to a multiple of 8 for this kernel"
    Cp = ((C + 127) // 128) * 128                            # lane-dense channels

    s1, b1 = _fold_bn(params["g1"], params["be1"], params["m1"], params["v1"])
    s2, b2 = _fold_bn(params["g2"], params["be2"], params["m2"], params["v2"])
    # Fold BN scale into conv weights (per output channel), f32 then bf16.
    w1 = params["w1"] * s1[None, None, None, :]
    w2 = params["w2"] * s2[None, None, None, :]

    def prep_w(w):
        # (3, 3, C, C) -> zero-pad channels -> (3, 3*Cp, Cp), kw taps
        # concatenated along K to match the in-kernel lane-band layout.
        wp = jnp.pad(w, ((0, 0), (0, 0), (0, Cp - C), (0, Cp - C)))
        return wp.reshape(3, 3 * Cp, Cp).astype(jnp.bfloat16)

    def prep_b(b):
        return jnp.pad(b, (0, Cp - C)).reshape(1, Cp).astype(jnp.float32)

    # Channel-pad the input only when C is not already lane-dense (no-op for
    # real ResNet widths; 2x at C=64; only the toy C=4 pays the full factor).
    xp = x if Cp == C else jnp.pad(x, ((0, 0), (0, 0), (0, 0), (0, Cp - C)))
    w1c, w2c = prep_w(w1), prep_w(w2)
    b1p, b2p = prep_b(b1), prep_b(b2)

    out = pl.pallas_call(
        fused_basic_block_kernel,
        out_shape=jax.ShapeDtypeStruct((N, H, W, C), x.dtype),   # unpadded: no slice pass
        grid_spec=pltpu.PrefetchScalarGridSpec(
            num_scalar_prefetch=0,
            grid=(N,),
            in_specs=[
                pl.BlockSpec((1, H, W, Cp), lambda n: (n, 0, 0, 0)),
                # TODO(synk): pipeline_mode=pl.Buffered(1) on the four grid-
                # invariant weight/bias blocks to free one VMEM buffer each.
                pl.BlockSpec((3, 3 * Cp, Cp), lambda n: (0, 0, 0)),
                pl.BlockSpec((1, Cp), lambda n: (0, 0)),
                pl.BlockSpec((3, 3 * Cp, Cp), lambda n: (0, 0, 0)),
                pl.BlockSpec((1, Cp), lambda n: (0, 0)),
            ],
            out_specs=pl.BlockSpec((1, H, W, C), lambda n: (n, 0, 0, 0)),
            scratch_shapes=[
                pltpu.VMEM((H + 2, W, 3 * Cp), jnp.bfloat16),    # kw-tap band
                pltpu.VMEM((H * W, Cp), jnp.float32),            # f32 accumulator
            ],
        ),
        compiler_params=pltpu.CompilerParams(
            dimension_semantics=("parallel",),
            vmem_limit_bytes=32 * 1024 * 1024),
    )(xp, w1c, b1p, w2c, b2p)

    return jnp.transpose(out, (0, 3, 1, 2))                  # NHWC -> NCHW


def _reference_forward(x_nchw, params):
    """Pure-JAX reference (lax conv) matching the kernel's bf16 MXU inputs."""
    x = jnp.transpose(x_nchw, (0, 2, 3, 1))
    s1, b1 = _fold_bn(params["g1"], params["be1"], params["m1"], params["v1"])
    s2, b2 = _fold_bn(params["g2"], params["be2"], params["m2"], params["v2"])
    w1 = (params["w1"] * s1[None, None, None, :]).astype(jnp.bfloat16)
    w2 = (params["w2"] * s2[None, None, None, :]).astype(jnp.bfloat16)
    dn = lax.conv_dimension_numbers(x.shape, w1.shape, ("NHWC", "HWIO", "NHWC"))
    y = lax.conv_general_dilated(x.astype(jnp.bfloat16), w1, (1, 1), "SAME",
                                 dimension_numbers=dn,
                                 preferred_element_type=jnp.float32)
    y = jnp.maximum(y + b1, 0.0)
    z = lax.conv_general_dilated(y.astype(jnp.bfloat16), w2, (1, 1), "SAME",
                                 dimension_numbers=dn,
                                 preferred_element_type=jnp.float32)
    z = jnp.maximum(z + b2 + x, 0.0)
    return jnp.transpose(z, (0, 3, 1, 2))


def make_params(key, inplanes, planes):
    ks = jax.random.split(key, 10)
    return {
        # conv weights stored HWIO (kh, kw, cin, cout)
        "w1": 0.1 * jax.random.normal(ks[0], (3, 3, inplanes, planes), jnp.float32),
        "w2": 0.1 * jax.random.normal(ks[1], (3, 3, planes, planes), jnp.float32),
        "g1": 1.0 + 0.1 * jax.random.normal(ks[2], (planes,), jnp.float32),
        "be1": 0.1 * jax.random.normal(ks[3], (planes,), jnp.float32),
        "m1": 0.1 * jax.random.normal(ks[4], (planes,), jnp.float32),
        "v1": 1.0 + 0.1 * jax.random.uniform(ks[5], (planes,), jnp.float32),
        "g2": 1.0 + 0.1 * jax.random.normal(ks[6], (planes,), jnp.float32),
        "be2": 0.1 * jax.random.normal(ks[7], (planes,), jnp.float32),
        "m2": 0.1 * jax.random.normal(ks[8], (planes,), jnp.float32),
        "v2": 1.0 + 0.1 * jax.random.uniform(ks[9], (planes,), jnp.float32),
    }


if __name__ == "__main__":
    key = jax.random.PRNGKey(0)
    kx, kp = jax.random.split(key)

    N, C, H, W = 2, 4, 16, 16          # inplanes = planes = 4, stride = 1
    x = jax.random.normal(kx, (N, C, H, W), jnp.float32)
    params = make_params(kp, C, C)

    out = jax.block_until_ready(basic_block_forward(x, params))
    ref = jax.block_until_ready(_reference_forward(x, params))

    assert out.shape == (N, C, H, W)
    err = float(jnp.max(jnp.abs(out - ref)))
    assert err < 2e-2, f"max abs err too large: {err}"

    print("KERNEL_OK")
</pallas_src>

<mosaic_0001>
module attributes {stable_mosaic.version = 11 : i64} {
  func.func @fused_basic_block_kernel(%arg0: i32, %arg1: memref<1x16x16x128xf32, #tpu.memory_space<vmem>>, %arg2: memref<3x384x128xbf16, #tpu.memory_space<vmem>>, %arg3: memref<1x128xf32, #tpu.memory_space<vmem>>, %arg4: memref<3x384x128xbf16, #tpu.memory_space<vmem>>, %arg5: memref<1x128xf32, #tpu.memory_space<vmem>>, %arg6: memref<1x16x16x4xf32, #tpu.memory_space<vmem>>, %arg7: memref<18x16x384xbf16, #tpu.memory_space<vmem>>, %arg8: memref<256x128xf32, #tpu.memory_space<vmem>>) attributes {dimension_semantics = [#tpu.dimension_semantics<parallel>], iteration_bounds = array<i64: 2>, scalar_prefetch = 0 : i64, scratch_operands = 2 : i64, tpu.core_type = #tpu.core_type<tc>, window_params = [{transform_indices = @transform_0, window_bounds = array<i64: 1, 16, 16, 128>}, {pipeline_mode = #tpu.pipeline_mode<synchronous>, transform_indices = @transform_1, window_bounds = array<i64: 3, 384, 128>}, {pipeline_mode = #tpu.pipeline_mode<synchronous>, transform_indices = @transform_2, window_bounds = array<i64: 1, 128>}, {pipeline_mode = #tpu.pipeline_mode<synchronous>, transform_indices = @transform_3, window_bounds = array<i64: 3, 384, 128>}, {pipeline_mode = #tpu.pipeline_mode<synchronous>, transform_indices = @transform_4, window_bounds = array<i64: 1, 128>}, {transform_indices = @transform_5, window_bounds = array<i64: 1, 16, 16, 4>}]} {
    %cst = arith.constant 0.000000e+00 : bf16
    %0 = vector.broadcast %cst : bf16 to vector<16x384xbf16>
    %c0 = arith.constant 0 : index
    %c0_0 = arith.constant 0 : index
    %c0_1 = arith.constant 0 : index
    %1 = vector.load %arg7[%c0, %c0_0, %c0_1] : memref<18x16x384xbf16, #tpu.memory_space<vmem>>, vector<1x16x384xbf16>
    %2 = vector.shape_cast %1 : vector<1x16x384xbf16> to vector<16x384xbf16>
    %3 = vector.shape_cast %0 : vector<16x384xbf16> to vector<1x16x384xbf16>
    tpu.vector_store %arg7[%c0, %c0_0, %c0_1], %3 {strides = array<i32>} : memref<18x16x384xbf16, #tpu.memory_space<vmem>>, vector<1x16x384xbf16>,
    %cst_2 = arith.constant 0.000000e+00 : bf16
    %4 = vector.broadcast %cst_2 : bf16 to vector<16x384xbf16>
    %c17 = arith.constant 17 : index
    %c0_3 = arith.constant 0 : index
    %c0_4 = arith.constant 0 : index
    %5 = vector.load %arg7[%c17, %c0_3, %c0_4] : memref<18x16x384xbf16, #tpu.memory_space<vmem>>, vector<1x16x384xbf16>
    %6 = vector.shape_cast %5 : vector<1x16x384xbf16> to vector<16x384xbf16>
    %7 = vector.shape_cast %4 : vector<16x384xbf16> to vector<1x16x384xbf16>
    tpu.vector_store %arg7[%c17, %c0_3, %c0_4], %7 {strides = array<i32>} : memref<18x16x384xbf16, #tpu.memory_space<vmem>>, vector<1x16x384xbf16>,
    %cst_5 = arith.constant 0.000000e+00 : bf16
    %8 = vector.broadcast %cst_5 : bf16 to vector<16x1x128xbf16>
    %c1 = arith.constant 1 : index
    %c0_6 = arith.constant 0 : index
    %c0_7 = arith.constant 0 : index
    %9 = vector.load %arg7[%c1, %c0_6, %c0_7] : memref<18x16x384xbf16, #tpu.memory_space<vmem>>, vector<16x1x128xbf16>
    tpu.vector_store %arg7[%c1, %c0_6, %c0_7], %8 {strides = array<i32>} : memref<18x16x384xbf16, #tpu.memory_space<vmem>>, vector<16x1x128xbf16>,
    %c1_8 = arith.constant 1 : index
    %c15 = arith.constant 15 : index
    %c256 = arith.constant 256 : index
    %10 = vector.load %arg7[%c1_8, %c15, %c256] : memref<18x16x384xbf16, #tpu.memory_space<vmem>>, vector<16x1x128xbf16>
    tpu.vector_store %arg7[%c1_8, %c15, %c256], %8 {strides = array<i32>} : memref<18x16x384xbf16, #tpu.memory_space<vmem>>, vector<16x1x128xbf16>,
    %c0_9 = arith.constant 0 : index
    %c0_10 = arith.constant 0 : index
    %c0_11 = arith.constant 0 : index
    %c0_12 = arith.constant 0 : index
    %11 = vector.load %arg1[%c0_9, %c0_10, %c0_11, %c0_12] : memref<1x16x16x128xf32, #tpu.memory_space<vmem>>, vector<1x16x16x128xf32>
    %12 = vector.shape_cast %11 : vector<1x16x16x128xf32> to vector<16x16x128xf32>
    %13 = arith.truncf %12 : vector<16x16x128xf32> to vector<16x16x128xbf16>
    %14 = vector.extract_strided_slice %13 {offsets = [0, 0, 0], sizes = [16, 15, 128], strides = [1, 1, 1]} : vector<16x16x128xbf16> to vector<16x15x128xbf16>
    %c1_13 = arith.constant 1 : index
    %c1_14 = arith.constant 1 : index
    %c0_15 = arith.constant 0 : index
    %15 = vector.load %arg7[%c1_13, %c1_14, %c0_15] : memref<18x16x384xbf16, #tpu.memory_space<vmem>>, vector<16x15x128xbf16>
    tpu.vector_store %arg7[%c1_13, %c1_14, %c0_15], %14 {strides = array<i32>} : memref<18x16x384xbf16, #tpu.memory_space<vmem>>, vector<16x15x128xbf16>,
    %c1_16 = arith.constant 1 : index
    %c0_17 = arith.constant 0 : index
    %c128 = arith.constant 128 : index
    %16 = vector.load %arg7[%c1_16, %c0_17, %c128] : memref<18x16x384xbf16, #tpu.memory_space<vmem>>, vector<16x16x128xbf16>
    tpu.vector_store %arg7[%c1_16, %c0_17, %c128], %13 {strides = array<i32>} : memref<18x16x384xbf16, #tpu.memory_space<vmem>>, vector<16x16x128xbf16>,
    %17 = vector.extract_strided_slice %13 {offsets = [0, 1, 0], sizes = [16, 15, 128], strides = [1, 1, 1]} : vector<16x16x128xbf16> to vector<16x15x128xbf16>
    %c1_18 = arith.constant 1 : index
    %c0_19 = arith.constant 0 : index
    %c256_20 = arith.constant 256 : index
    %18 = vector.load %arg7[%c1_18, %c0_19, %c256_20] : memref<18x16x384xbf16, #tpu.memory_space<vmem>>, vector<16x15x128xbf16>
    tpu.vector_store %arg7[%c1_18, %c0_19, %c256_20], %17 {strides = array<i32>} : memref<18x16x384xbf16, #tpu.memory_space<vmem>>, vector<16x15x128xbf16>,
    %c0_21 = arith.constant 0 : index
    %c0_22 = arith.constant 0 : index
    %c0_23 = arith.constant 0 : index
    %19 = vector.load %arg7[%c0_21, %c0_22, %c0_23] : memref<18x16x384xbf16, #tpu.memory_space<vmem>>, vector<16x16x384xbf16>
    %20 = vector.shape_cast %19 : vector<16x16x384xbf16> to vector<256x384xbf16>
    %c0_24 = arith.constant 0 : index
    %c0_25 = arith.constant 0 : index
    %c0_26 = arith.constant 0 : index
    %21 = vector.load %arg2[%c0_24, %c0_25, %c0_26] : memref<3x384x128xbf16, #tpu.memory_space<vmem>>, vector<1x384x128xbf16>
    %22 = vector.shape_cast %21 : vector<1x384x128xbf16> to vector<384x128xbf16>
    %cst_27 = arith.constant dense<0.000000e+00> : vector<256x128xf32>
    %23 = tpu.matmul %20, %22, %cst_27 {dimension_numbers = #tpu.dot_dimension_numbers<[1], [0], [0], [1], [0, 0, 1, 1], [], []>} : vector<256x384xbf16>, vector<384x128xbf16>, vector<256x128xf32> -> vector<256x128xf32>
    %c0_28 = arith.constant 0 : index
    %c0_29 = arith.constant 0 : index
    %24 = vector.load %arg8[%c0_28, %c0_29] : memref<256x128xf32, #tpu.memory_space<vmem>>, vector<256x128xf32>
    tpu.vector_store %arg8[%c0_28, %c0_29], %23 {strides = array<i32>} : memref<256x128xf32, #tpu.memory_space<vmem>>, vector<256x128xf32>,
    %c1_30 = arith.constant 1 : index
    %c0_31 = arith.constant 0 : index
    %c0_32 = arith.constant 0 : index
    %25 = vector.load %arg7[%c1_30, %c0_31, %c0_32] : memref<18x16x384xbf16, #tpu.memory_space<vmem>>, vector<16x16x384xbf16>
    %26 = vector.shape_cast %25 : vector<16x16x384xbf16> to vector<256x384xbf16>
    %c1_33 = arith.constant 1 : index
    %c0_34 = arith.constant 0 : index
    %c0_35 = arith.constant 0 : index
    %27 = vector.load %arg2[%c1_33, %c0_34, %c0_35] : memref<3x384x128xbf16, #tpu.memory_space<vmem>>, vector<1x384x128xbf16>
    %28 = vector.shape_cast %27 : vector<1x384x128xbf16> to vector<384x128xbf16>
    %cst_36 = arith.constant dense<0.000000e+00> : vector<256x128xf32>
    %29 = tpu.matmul %26, %28, %cst_36 {dimension_numbers = #tpu.dot_dimension_numbers<[1], [0], [0], [1], [0, 0, 1, 1], [], []>} : vector<256x384xbf16>, vector<384x128xbf16>, vector<256x128xf32> -> vector<256x128xf32>
    %c0_37 = arith.constant 0 : index
    %c0_38 = arith.constant 0 : index
    %30 = vector.load %arg8[%c0_37, %c0_38] : memref<256x128xf32, #tpu.memory_space<vmem>>, vector<256x128xf32>
    %31 = arith.addf %30, %29 : vector<256x128xf32>
    %c0_39 = arith.constant 0 : index
    %c0_40 = arith.constant 0 : index
    %32 = vector.load %arg8[%c0_39, %c0_40] : memref<256x128xf32, #tpu.memory_space<vmem>>, vector<256x128xf32>
    tpu.vector_store %arg8[%c0_39, %c0_40], %31 {strides = array<i32>} : memref<256x128xf32, #tpu.memory_space<vmem>>, vector<256x128xf32>,
    %c2 = arith.constant 2 : index
    %c0_41 = arith.constant 0 : index
    %c0_42 = arith.constant 0 : index
    %33 = vector.load %arg7[%c2, %c0_41, %c0_42] : memref<18x16x384xbf16, #tpu.memory_space<vmem>>, vector<16x16x384xbf16>
    %34 = vector.shape_cast %33 : vector<16x16x384xbf16> to vector<256x384xbf16>
    %c2_43 = arith.constant 2 : index
    %c0_44 = arith.constant 0 : index
    %c0_45 = arith.constant 0 : index
    %35 = vector.load %arg2[%c2_43, %c0_44, %c0_45] : memref<3x384x128xbf16, #tpu.memory_space<vmem>>, vector<1x384x128xbf16>
    %36 = vector.shape_cast %35 : vector<1x384x128xbf16> to vector<384x128xbf16>
    %cst_46 = arith.constant dense<0.000000e+00> : vector<256x128xf32>
    %37 = tpu.matmul %34, %36, %cst_46 {dimension_numbers = #tpu.dot_dimension_numbers<[1], [0], [0], [1], [0, 0, 1, 1], [], []>} : vector<256x384xbf16>, vector<384x128xbf16>, vector<256x128xf32> -> vector<256x128xf32>
    %c0_47 = arith.constant 0 : index
    %c0_48 = arith.constant 0 : index
    %38 = vector.load %arg8[%c0_47, %c0_48] : memref<256x128xf32, #tpu.memory_space<vmem>>, vector<256x128xf32>
    %39 = arith.addf %38, %37 : vector<256x128xf32>
    %c0_49 = arith.constant 0 : index
    %c0_50 = arith.constant 0 : index
    %40 = vector.load %arg8[%c0_49, %c0_50] : memref<256x128xf32, #tpu.memory_space<vmem>>, vector<256x128xf32>
    tpu.vector_store %arg8[%c0_49, %c0_50], %39 {strides = array<i32>} : memref<256x128xf32, #tpu.memory_space<vmem>>, vector<256x128xf32>,
    %c0_51 = arith.constant 0 : index
    %c0_52 = arith.constant 0 : index
    %41 = vector.load %arg8[%c0_51, %c0_52] : memref<256x128xf32, #tpu.memory_space<vmem>>, vector<256x128xf32>
    %c0_53 = arith.constant 0 : index
    %c0_54 = arith.constant 0 : index
    %42 = vector.load %arg3[%c0_53, %c0_54] : memref<1x128xf32, #tpu.memory_space<vmem>>, vector<1x128xf32>
    %43 = vector.broadcast %42 : vector<1x128xf32> to vector<256x128xf32>
    %44 = arith.addf %41, %43 : vector<256x128xf32>
    %cst_55 = arith.constant 0.000000e+00 : f32
    %45 = vector.broadcast %cst_55 : f32 to vector<256x128xf32>
    %46 = arith.maximumf %44, %45 : vector<256x128xf32>
    %47 = arith.truncf %46 : vector<256x128xf32> to vector<256x128xbf16>
    %48 = vector.shape_cast %47 : vector<256x128xbf16> to vector<16x16x128xbf16>
    %49 = vector.extract_strided_slice %48 {offsets = [0, 0, 0], sizes = [16, 15, 128], strides = [1, 1, 1]} : vector<16x16x128xbf16> to vector<16x15x128xbf16>
    %c1_56 = arith.constant 1 : index
    %c1_57 = arith.constant 1 : index
    %c0_58 = arith.constant 0 : index
    %50 = vector.load %arg7[%c1_56, %c1_57, %c0_58] : memref<18x16x384xbf16, #tpu.memory_space<vmem>>, vector<16x15x128xbf16>
    tpu.vector_store %arg7[%c1_56, %c1_57, %c0_58], %49 {strides = array<i32>} : memref<18x16x384xbf16, #tpu.memory_space<vmem>>, vector<16x15x128xbf16>,
    %c1_59 = arith.constant 1 : index
    %c0_60 = arith.constant 0 : index
    %c128_61 = arith.constant 128 : index
    %51 = vector.load %arg7[%c1_59, %c0_60, %c128_61] : memref<18x16x384xbf16, #tpu.memory_space<vmem>>, vector<16x16x128xbf16>
    tpu.vector_store %arg7[%c1_59, %c0_60, %c128_61], %48 {strides = array<i32>} : memref<18x16x384xbf16, #tpu.memory_space<vmem>>, vector<16x16x128xbf16>,
    %52 = vector.extract_strided_slice %48 {offsets = [0, 1, 0], sizes = [16, 15, 128], strides = [1, 1, 1]} : vector<16x16x128xbf16> to vector<16x15x128xbf16>
    %c1_62 = arith.constant 1 : index
    %c0_63 = arith.constant 0 : index
    %c256_64 = arith.constant 256 : index
    %53 = vector.load %arg7[%c1_62, %c0_63, %c256_64] : memref<18x16x384xbf16, #tpu.memory_space<vmem>>, vector<16x15x128xbf16>
    tpu.vector_store %arg7[%c1_62, %c0_63, %c256_64], %52 {strides = array<i32>} : memref<18x16x384xbf16, #tpu.memory_space<vmem>>, vector<16x15x128xbf16>,
    %c0_65 = arith.constant 0 : index
    %c0_66 = arith.constant 0 : index
    %c0_67 = arith.constant 0 : index
    %54 = vector.load %arg7[%c0_65, %c0_66, %c0_67] : memref<18x16x384xbf16, #tpu.memory_space<vmem>>, vector<16x16x384xbf16>
    %55 = vector.shape_cast %54 : vector<16x16x384xbf16> to vector<256x384xbf16>
    %c0_68 = arith.constant 0 : index
    %c0_69 = arith.constant 0 : index
    %c0_70 = arith.constant 0 : index
    %56 = vector.load %arg4[%c0_68, %c0_69, %c0_70] : memref<3x384x128xbf16, #tpu.memory_space<vmem>>, vector<1x384x128xbf16>
    %57 = vector.shape_cast %56 : vector<1x384x128xbf16> to vector<384x128xbf16>
    %cst_71 = arith.constant dense<0.000000e+00> : vector<256x128xf32>
    %58 = tpu.matmul %55, %57, %cst_71 {dimension_numbers = #tpu.dot_dimension_numbers<[1], [0], [0], [1], [0, 0, 1, 1], [], []>} : vector<256x384xbf16>, vector<384x128xbf16>, vector<256x128xf32> -> vector<256x128xf32>
    %c0_72 = arith.constant 0 : index
    %c0_73 = arith.constant 0 : index
    %59 = vector.load %arg8[%c0_72, %c0_73] : memref<256x128xf32, #tpu.memory_space<vmem>>, vector<256x128xf32>
    tpu.vector_store %arg8[%c0_72, %c0_73], %58 {strides = array<i32>} : memref<256x128xf32, #tpu.memory_space<vmem>>, vector<256x128xf32>,
    %c1_74 = arith.constant 1 : index
    %c0_75 = arith.constant 0 : index
    %c0_76 = arith.constant 0 : index
    %60 = vector.load %arg7[%c1_74, %c0_75, %c0_76] : memref<18x16x384xbf16, #tpu.memory_space<vmem>>, vector<16x16x384xbf16>
    %61 = vector.shape_cast %60 : vector<16x16x384xbf16> to vector<256x384xbf16>
    %c1_77 = arith.constant 1 : index
    %c0_78 = arith.constant 0 : index
    %c0_79 = arith.constant 0 : index
    %62 = vector.load %arg4[%c1_77, %c0_78, %c0_79] : memref<3x384x128xbf16, #tpu.memory_space<vmem>>, vector<1x384x128xbf16>
    %63 = vector.shape_cast %62 : vector<1x384x128xbf16> to vector<384x128xbf16>
    %cst_80 = arith.constant dense<0.000000e+00> : vector<256x128xf32>
    %64 = tpu.matmul %61, %63, %cst_80 {dimension_numbers = #tpu.dot_dimension_numbers<[1], [0], [0], [1], [0, 0, 1, 1], [], []>} : vector<256x384xbf16>, vector<384x128xbf16>, vector<256x128xf32> -> vector<256x128xf32>
    %c0_81 = arith.constant 0 : index
    %c0_82 = arith.constant 0 : index
    %65 = vector.load %arg8[%c0_81, %c0_82] : memref<256x128xf32, #tpu.memory_space<vmem>>, vector<256x128xf32>
    %66 = arith.addf %65, %64 : vector<256x128xf32>
    %c0_83 = arith.constant 0 : index
    %c0_84 = arith.constant 0 : index
    %67 = vector.load %arg8[%c0_83, %c0_84] : memref<256x128xf32, #tpu.memory_space<vmem>>, vector<256x128xf32>
    tpu.vector_store %arg8[%c0_83, %c0_84], %66 {strides = array<i32>} : memref<256x128xf32, #tpu.memory_space<vmem>>, vector<256x128xf32>,
    %c2_85 = arith.constant 2 : index
    %c0_86 = arith.constant 0 : index
    %c0_87 = arith.constant 0 : index
    %68 = vector.load %arg7[%c2_85, %c0_86, %c0_87] : memref<18x16x384xbf16, #tpu.memory_space<vmem>>, vector<16x16x384xbf16>
    %69 = vector.shape_cast %68 : vector<16x16x384xbf16> to vector<256x384xbf16>
    %c2_88 = arith.constant 2 : index
    %c0_89 = arith.constant 0 : index
    %c0_90 = arith.constant 0 : index
    %70 = vector.load %arg4[%c2_88, %c0_89, %c0_90] : memref<3x384x128xbf16, #tpu.memory_space<vmem>>, vector<1x384x128xbf16>
    %71 = vector.shape_cast %70 : vector<1x384x128xbf16> to vector<384x128xbf16>
    %cst_91 = arith.constant dense<0.000000e+00> : vector<256x128xf32>
    %72 = tpu.matmul %69, %71, %cst_91 {dimension_numbers = #tpu.dot_dimension_numbers<[1], [0], [0], [1], [0, 0, 1, 1], [], []>} : vector<256x384xbf16>, vector<384x128xbf16>, vector<256x128xf32> -> vector<256x128xf32>
    %c0_92 = arith.constant 0 : index
    %c0_93 = arith.constant 0 : index
    %73 = vector.load %arg8[%c0_92, %c0_93] : memref<256x128xf32, #tpu.memory_space<vmem>>, vector<256x128xf32>
    %74 = arith.addf %73, %72 : vector<256x128xf32>
    %c0_94 = arith.constant 0 : index
    %c0_95 = arith.constant 0 : index
    %75 = vector.load %arg8[%c0_94, %c0_95] : memref<256x128xf32, #tpu.memory_space<vmem>>, vector<256x128xf32>
    tpu.vector_store %arg8[%c0_94, %c0_95], %74 {strides = array<i32>} : memref<256x128xf32, #tpu.memory_space<vmem>>, vector<256x128xf32>,
    %c0_96 = arith.constant 0 : index
    %c0_97 = arith.constant 0 : index
    %76 = vector.load %arg8[%c0_96, %c0_97] : memref<256x128xf32, #tpu.memory_space<vmem>>, vector<256x128xf32>
    %c0_98 = arith.constant 0 : index
    %c0_99 = arith.constant 0 : index
    %77 = vector.load %arg5[%c0_98, %c0_99] : memref<1x128xf32, #tpu.memory_space<vmem>>, vector<1x128xf32>
    %78 = vector.broadcast %77 : vector<1x128xf32> to vector<256x128xf32>
    %79 = arith.addf %76, %78 : vector<256x128xf32>
    %80 = vector.shape_cast %79 : vector<256x128xf32> to vector<16x16x128xf32>
    %81 = vector.extract_strided_slice %80 {offsets = [0, 0, 0], sizes = [16, 16, 4], strides = [1, 1, 1]} : vector<16x16x128xf32> to vector<16x16x4xf32>
    %c0_100 = arith.constant 0 : index
    %c0_101 = arith.constant 0 : index
    %c0_102 = arith.constant 0 : index
    %c0_103 = arith.constant 0 : index
    %82 = vector.load %arg1[%c0_100, %c0_101, %c0_102, %c0_103] : memref<1x16x16x128xf32, #tpu.memory_space<vmem>>, vector<1x16x16x4xf32>
    %83 = vector.shape_cast %82 : vector<1x16x16x4xf32> to vector<16x16x4xf32>
    %84 = arith.addf %81, %83 : vector<16x16x4xf32>
    %cst_104 = arith.constant 0.000000e+00 : f32
    %85 = vector.broadcast %cst_104 : f32 to vector<16x16x4xf32>
    %86 = arith.maximumf %84, %85 : vector<16x16x4xf32>
    %c0_105 = arith.constant 0 : index
    %c0_106 = arith.constant 0 : index
    %c0_107 = arith.constant 0 : index
    %c0_108 = arith.constant 0 : index
    %87 = vector.load %arg6[%c0_105, %c0_106, %c0_107, %c0_108] : memref<1x16x16x4xf32, #tpu.memory_space<vmem>>, vector<1x16x16x4xf32>
    %88 = vector.shape_cast %87 : vector<1x16x16x4xf32> to vector<16x16x4xf32>
    %89 = vector.shape_cast %86 : vector<16x16x4xf32> to vector<1x16x16x4xf32>
    tpu.vector_store %arg6[%c0_105, %c0_106, %c0_107, %c0_108], %89 {strides = array<i32>} : memref<1x16x16x4xf32, #tpu.memory_space<vmem>>, vector<1x16x16x4xf32>,
    return
  }
  func.func @transform_0(%arg0: i32) -> (i32, i32, i32, i32) {
    %c0_i32 = arith.constant 0 : i32
    %c0_i32_0 = arith.constant 0 : i32
    %c0_i32_1 = arith.constant 0 : i32
    %c0_i32_2 = arith.constant 0 : i32
    return %arg0, %c0_i32, %c0_i32_0, %c0_i32_1 : i32, i32, i32, i32
  }
  func.func @transform_1(%arg0: i32) -> (i32, i32, i32) {
    %c0_i32 = arith.constant 0 : i32
    %c0_i32_0 = arith.constant 0 : i32
    %c0_i32_1 = arith.constant 0 : i32
    %c0_i32_2 = arith.constant 0 : i32
    return %c0_i32, %c0_i32_0, %c0_i32_1 : i32, i32, i32
  }
  func.func @transform_2(%arg0: i32) -> (i32, i32) {
    %c0_i32 = arith.constant 0 : i32
    %c0_i32_0 = arith.constant 0 : i32
    %c0_i32_1 = arith.constant 0 : i32
    return %c0_i32, %c0_i32_0 : i32, i32
  }
  func.func @transform_3(%arg0: i32) -> (i32, i32, i32) {
    %c0_i32 = arith.constant 0 : i32
    %c0_i32_0 = arith.constant 0 : i32
    %c0_i32_1 = arith.constant 0 : i32
    %c0_i32_2 = arith.constant 0 : i32
    return %c0_i32, %c0_i32_0, %c0_i32_1 : i32, i32, i32
  }
  func.func @transform_4(%arg0: i32) -> (i32, i32) {
    %c0_i32 = arith.constant 0 : i32
    %c0_i32_0 = arith.constant 0 : i32
    %c0_i32_1 = arith.constant 0 : i32
    return %c0_i32, %c0_i32_0 : i32, i32
  }
  func.func @transform_5(%arg0: i32) -> (i32, i32, i32, i32) {
    %c0_i32 = arith.constant 0 : i32
    %c0_i32_0 = arith.constant 0 : i32
    %c0_i32_1 = arith.constant 0 : i32
    %c0_i32_2 = arith.constant 0 : i32
    return %arg0, %c0_i32, %c0_i32_0, %c0_i32_1 : i32, i32, i32, i32
  }
}

</mosaic_0001>

<llo_original>
// kernel: tpu_custom_call.1
$region0: #{tpu_custom_call.1}
  #allocation0 [shape = 'u32[]', space=smem, size = 0x4, offset = 0x4, fixed_abs, tag = 'smem constant byte address 0x4 - core index']
  #allocation1 [shape = 'u32[144,128]{1,0:T(1,128)}', space=vmem, size = 0x12000, scoped, tag = 'internal scratch']
  #allocation2 [shape = 'bf16[18,16,384]{2,1,0:T(16,128)(2,1)}', space=vmem, size = 0x36000, scoped, tag = 'scratch operand']
  #allocation3 [shape = 'f32[256,128]{1,0:T(8,128)}', space=vmem, size = 0x20000, scoped, tag = 'scratch operand']
  %s0 = inlined_call_operand.hbm [shape: f32[2,16,16,128], index: 0, kind: input, shape index: {}]
  %s1 = inlined_call_operand.hbm [shape: bf16[3,384,128], index: 1, kind: input, shape index: {}]
  %s2 = inlined_call_operand.vmem [shape: f32[1,128], index: 2, kind: input, shape index: {}]
  %s3 = inlined_call_operand.hbm [shape: bf16[3,384,128], index: 3, kind: input, shape index: {}]
  %s4 = inlined_call_operand.vmem [shape: f32[1,128], index: 4, kind: input, shape index: {}]
  %s5 = inlined_call_operand.vmem [shape: f32[2,16,16,4], index: 5, kind: output, shape index: {}]
  %s6 = sld [smem:[#allocation0]]
  $region65: #{tpu_custom_call.1} parent=0
    _
  %s8 = ssub.s32 1, %s6
  %s9 = scalar_select 0, %s8, %s6
  $region1: #{tpu_custom_call.1} parent=0
    #allocation4 [shape = 'u8[262144]{0}', space=vmem, size = 0x40000, scoped, tag = 'input window, operand 0']
    #allocation5 [shape = 's32[2]{0}', space=sflag, size = 0x8, scoped, tag = 'scoped memory for tpu_custom_call.1']
    #allocation6 [shape = 'u8[294912]{0}', space=vmem, size = 0x48000, scoped, tag = 'input window, operand 1, single buffered']
    #allocation7 [shape = 's32[1]{0}', space=sflag, size = 0x4, scoped, tag = 'scoped memory for tpu_custom_call.1']
    #allocation8 [shape = 'u8[294912]{0}', space=vmem, size = 0x48000, scoped, tag = 'input window, operand 3, single buffered']
    %10 = vsyncpa [#allocation5], 0
    %s11 = scalar_lea.sflag [#allocation5], 1
    %12 = vsyncpa %s11, 0
    %13 = vsyncpa [#allocation7], 0
    loop: start=0, step=1, limit=4
    $region2: #{tpu_custom_call.1} parent=1 // loop_pre_header
      _
    $region3: #{tpu_custom_call.1} parent=1 // loop_header
      %s15 = sphi 0, %s19
      %p16 = scmp.ge.s32.totalorder %s15, 4
      %s25 = sphi 0, %s27
      %s28 = sphi 0, %s25
      %s29 = sphi 0, %s28
      %s45 = sphi 0, %s29
      %s49 = sphi 0, %s49
      %s51 = sphi 0, %s49
      %s52 = sphi 0, %s51
      %s66 = sphi 0, %s52
      %s70 = sphi 0, %s70
      %s72 = sphi 0, %s70
      %s73 = sphi 0, %s72
      %s87 = sphi 0, %s73
      %s91 = sphi 0, %s91
      %s93 = sphi 0, %s91
      %s94 = sphi 0, %s93
      %s108 = sphi 0, %s94
      %s112 = sphi 0, %s112
      %s114 = sphi 0, %s112
      %s115 = sphi 0, %s114
      %s129 = sphi 0, %s115
      %s135 = sphi 0, %s137
      %s138 = sphi 0, %s135
      %s139 = sphi 0, %s138
      %s155 = sphi 0, %s139
    $region4: #{tpu_custom_call.1} parent=1 // loop_header_branch
      %18 = sbr.rel (%p16) target = $region8
    $region5: #{tpu_custom_call.1} parent=1 // loop_body
      %s20 = ssub.s32 %s15, 1
      %s21 = ssub.s32 %s15, 2
      %s22 = sadd.s32 %s15, 1
      %s23 = ssub.s32 %s15, %s22
      %p24 = scmp.eq.s32.totalorder %s23, 0
      %s26 = sadd.s32 %s25, 1
      %s27 = scalar_select %p24, %s25, %s26
      %p30 = pneg %p24
      %p31 = scmp.eq.s32.totalorder %s15, 1
      %p32 = por %p30, %p31
      %p33 = scmp.ne.s32.totalorder %s25, %s28
      %p34 = scmp.eq.s32.totalorder %s15, 0
      %p35 = por %p33, %p34
      %p36 = scmp.ne.s32.totalorder %s25, %s28
      %p37 = scmp.eq.s32.totalorder %s20, 1
      %p38 = por %p36, %p37
      %p39 = scmp.ne.s32.totalorder %s28, %s29
      %p40 = scmp.eq.s32.totalorder %s20, 0
      %p41 = por %p39, %p40
      %p42 = scmp.ne.s32.totalorder %s28, %s29
      %p43 = scmp.eq.s32.totalorder %s21, 1
      %p44 = por %p42, %p43
      %p46 = scmp.ne.s32.totalorder %s29, %s45
      %p47 = scmp.eq.s32.totalorder %s21, 0
      %p48 = por %p46, %p47
      %s50 = sadd.s32 %s49, 1
      %p53 = scmp.eq.s32.totalorder %s15, 1
      %p54 = scmp.ne.s32.totalorder %s49, %s51
      %p55 = scmp.eq.s32.totalorder %s15, 0
      %p56 = por %p54, %p55
      %p57 = scmp.ne.s32.totalorder %s49, %s51
      %p58 = scmp.eq.s32.totalorder %s20, 1
      %p59 = por %p57, %p58
      %p60 = scmp.ne.s32.totalorder %s51, %s52
      %p61 = scmp.eq.s32.totalorder %s20, 0
      %p62 = por %p60, %p61
      %p63 = scmp.ne.s32.totalorder %s51, %s52
      %p64 = scmp.eq.s32.totalorder %s21, 1
      %p65 = por %p63, %p64
      %p67 = scmp.ne.s32.totalorder %s52, %s66
      %p68 = scmp.eq.s32.totalorder %s21, 0
      %p69 = por %p67, %p68
      %s71 = sadd.s32 %s70, 1
      %p74 = scmp.eq.s32.totalorder %s15, 1
      %p75 = scmp.ne.s32.totalorder %s70, %s72
      %p76 = scmp.eq.s32.totalorder %s15, 0
      %p77 = por %p75, %p76
      %p78 = scmp.ne.s32.totalorder %s70, %s72
      %p79 = scmp.eq.s32.totalorder %s20, 1
      %p80 = por %p78, %p79
      %p81 = scmp.ne.s32.totalorder %s72, %s73
      %p82 = scmp.eq.s32.totalorder %s20, 0
      %p83 = por %p81, %p82
      %p84 = scmp.ne.s32.totalorder %s72, %s73
      %p85 = scmp.eq.s32.totalorder %s21, 1
      %p86 = por %p84, %p85
      %p88 = scmp.ne.s32.totalorder %s73, %s87
      %p89 = scmp.eq.s32.totalorder %s21, 0
      %p90 = por %p88, %p89
      %s92 = sadd.s32 %s91, 1
      %p95 = scmp.eq.s32.totalorder %s15, 1
      %p96 = scmp.ne.s32.totalorder %s91, %s93
      %p97 = scmp.eq.s32.totalorder %s15, 0
      %p98 = por %p96, %p97
      %p99 = scmp.ne.s32.totalorder %s91, %s93
      %p100 = scmp.eq.s32.totalorder %s20, 1
      %p101 = por %p99, %p100
      %p102 = scmp.ne.s32.totalorder %s93, %s94
      %p103 = scmp.eq.s32.totalorder %s20, 0
      %p104 = por %p102, %p103
      %p105 = scmp.ne.s32.totalorder %s93, %s94
      %p106 = scmp.eq.s32.totalorder %s21, 1
      %p107 = por %p105, %p106
      %p109 = scmp.ne.s32.totalorder %s94, %s108
      %p110 = scmp.eq.s32.totalorder %s21, 0
      %p111 = por %p109, %p110
      %s113 = sadd.s32 %s112, 1
      %p116 = scmp.eq.s32.totalorder %s15, 1
      %p117 = scmp.ne.s32.totalorder %s112, %s114
      %p118 = scmp.eq.s32.totalorder %s15, 0
      %p119 = por %p117, %p118
      %p120 = scmp.ne.s32.totalorder %s112, %s114
      %p121 = scmp.eq.s32.totalorder %s20, 1
      %p122 = por %p120, %p121
      %p123 = scmp.ne.s32.totalorder %s114, %s115
      %p124 = scmp.eq.s32.totalorder %s20, 0
      %p125 = por %p123, %p124
      %p126 = scmp.ne.s32.totalorder %s114, %s115
      %p127 = scmp.eq.s32.totalorder %s21, 1
      %p128 = por %p126, %p127
      %p130 = scmp.ne.s32.totalorder %s115, %s129
      %p131 = scmp.eq.s32.totalorder %s21, 0
      %p132 = por %p130, %p131
      %s133 = ssub.s32 %s15, %s22
      %p134 = scmp.eq.s32.totalorder %s133, 0
      %s136 = sadd.s32 %s135, 1
      %s137 = scalar_select %p134, %s135, %s136
      %p140 = pneg %p134
      %p141 = scmp.eq.s32.totalorder %s15, 1
      %p142 = por %p140, %p141
      %p143 = scmp.ne.s32.totalorder %s135, %s138
      %p144 = scmp.eq.s32.totalorder %s15, 0
      %p145 = por %p143, %p144
      %p146 = scmp.ne.s32.totalorder %s135, %s138
      %p147 = scmp.eq.s32.totalorder %s20, 1
      %p148 = por %p146, %p147
      %p149 = scmp.ne.s32.totalorder %s138, %s139
      %p150 = scmp.eq.s32.totalorder %s20, 0
      %p151 = por %p149, %p150
      %p152 = scmp.ne.s32.totalorder %s138, %s139
      %p153 = scmp.eq.s32.totalorder %s21, 1
      %p154 = por %p152, %p153
      %p156 = scmp.ne.s32.totalorder %s139, %s155
      %p157 = scmp.eq.s32.totalorder %s21, 0
      %p158 = por %p156, %p157
      %p159 = scmp.le.s32.totalorder 1, %s15
      %p160 = scmp.lt.s32.totalorder %s15, 3
      %p161 = pnand %p159, %p160
      %p162 = pneg %p161
      // Predicated region
      $region9: #{tpu_custom_call.1} parent=5 // pred_check
        _
      $region10: #{tpu_custom_call.1} parent=5 // pred_check_branch
        %164 = sbr.rel (%p161) target = $region12
      $region11: #{tpu_custom_call.1} parent=5 // pred_region
        %s165 = ssub.s32 %s15, 1
        // Predicated region
        $region13: #{tpu_custom_call.1} parent=11 // pred_check
          %p166 = pneg %p62
        $region14: #{tpu_custom_call.1} parent=11 // pred_check_branch
          %168 = sbr.rel (%p166) target = $region16
        $region15: #{tpu_custom_call.1} parent=11 // pred_region
          %s170 = ssub.s32 9216, 9216
          %171 = vsyncadd [#allocation7], %s170
          %s172 = sshll.u32 [#allocation6], 4
          %s173 = int_to_ptr.vmem [resolvable:$true] %s172
          %178 = dma.hbm_to_vmem [thread:$0]  %s1, 9216, %s173, [#allocation7], 64, 64, 4
        $region16: #{tpu_custom_call.1} parent=11 // pred_fallthru
          _
        // Predicated region
        $region17: #{tpu_custom_call.1} parent=11 // pred_check
          %p179 = pneg %p83
        $region18: #{tpu_custom_call.1} parent=11 // pred_check_branch
          %181 = sbr.rel (%p179) target = $region20
        $region19: #{tpu_custom_call.1} parent=11 // pred_region
          _
        $region20: #{tpu_custom_call.1} parent=11 // pred_fallthru
          _
        // Predicated region
        $region21: #{tpu_custom_call.1} parent=11 // pred_check
          %p182 = pneg %p104
        $region22: #{tpu_custom_call.1} parent=11 // pred_check_branch
          %184 = sbr.rel (%p182) target = $region24
        $region23: #{tpu_custom_call.1} parent=11 // pred_region
          %s186 = ssub.s32 9216, 9216
          %187 = vsyncadd [#allocation7], %s186
          %s188 = sshll.u32 [#allocation8], 4
          %s189 = int_to_ptr.vmem [resolvable:$true] %s188
          %194 = dma.hbm_to_vmem [thread:$0]  %s3, 9216, %s189, [#allocation7], 64, 64, 4
        $region24: #{tpu_custom_call.1} parent=11 // pred_fallthru
          _
        // Predicated region
        $region25: #{tpu_custom_call.1} parent=11 // pred_check
          %p195 = pneg %p125
        $region26: #{tpu_custom_call.1} parent=11 // pred_check_branch
          %197 = sbr.rel (%p195) target = $region28
        $region27: #{tpu_custom_call.1} parent=11 // pred_region
          _
        $region28: #{tpu_custom_call.1} parent=11 // pred_fallthru
          _
      $region12: #{tpu_custom_call.1} parent=5 // pred_fallthru
        _
      %p198 = scmp.lt.s32.totalorder %s15, 2
      // Predicated region
      $region29: #{tpu_custom_call.1} parent=5 // pred_check
        %p199 = pneg %p198
      $region30: #{tpu_custom_call.1} parent=5 // pred_check_branch
        %201 = sbr.rel (%p199) target = $region32
      $region31: #{tpu_custom_call.1} parent=5 // pred_region
        // Predicated region
        $region33: #{tpu_custom_call.1} parent=31 // pred_check
          %p202 = pneg %p35
        $region34: #{tpu_custom_call.1} parent=31 // pred_check_branch
          %204 = sbr.rel (%p202) target = $region36
        $region35: #{tpu_custom_call.1} parent=31 // pred_region
          %s205 = sand.u32 %s25, 1
          %s206 = scalar_lea.sflag [#allocation5], %s205
          %s207 = sand.u32 %s25, 1
          %s208 = smul.addr %s207, 256
          %s209 = scalar_lea.vmem [#allocation4], %s208
          %s211 = ssub.s32 4096, 4096
          %212 = vsyncadd %s206, %s211
          %s213 = smul.addr %s15, 32
          %s214 = smul.addr %s213, 128
          %s215 = scalar_lea.hbm %s0, %s214
          %s216 = sshll.u32 %s209, 4
          %s217 = int_to_ptr.vmem [resolvable:$true] %s216
          %222 = dma.hbm_to_vmem [thread:$0]  %s215, 4096, %s217, %s206, 128, 128, 8
        $region36: #{tpu_custom_call.1} parent=31 // pred_fallthru
          _
      $region32: #{tpu_custom_call.1} parent=5 // pred_fallthru
        _
      %p223 = scmp.le.s32.totalorder 1, %s15
      %p224 = scmp.lt.s32.totalorder %s15, 3
      %p225 = pnand %p223, %p224
      %p226 = pneg %p225
      // Predicated region
      $region37: #{tpu_custom_call.1} parent=5 // pred_check
        _
      $region38: #{tpu_custom_call.1} parent=5 // pred_check_branch
        %228 = sbr.rel (%p225) target = $region40
      $region39: #{tpu_custom_call.1} parent=5 // pred_region
        %s229 = ssub.s32 %s15, 1
        %s230 = sand.u32 %s28, 1
        %s231 = scalar_lea.sflag [#allocation5], %s230
        %s232 = sand.u32 %s28, 1
        %s233 = smul.addr %s232, 256
        %s234 = scalar_lea.vmem [#allocation4], %s233
        // Predicated region
        $region41: #{tpu_custom_call.1} parent=39 // pred_check
          %p235 = pneg %p41
        $region42: #{tpu_custom_call.1} parent=39 // pred_check_branch
          %237 = sbr.rel (%p235) target = $region44
        $region43: #{tpu_custom_call.1} parent=39 // pred_region
          %238 = dma.done %s231, 4096
        $region44: #{tpu_custom_call.1} parent=39 // pred_fallthru
          _
        // Predicated region
        $region45: #{tpu_custom_call.1} parent=39 // pred_check
          %p239 = pneg %p62
        $region46: #{tpu_custom_call.1} parent=39 // pred_check_branch
          %241 = sbr.rel (%p239) target = $region48
        $region47: #{tpu_custom_call.1} parent=39 // pred_region
          %242 = dma.done [#allocation7], 9216
        $region48: #{tpu_custom_call.1} parent=39 // pred_fallthru
          _
        // Predicated region
        $region49: #{tpu_custom_call.1} parent=39 // pred_check
          %p243 = pneg %p104
        $region50: #{tpu_custom_call.1} parent=39 // pred_check_branch
          %245 = sbr.rel (%p243) target = $region52
        $region51: #{tpu_custom_call.1} parent=39 // pred_region
          %246 = dma.done [#allocation7], 9216
        $region52: #{tpu_custom_call.1} parent=39 // pred_fallthru
          _
        %s247 = sand.u32 %s28, 1
        %s248 = scalar_lea.sflag [#allocation5], %s247
        %s249 = sand.u32 %s28, 1
        %s250 = smul.addr %s249, 256
        %s251 = scalar_lea.vmem [#allocation4], %s250
        %p252 = pneg %p41
        %p253 = pneg %p38
        %p254 = pneg %p62
        %p255 = pneg %p59
        %p256 = pneg %p83
        %p257 = pneg %p80
        %p258 = pneg %p104
        %p259 = pneg %p101
        %p260 = pneg %p125
        %p261 = pneg %p122
        %p262 = pneg %p151
        %p263 = pneg %p148
        %p264 = scmp.lt.s32.totalorder %s20, 1
        %s265 = scalar_select %p264, %s20, 1
        %s266 = smul.addr %s265, 32
        %s267 = smul.addr %s266, 8
        %s268 = scalar_lea.vmem %s5, %s267
        %p269 = scmp.lt.s32.totalorder %s20, 1
        %s270 = scalar_select %p269, %s20, 1
        %s271 = smul.addr %s270, 32
        %s272 = smul.addr %s271, 8
        %s273 = scalar_lea.vmem %s5, %s272
        %275 = vst [vmem:[#allocation2] sm:$0xff] 0
        %276 = vst [vmem:[#allocation2 + $0x8] sm:$0xff] 0
        %277 = vst [vmem:[#allocation2 + $0x10] sm:$0xff] 0
        %s278 = scalar_lea.vmem [#allocation2], 408
        %279 = vst [vmem:[%s278] sm:$0xff] 0
        %280 = vst [vmem:[%s278 + $0x8] sm:$0xff] 0
        %281 = vst [vmem:[%s278 + $0x10] sm:$0xff] 0
        %s282 = scalar_lea.vmem [#allocation2], 24
        %vm283 = vcmask 1040384
        %vm284 = vsmask.f32 256
        %vm285 = vmand %vm283, %vm284
        %v286 = vld [vmem:[%s282] sm:$0x1]
        %v287 = vsel %vm285, 0, %v286
        %288 = vst [vmem:[%s282] sm:$0x1] %v287
        %v289 = vld [vmem:[%s282 + $0x18] sm:$0x1]
        %v290 = vsel %vm285, 0, %v289
        %291 = vst [vmem:[%s282 + $0x18] sm:$0x1] %v290
        %v292 = vld [vmem:[%s282 + $0x30] sm:$0x1]
        %v293 = vsel %vm285, 0, %v292
        %294 = vst [vmem:[%s282 + $0x30] sm:$0x1] %v293
        %v295 = vld [vmem:[%s282 + $0x48] sm:$0x1]
        %v296 = vsel %vm285, 0, %v295
        %297 = vst [vmem:[%s282 + $0x48] sm:$0x1] %v296
        %v298 = vld [vmem:[%s282 + $0x60] sm:$0x1]
        %v299 = vsel %vm285, 0, %v298
        %300 = vst [vmem:[%s282 + $0x60] sm:$0x1] %v299
        %v301 = vld [vmem:[%s282 + $0x78] sm:$0x1]
        %v302 = vsel %vm285, 0, %v301
        %303 = vst [vmem:[%s282 + $0x78] sm:$0x1] %v302
        %v304 = vld [vmem:[%s282 + $0x90] sm:$0x1]
        %v305 = vsel %vm285, 0, %v304
        %306 = vst [vmem:[%s282 + $0x90] sm:$0x1] %v305
        %v307 = vld [vmem:[%s282 + $0xa8] sm:$0x1]
        %v308 = vsel %vm285, 0, %v307
        %309 = vst [vmem:[%s282 + $0xa8] sm:$0x1] %v308
        %v310 = vld [vmem:[%s282 + $0xc0] sm:$0x1]
        %v311 = vsel %vm285, 0, %v310
        %312 = vst [vmem:[%s282 + $0xc0] sm:$0x1] %v311
        %v313 = vld [vmem:[%s282 + $0xd8] sm:$0x1]
        %v314 = vsel %vm285, 0, %v313
        %315 = vst [vmem:[%s282 + $0xd8] sm:$0x1] %v314
        %v316 = vld [vmem:[%s282 + $0xf0] sm:$0x1]
        %v317 = vsel %vm285, 0, %v316
        %318 = vst [vmem:[%s282 + $0xf0] sm:$0x1] %v317
        %v319 = vld [vmem:[%s282 + $0x108] sm:$0x1]
        %v320 = vsel %vm285, 0, %v319
        %321 = vst [vmem:[%s282 + $0x108] sm:$0x1] %v320
        %v322 = vld [vmem:[%s282 + $0x120] sm:$0x1]
        %v323 = vsel %vm285, 0, %v322
        %324 = vst [vmem:[%s282 + $0x120] sm:$0x1] %v323
        %v325 = vld [vmem:[%s282 + $0x138] sm:$0x1]
        %v326 = vsel %vm285, 0, %v325
        %327 = vst [vmem:[%s282 + $0x138] sm:$0x1] %v326
        %v328 = vld [vmem:[%s282 + $0x150] sm:$0x1]
        %v329 = vsel %vm285, 0, %v328
        %330 = vst [vmem:[%s282 + $0x150] sm:$0x1] %v329
        %v331 = vld [vmem:[%s282 + $0x168] sm:$0x1]
        %v332 = vsel %vm285, 0, %v331
        %333 = vst [vmem:[%s282 + $0x168] sm:$0x1] %v332
        %vm334 = vcmask 1047559
        %vm335 = vsmask.f32 7966
        %vm336 = vmand %vm334, %vm335
        %v337 = vld [vmem:[%s282 + $0x10] sm:$0x80]
        %v338 = vsel %vm336, 0, %v337
        %339 = vst [vmem:[%s282 + $0x10] sm:$0x80] %v338
        %v340 = vld [vmem:[%s282 + $0x28] sm:$0x80]
        %v341 = vsel %vm336, 0, %v340
        %342 = vst [vmem:[%s282 + $0x28] sm:$0x80] %v341
        %v343 = vld [vmem:[%s282 + $0x40] sm:$0x80]
        %v344 = vsel %vm336, 0, %v343
        %345 = vst [vmem:[%s282 + $0x40] sm:$0x80] %v344
        %v346 = vld [vmem:[%s282 + $0x58] sm:$0x80]
        %v347 = vsel %vm336, 0, %v346
        %348 = vst [vmem:[%s282 + $0x58] sm:$0x80] %v347
        %v349 = vld [vmem:[%s282 + $0x70] sm:$0x80]
        %v350 = vsel %vm336, 0, %v349
        %351 = vst [vmem:[%s282 + $0x70] sm:$0x80] %v350
        %v352 = vld [vmem:[%s282 + $0x88] sm:$0x80]
        %v353 = vsel %vm336, 0, %v352
        %354 = vst [vmem:[%s282 + $0x88] sm:$0x80] %v353
        %v355 = vld [vmem:[%s282 + $0xa0] sm:$0x80]
        %v356 = vsel %vm336, 0, %v355
        %357 = vst [vmem:[%s282 + $0xa0] sm:$0x80] %v356
        %v358 = vld [vmem:[%s282 + $0xb8] sm:$0x80]
        %v359 = vsel %vm336, 0, %v358
        %360 = vst [vmem:[%s282 + $0xb8] sm:$0x80] %v359
        %v361 = vld [vmem:[%s282 + $0xd0] sm:$0x80]
        %v362 = vsel %vm336, 0, %v361
        %363 = vst [vmem:[%s282 + $0xd0] sm:$0x80] %v362
        %v364 = vld [vmem:[%s282 + $0xe8] sm:$0x80]
        %v365 = vsel %vm336, 0, %v364
        %366 = vst [vmem:[%s282 + $0xe8] sm:$0x80] %v365
        %v367 = vld [vmem:[%s282 + $0x100] sm:$0x80]
        %v368 = vsel %vm336, 0, %v367
        %369 = vst [vmem:[%s282 + $0x100] sm:$0x80] %v368
        %v370 = vld [vmem:[%s282 + $0x118] sm:$0x80]
        %v371 = vsel %vm336, 0, %v370
        %372 = vst [vmem:[%s282 + $0x118] sm:$0x80] %v371
        %v373 = vld [vmem:[%s282 + $0x130] sm:$0x80]
        %v374 = vsel %vm336, 0, %v373
        %375 = vst [vmem:[%s282 + $0x130] sm:$0x80] %v374
        %v376 = vld [vmem:[%s282 + $0x148] sm:$0x80]
        %v377 = vsel %vm336, 0, %v376
        %378 = vst [vmem:[%s282 + $0x148] sm:$0x80] %v377
        %v379 = vld [vmem:[%s282 + $0x160] sm:$0x80]
        %v380 = vsel %vm336, 0, %v379
        %381 = vst [vmem:[%s282 + $0x160] sm:$0x80] %v380
        %v382 = vld [vmem:[%s282 + $0x178] sm:$0x80]
        %v383 = vsel %vm336, 0, %v382
        %384 = vst [vmem:[%s282 + $0x178] sm:$0x80] %v383
        %v385 = vld [vmem:[%s234] sm:$0xff]
        %v386 = vld [vmem:[%s234 + $0x8] sm:$0xff]
        %v387 = vld [vmem:[%s234 + $0x10] sm:$0xff]
        %v388 = vld [vmem:[%s234 + $0x18] sm:$0xff]
        %v389 = vld [vmem:[%s234 + $0x20] sm:$0xff]
        %v390 = vld [vmem:[%s234 + $0x28] sm:$0xff]
        %v391 = vld [vmem:[%s234 + $0x30] sm:$0xff]
        %v392 = vld [vmem:[%s234 + $0x38] sm:$0xff]
        %v393 = vld [vmem:[%s234 + $0x40] sm:$0xff]
        %v394 = vld [vmem:[%s234 + $0x48] sm:$0xff]
        %v395 = vld [vmem:[%s234 + $0x50] sm:$0xff]
        %v396 = vld [vmem:[%s234 + $0x58] sm:$0xff]
        %v397 = vld [vmem:[%s234 + $0x60] sm:$0xff]
        %v398 = vld [vmem:[%s234 + $0x68] sm:$0xff]
        %v399 = vld [vmem:[%s234 + $0x70] sm:$0xff]
        %v400 = vld [vmem:[%s234 + $0x78] sm:$0xff]
        %v401 = vld [vmem:[%s234 + $0x80] sm:$0xff]
        %v402 = vld [vmem:[%s234 + $0x88] sm:$0xff]
        %v403 = vld [vmem:[%s234 + $0x90] sm:$0xff]
        %v404 = vld [vmem:[%s234 + $0x98] sm:$0xff]
        %v405 = vld [vmem:[%s234 + $0xa0] sm:$0xff]
        %v406 = vld [vmem:[%s234 + $0xa8] sm:$0xff]
        %v407 = vld [vmem:[%s234 + $0xb0] sm:$0xff]
        %v408 = vld [vmem:[%s234 + $0xb8] sm:$0xff]
        %v409 = vld [vmem:[%s234 + $0xc0] sm:$0xff]
        %v410 = vld [vmem:[%s234 + $0xc8] sm:$0xff]
        %v411 = vld [vmem:[%s234 + $0xd0] sm:$0xff]
        %v412 = vld [vmem:[%s234 + $0xd8] sm:$0xff]
        %v413 = vld [vmem:[%s234 + $0xe0] sm:$0xff]
        %v414 = vld [vmem:[%s234 + $0xe8] sm:$0xff]
        %v415 = vld [vmem:[%s234 + $0xf0] sm:$0xff]
        %v416 = vld [vmem:[%s234 + $0xf8] sm:$0xff]
        %v417 = vpack.c.bf16 %v386, %v385
        %v418 = vpack.c.bf16 %v388, %v387
        %v419 = vpack.c.bf16 %v390, %v389
        %v420 = vpack.c.bf16 %v392, %v391
        %v421 = vpack.c.bf16 %v394, %v393
        %v422 = vpack.c.bf16 %v396, %v395
        %v423 = vpack.c.bf16 %v398, %v397
        %v424 = vpack.c.bf16 %v400, %v399
        %v425 = vpack.c.bf16 %v402, %v401
        %v426 = vpack.c.bf16 %v404, %v403
        %v427 = vpack.c.bf16 %v406, %v405
        %v428 = vpack.c.bf16 %v408, %v407
        %v429 = vpack.c.bf16 %v410, %v409
        %v430 = vpack.c.bf16 %v412, %v411
        %v431 = vpack.c.bf16 %v414, %v413
        %v432 = vpack.c.bf16 %v416, %v415
        %v434 = vshrl.u32 %v417, 16
        %v436 = vrot.slane %v434, 7
        %v437 = vshll.u32 %v417, 16
        %v439 = vor.u32 %v436, %v437
        %v441 = vshrl.u32 %v418, 16
        %v443 = vrot.slane %v441, 7
        %v444 = vshll.u32 %v418, 16
        %v446 = vor.u32 %v443, %v444
        %v448 = vshrl.u32 %v419, 16
        %v450 = vrot.slane %v448, 7
        %v451 = vshll.u32 %v419, 16
        %v453 = vor.u32 %v450, %v451
        %v455 = vshrl.u32 %v420, 16
        %v457 = vrot.slane %v455, 7
        %v458 = vshll.u32 %v420, 16
        %v460 = vor.u32 %v457, %v458
        %v462 = vshrl.u32 %v421, 16
        %v464 = vrot.slane %v462, 7
        %v465 = vshll.u32 %v421, 16
        %v467 = vor.u32 %v464, %v465
        %v469 = vshrl.u32 %v422, 16
        %v471 = vrot.slane %v469, 7
        %v472 = vshll.u32 %v422, 16
        %v474 = vor.u32 %v471, %v472
        %v476 = vshrl.u32 %v423, 16
        %v478 = vrot.slane %v476, 7
        %v479 = vshll.u32 %v423, 16
        %v481 = vor.u32 %v478, %v479
        %v483 = vshrl.u32 %v424, 16
        %v485 = vrot.slane %v483, 7
        %v486 = vshll.u32 %v424, 16
        %v488 = vor.u32 %v485, %v486
        %v490 = vshrl.u32 %v425, 16
        %v492 = vrot.slane %v490, 7
        %v493 = vshll.u32 %v425, 16
        %v495 = vor.u32 %v492, %v493
        %v497 = vshrl.u32 %v426, 16
        %v499 = vrot.slane %v497, 7
        %v500 = vshll.u32 %v426, 16
        %v502 = vor.u32 %v499, %v500
        %v504 = vshrl.u32 %v427, 16
        %v506 = vrot.slane %v504, 7
        %v507 = vshll.u32 %v427, 16
        %v509 = vor.u32 %v506, %v507
        %v511 = vshrl.u32 %v428, 16
        %v513 = vrot.slane %v511, 7
        %v514 = vshll.u32 %v428, 16
        %v516 = vor.u32 %v513, %v514
        %v518 = vshrl.u32 %v429, 16
        %v520 = vrot.slane %v518, 7
        %v521 = vshll.u32 %v429, 16
        %v523 = vor.u32 %v520, %v521
        %v525 = vshrl.u32 %v430, 16
        %v527 = vrot.slane %v525, 7
        %v528 = vshll.u32 %v430, 16
        %v530 = vor.u32 %v527, %v528
        %v532 = vshrl.u32 %v431, 16
        %v534 = vrot.slane %v532, 7
        %v535 = vshll.u32 %v431, 16
        %v537 = vor.u32 %v534, %v535
        %v539 = vshrl.u32 %v432, 16
        %v541 = vrot.slane %v539, 7
        %v542 = vshll.u32 %v432, 16
        %v544 = vor.u32 %v541, %v542
        %vm561 = vcmask 1047552
        %vm562 = vsmask.f32 7938
        %vm563 = vmand %vm561, %vm562
        %v564 = vld [vmem:[%s282] sm:$0xff]
        %v565 = vsel %vm563, %v439, %v564
        %566 = vst [vmem:[%s282] sm:$0xff] %v565
        %v567 = vld [vmem:[%s282 + $0x18] sm:$0xff]
        %v568 = vsel %vm563, %v446, %v567
        %569 = vst [vmem:[%s282 + $0x18] sm:$0xff] %v568
        %v570 = vld [vmem:[%s282 + $0x30] sm:$0xff]
        %v571 = vsel %vm563, %v453, %v570
        %572 = vst [vmem:[%s282 + $0x30] sm:$0xff] %v571
        %v573 = vld [vmem:[%s282 + $0x48] sm:$0xff]
        %v574 = vsel %vm563, %v460, %v573
        %575 = vst [vmem:[%s282 + $0x48] sm:$0xff] %v574
        %v576 = vld [vmem:[%s282 + $0x60] sm:$0xff]
        %v577 = vsel %vm563, %v467, %v576
        %578 = vst [vmem:[%s282 + $0x60] sm:$0xff] %v577
        %v579 = vld [vmem:[%s282 + $0x78] sm:$0xff]
        %v580 = vsel %vm563, %v474, %v579
        %581 = vst [vmem:[%s282 + $0x78] sm:$0xff] %v580
        %v582 = vld [vmem:[%s282 + $0x90] sm:$0xff]
        %v583 = vsel %vm563, %v481, %v582
        %584 = vst [vmem:[%s282 + $0x90] sm:$0xff] %v583
        %v585 = vld [vmem:[%s282 + $0xa8] sm:$0xff]
        %v586 = vsel %vm563, %v488, %v585
        %587 = vst [vmem:[%s282 + $0xa8] sm:$0xff] %v586
        %v588 = vld [vmem:[%s282 + $0xc0] sm:$0xff]
        %v589 = vsel %vm563, %v495, %v588
        %590 = vst [vmem:[%s282 + $0xc0] sm:$0xff] %v589
        %v591 = vld [vmem:[%s282 + $0xd8] sm:$0xff]
        %v592 = vsel %vm563, %v502, %v591
        %593 = vst [vmem:[%s282 + $0xd8] sm:$0xff] %v592
        %v594 = vld [vmem:[%s282 + $0xf0] sm:$0xff]
        %v595 = vsel %vm563, %v509, %v594
        %596 = vst [vmem:[%s282 + $0xf0] sm:$0xff] %v595
        %v597 = vld [vmem:[%s282 + $0x108] sm:$0xff]
        %v598 = vsel %vm563, %v516, %v597
        %599 = vst [vmem:[%s282 + $0x108] sm:$0xff] %v598
        %v600 = vld [vmem:[%s282 + $0x120] sm:$0xff]
        %v601 = vsel %vm563, %v523, %v600
        %602 = vst [vmem:[%s282 + $0x120] sm:$0xff] %v601
        %v603 = vld [vmem:[%s282 + $0x138] sm:$0xff]
        %v604 = vsel %vm563, %v530, %v603
        %605 = vst [vmem:[%s282 + $0x138] sm:$0xff] %v604
        %v606 = vld [vmem:[%s282 + $0x150] sm:$0xff]
        %v607 = vsel %vm563, %v537, %v606
        %608 = vst [vmem:[%s282 + $0x150] sm:$0xff] %v607
        %v609 = vld [vmem:[%s282 + $0x168] sm:$0xff]
        %v610 = vsel %vm563, %v544, %v609
        %611 = vst [vmem:[%s282 + $0x168] sm:$0xff] %v610
        %612 = vst [vmem:[%s282 + $0x8] sm:$0xff] %v417
        %613 = vst [vmem:[%s282 + $0x20] sm:$0xff] %v418
        %614 = vst [vmem:[%s282 + $0x38] sm:$0xff] %v419
        %615 = vst [vmem:[%s282 + $0x50] sm:$0xff] %v420
        %616 = vst [vmem:[%s282 + $0x68] sm:$0xff] %v421
        %617 = vst [vmem:[%s282 + $0x80] sm:$0xff] %v422
        %618 = vst [vmem:[%s282 + $0x98] sm:$0xff] %v423
        %619 = vst [vmem:[%s282 + $0xb0] sm:$0xff] %v424
        %620 = vst [vmem:[%s282 + $0xc8] sm:$0xff] %v425
        %621 = vst [vmem:[%s282 + $0xe0] sm:$0xff] %v426
        %622 = vst [vmem:[%s282 + $0xf8] sm:$0xff] %v427
        %623 = vst [vmem:[%s282 + $0x110] sm:$0xff] %v428
        %624 = vst [vmem:[%s282 + $0x128] sm:$0xff] %v429
        %625 = vst [vmem:[%s282 + $0x140] sm:$0xff] %v430
        %626 = vst [vmem:[%s282 + $0x158] sm:$0xff] %v431
        %627 = vst [vmem:[%s282 + $0x170] sm:$0xff] %v432
        %v628 = vrot.slane %v437, 1
        %v629 = vor.u32 %v434, %v628
        %v630 = vrot.slane %v444, 1
        %v631 = vor.u32 %v441, %v630
        %v632 = vrot.slane %v451, 1
        %v633 = vor.u32 %v448, %v632
        %v634 = vrot.slane %v458, 1
        %v635 = vor.u32 %v455, %v634
        %v636 = vrot.slane %v465, 1
        %v637 = vor.u32 %v462, %v636
        %v638 = vrot.slane %v472, 1
        %v639 = vor.u32 %v469, %v638
        %v640 = vrot.slane %v479, 1
        %v641 = vor.u32 %v476, %v640
        %v642 = vrot.slane %v486, 1
        %v643 = vor.u32 %v483, %v642
        %v644 = vrot.slane %v493, 1
        %v645 = vor.u32 %v490, %v644
        %v646 = vrot.slane %v500, 1
        %v647 = vor.u32 %v497, %v646
        %v648 = vrot.slane %v507, 1
        %v649 = vor.u32 %v504, %v648
        %v650 = vrot.slane %v514, 1
        %v651 = vor.u32 %v511, %v650
        %v652 = vrot.slane %v521, 1
        %v653 = vor.u32 %v518, %v652
        %v654 = vrot.slane %v528, 1
        %v655 = vor.u32 %v525, %v654
        %v656 = vrot.slane %v535, 1
        %v657 = vor.u32 %v532, %v656
        %v658 = vrot.slane %v542, 1
        %v659 = vor.u32 %v539, %v658
        %vm676 = vsmask.f32 7424
        %vm677 = vmand %vm561, %vm676
        %v678 = vld [vmem:[%s282 + $0x10] sm:$0xff]
        %v679 = vsel %vm677, %v629, %v678
        %680 = vst [vmem:[%s282 + $0x10] sm:$0xff] %v679
        %v681 = vld [vmem:[%s282 + $0x28] sm:$0xff]
        %v682 = vsel %vm677, %v631, %v681
        %683 = vst [vmem:[%s282 + $0x28] sm:$0xff] %v682
        %v684 = vld [vmem:[%s282 + $0x40] sm:$0xff]
        %v685 = vsel %vm677, %v633, %v684
        %686 = vst [vmem:[%s282 + $0x40] sm:$0xff] %v685
        %v687 = vld [vmem:[%s282 + $0x58] sm:$0xff]
        %v688 = vsel %vm677, %v635, %v687
        %689 = vst [vmem:[%s282 + $0x58] sm:$0xff] %v688
        %v690 = vld [vmem:[%s282 + $0x70] sm:$0xff]
        %v691 = vsel %vm677, %v637, %v690
        %692 = vst [vmem:[%s282 + $0x70] sm:$0xff] %v691
        %v693 = vld [vmem:[%s282 + $0x88] sm:$0xff]
        %v694 = vsel %vm677, %v639, %v693
        %695 = vst [vmem:[%s282 + $0x88] sm:$0xff] %v694
        %v696 = vld [vmem:[%s282 + $0xa0] sm:$0xff]
        %v697 = vsel %vm677, %v641, %v696
        %698 = vst [vmem:[%s282 + $0xa0] sm:$0xff] %v697
        %v699 = vld [vmem:[%s282 + $0xb8] sm:$0xff]
        %v700 = vsel %vm677, %v643, %v699
        %701 = vst [vmem:[%s282 + $0xb8] sm:$0xff] %v700
        %v702 = vld [vmem:[%s282 + $0xd0] sm:$0xff]
        %v703 = vsel %vm677, %v645, %v702
        %704 = vst [vmem:[%s282 + $0xd0] sm:$0xff] %v703
        %v705 = vld [vmem:[%s282 + $0xe8] sm:$0xff]
        %v706 = vsel %vm677, %v647, %v705
        %707 = vst [vmem:[%s282 + $0xe8] sm:$0xff] %v706
        %v708 = vld [vmem:[%s282 + $0x100] sm:$0xff]
        %v709 = vsel %vm677, %v649, %v708
        %710 = vst [vmem:[%s282 + $0x100] sm:$0xff] %v709
        %v711 = vld [vmem:[%s282 + $0x118] sm:$0xff]
        %v712 = vsel %vm677, %v651, %v711
        %713 = vst [vmem:[%s282 + $0x118] sm:$0xff] %v712
        %v714 = vld [vmem:[%s282 + $0x130] sm:$0xff]
        %v715 = vsel %vm677, %v653, %v714
        %716 = vst [vmem:[%s282 + $0x130] sm:$0xff] %v715
        %v717 = vld [vmem:[%s282 + $0x148] sm:$0xff]
        %v718 = vsel %vm677, %v655, %v717
        %719 = vst [vmem:[%s282 + $0x148] sm:$0xff] %v718
        %v720 = vld [vmem:[%s282 + $0x160] sm:$0xff]
        %v721 = vsel %vm677, %v657, %v720
        %722 = vst [vmem:[%s282 + $0x160] sm:$0xff] %v721
        %v723 = vld [vmem:[%s282 + $0x178] sm:$0xff]
        %v724 = vsel %vm677, %v659, %v723
        %725 = vst [vmem:[%s282 + $0x178] sm:$0xff] %v724
        %v726 = vld [vmem:[#allocation2] sm:$0xff]
        %v727 = vld [vmem:[#allocation2 + $0x8] sm:$0xff]
        %v728 = vld [vmem:[#allocation2 + $0x10] sm:$0xff]
        %v729 = vld [vmem:[#allocation2 + $0x18] sm:$0xff]
        %v730 = vld [vmem:[#allocation2 + $0x20] sm:$0xff]
        %v731 = vld [vmem:[#allocation2 + $0x28] sm:$0xff]
        %v732 = vld [vmem:[#allocation2 + $0x30] sm:$0xff]
        %v733 = vld [vmem:[#allocation2 + $0x38] sm:$0xff]
        %v734 = vld [vmem:[#allocation2 + $0x40] sm:$0xff]
        %v735 = vld [vmem:[#allocation2 + $0x48] sm:$0xff]
        %v736 = vld [vmem:[#allocation2 + $0x50] sm:$0xff]
        %v737 = vld [vmem:[#allocation2 + $0x58] sm:$0xff]
        %v738 = vld [vmem:[#allocation2 + $0x60] sm:$0xff]
        %v739 = vld [vmem:[#allocation2 + $0x68] sm:$0xff]
        %v740 = vld [vmem:[#allocation2 + $0x70] sm:$0xff]
        %v741 = vld [vmem:[#allocation2 + $0x78] sm:$0xff]
        %v742 = vld [vmem:[#allocation2 + $0x80] sm:$0xff]
        %v743 = vld [vmem:[#allocation2 + $0x88] sm:$0xff]
        %v744 = vld [vmem:[#allocation2 + $0x90] sm:$0xff]
        %v745 = vld [vmem:[#allocation2 + $0x98] sm:$0xff]
        %v746 = vld [vmem:[#allocation2 + $0xa0] sm:$0xff]
        %v747 = vld [vmem:[#allocation2 + $0xa8] sm:$0xff]
        %v748 = vld [vmem:[#allocation2 + $0xb0] sm:$0xff]
        %v749 = vld [vmem:[#allocation2 + $0xb8] sm:$0xff]
        %v750 = vld [vmem:[#allocation2 + $0xc0] sm:$0xff]
        %v751 = vld [vmem:[#allocation2 + $0xc8] sm:$0xff]
        %v752 = vld [vmem:[#allocation2 + $0xd0] sm:$0xff]
        %v753 = vld [vmem:[#allocation2 + $0xd8] sm:$0xff]
        %v754 = vld [vmem:[#allocation2 + $0xe0] sm:$0xff]
        %v755 = vld [vmem:[#allocation2 + $0xe8] sm:$0xff]
        %v756 = vld [vmem:[#allocation2 + $0xf0] sm:$0xff]
        %v757 = vld [vmem:[#allocation2 + $0xf8] sm:$0xff]
        %v758 = vld [vmem:[#allocation2 + $0x100] sm:$0xff]
        %v759 = vld [vmem:[#allocation2 + $0x108] sm:$0xff]
        %v760 = vld [vmem:[#allocation2 + $0x110] sm:$0xff]
        %v761 = vld [vmem:[#allocation2 + $0x118] sm:$0xff]
        %v762 = vld [vmem:[#allocation2 + $0x120] sm:$0xff]
        %v763 = vld [vmem:[#allocation2 + $0x128] sm:$0xff]
        %v764 = vld [vmem:[#allocation2 + $0x130] sm:$0xff]
        %v765 = vld [vmem:[#allocation2 + $0x138] sm:$0xff]
        %v766 = vld [vmem:[#allocation2 + $0x140] sm:$0xff]
        %v767 = vld [vmem:[#allocation2 + $0x148] sm:$0xff]
        %v768 = vld [vmem:[#allocation2 + $0x150] sm:$0xff]
        %v769 = vld [vmem:[#allocation2 + $0x158] sm:$0xff]
        %v770 = vld [vmem:[#allocation2 + $0x160] sm:$0xff]
        %v771 = vld [vmem:[#allocation2 + $0x168] sm:$0xff]
        %v772 = vld [vmem:[#allocation2 + $0x170] sm:$0xff]
        %v773 = vld [vmem:[#allocation2 + $0x178] sm:$0xff]
        %v774 = vld [vmem:[#allocation6] sm:$0xf]
        %v775 = vld [vmem:[#allocation6 + $0x4] sm:$0xf]
        %v776 = vld [vmem:[#allocation6 + $0x8] sm:$0xf]
        %v777 = vld [vmem:[#allocation6 + $0xc] sm:$0xf]
        %v778 = vld [vmem:[#allocation6 + $0x10] sm:$0xf]
        %v779 = vld [vmem:[#allocation6 + $0x14] sm:$0xf]
        %v780 = vld [vmem:[#allocation6 + $0x18] sm:$0xf]
        %v781 = vld [vmem:[#allocation6 + $0x1c] sm:$0xf]
        %v782 = vld [vmem:[#allocation6 + $0x20] sm:$0xf]
        %v783 = vld [vmem:[#allocation6 + $0x24] sm:$0xf]
        %v784 = vld [vmem:[#allocation6 + $0x28] sm:$0xf]
        %v785 = vld [vmem:[#allocation6 + $0x2c] sm:$0xf]
        %v786 = vld [vmem:[#allocation6 + $0x30] sm:$0xf]
        %v787 = vld [vmem:[#allocation6 + $0x34] sm:$0xf]
        %v788 = vld [vmem:[#allocation6 + $0x38] sm:$0xf]
        %v789 = vld [vmem:[#allocation6 + $0x3c] sm:$0xf]
        %v790 = vld [vmem:[#allocation6 + $0x40] sm:$0xf]
        %v791 = vld [vmem:[#allocation6 + $0x44] sm:$0xf]
        %v792 = vld [vmem:[#allocation6 + $0x48] sm:$0xf]
        %v793 = vld [vmem:[#allocation6 + $0x4c] sm:$0xf]
        %v794 = vld [vmem:[#allocation6 + $0x50] sm:$0xf]
        %v795 = vld [vmem:[#allocation6 + $0x54] sm:$0xf]
        %v796 = vld [vmem:[#allocation6 + $0x58] sm:$0xf]
        %v797 = vld [vmem:[#allocation6 + $0x5c] sm:$0xf]
        %v798 = vld [vmem:[#allocation6 + $0x60] sm:$0xf]
        %v799 = vld [vmem:[#allocation6 + $0x64] sm:$0xf]
        %v800 = vld [vmem:[#allocation6 + $0x68] sm:$0xf]
        %v801 = vld [vmem:[#allocation6 + $0x6c] sm:$0xf]
        %v802 = vld [vmem:[#allocation6 + $0x70] sm:$0xf]
        %v803 = vld [vmem:[#allocation6 + $0x74] sm:$0xf]
        %v804 = vld [vmem:[#allocation6 + $0x78] sm:$0xf]
        %v805 = vld [vmem:[#allocation6 + $0x7c] sm:$0xf]
        %v806 = vld [vmem:[#allocation6 + $0x80] sm:$0xf]
        %v807 = vld [vmem:[#allocation6 + $0x84] sm:$0xf]
        %v808 = vld [vmem:[#allocation6 + $0x88] sm:$0xf]
        %v809 = vld [vmem:[#allocation6 + $0x8c] sm:$0xf]
        %v810 = vld [vmem:[#allocation6 + $0x90] sm:$0xf]
        %v811 = vld [vmem:[#allocation6 + $0x94] sm:$0xf]
        %v812 = vld [vmem:[#allocation6 + $0x98] sm:$0xf]
        %v813 = vld [vmem:[#allocation6 + $0x9c] sm:$0xf]
        %v814 = vld [vmem:[#allocation6 + $0xa0] sm:$0xf]
        %v815 = vld [vmem:[#allocation6 + $0xa4] sm:$0xf]
        %v816 = vld [vmem:[#allocation6 + $0xa8] sm:$0xf]
        %v817 = vld [vmem:[#allocation6 + $0xac] sm:$0xf]
        %v818 = vld [vmem:[#allocation6 + $0xb0] sm:$0xf]
        %v819 = vld [vmem:[#allocation6 + $0xb4] sm:$0xf]
        %v820 = vld [vmem:[#allocation6 + $0xb8] sm:$0xf]
        %v821 = vld [vmem:[#allocation6 + $0xbc] sm:$0xf]
        %v870 = vunpack.c.l.b16 %v774
        %v871 = vunpack.c.l.b16 %v775
        %v872 = vunpack.c.l.b16 %v776
        %v873 = vunpack.c.l.b16 %v777
        %v874 = vunpack.c.l.b16 %v778
        %v875 = vunpack.c.l.b16 %v779
        %v876 = vunpack.c.l.b16 %v780
        %v877 = vunpack.c.l.b16 %v781
        %v878 = vunpack.c.l.b16 %v782
        %v879 = vunpack.c.l.b16 %v783
        %v880 = vunpack.c.l.b16 %v784
        %v881 = vunpack.c.l.b16 %v785
        %v882 = vunpack.c.l.b16 %v786
        %v883 = vunpack.c.l.b16 %v787
        %v884 = vunpack.c.l.b16 %v788
        %v885 = vunpack.c.l.b16 %v789
        %v886 = vunpack.c.l.b16 %v790
        %v887 = vunpack.c.l.b16 %v791
        %v888 = vunpack.c.l.b16 %v792
        %v889 = vunpack.c.l.b16 %v793
        %v890 = vunpack.c.l.b16 %v794
        %v891 = vunpack.c.l.b16 %v795
        %v892 = vunpack.c.l.b16 %v796
        %v893 = vunpack.c.l.b16 %v797
        %v894 = vunpack.c.l.b16 %v798
        %v895 = vunpack.c.l.b16 %v799
        %v896 = vunpack.c.l.b16 %v800
        %v897 = vunpack.c.l.b16 %v801
        %v898 = vunpack.c.l.b16 %v802
        %v899 = vunpack.c.l.b16 %v803
        %v900 = vunpack.c.l.b16 %v804
        %v901 = vunpack.c.l.b16 %v805
        %v902 = vunpack.c.l.b16 %v806
        %v903 = vunpack.c.l.b16 %v807
        %v904 = vunpack.c.l.b16 %v808
        %v905 = vunpack.c.l.b16 %v809
        %v906 = vunpack.c.l.b16 %v810
        %v907 = vunpack.c.l.b16 %v811
        %v908 = vunpack.c.l.b16 %v812
        %v909 = vunpack.c.l.b16 %v813
        %v910 = vunpack.c.l.b16 %v814
        %v911 = vunpack.c.l.b16 %v815
        %v912 = vunpack.c.l.b16 %v816
        %v913 = vunpack.c.l.b16 %v817
        %v914 = vunpack.c.l.b16 %v818
        %v915 = vunpack.c.l.b16 %v819
        %v916 = vunpack.c.l.b16 %v820
        %v917 = vunpack.c.l.b16 %v821
        %v918 = vpack.c.b16 %v871, %v870
        %v919 = vpack.c.b16 %v873, %v872
        %v920 = vpack.c.b16 %v875, %v874
        %v921 = vpack.c.b16 %v877, %v876
        %v922 = vpack.c.b16 %v879, %v878
        %v923 = vpack.c.b16 %v881, %v880
        %v924 = vpack.c.b16 %v883, %v882
        %v925 = vpack.c.b16 %v885, %v884
        %v926 = vpack.c.b16 %v887, %v886
        %v927 = vpack.c.b16 %v889, %v888
        %v928 = vpack.c.b16 %v891, %v890
        %v929 = vpack.c.b16 %v893, %v892
        %v930 = vpack.c.b16 %v895, %v894
        %v931 = vpack.c.b16 %v897, %v896
        %v932 = vpack.c.b16 %v899, %v898
        %v933 = vpack.c.b16 %v901, %v900
        %v934 = vpack.c.b16 %v903, %v902
        %v935 = vpack.c.b16 %v905, %v904
        %v936 = vpack.c.b16 %v907, %v906
        %v937 = vpack.c.b16 %v909, %v908
        %v938 = vpack.c.b16 %v911, %v910
        %v939 = vpack.c.b16 %v913, %v912
        %v940 = vpack.c.b16 %v915, %v914
        %v941 = vpack.c.b16 %v917, %v916
        %966 = vmatprep.subr.bf16.mxu0 0
        %967 = vmatpush1.bf16.msra.mxu0 %v918
        %968 = vmatprep.subr.bf16.mxu0 0
        %969 = vmatpush1.bf16.msra.mxu0 %v919
        %970 = vmatprep.subr.bf16.mxu0 0
        %971 = vmatpush1.bf16.msra.mxu0 %v920
        %972 = vmatprep.subr.bf16.mxu0 0
        %973 = vmatpush1.bf16.msra.mxu0 %v921
        %974 = vmatprep.subr.bf16.mxu0 0
        %975 = vmatpush1.bf16.msra.mxu0 %v922
        %976 = vmatprep.subr.bf16.mxu0 0
        %977 = vmatpush1.bf16.msra.mxu0 %v923
        %978 = vmatprep.subr.bf16.mxu0 0
        %979 = vmatpush1.bf16.msra.mxu0 %v924
        %980 = vmatprep.subr.bf16.mxu0 0
        %981 = vmatpush1.bf16.msra.mxu0 %v925
        %982 = vmatprep.subr.bf16.mxu0 0
        %983 = vmatpush1.bf16.msra.mxu0 %v926
        %984 = vmatprep.subr.bf16.mxu0 0
        %985 = vmatpush1.bf16.msra.mxu0 %v927
        %986 = vmatprep.subr.bf16.mxu0 0
        %987 = vmatpush1.bf16.msra.mxu0 %v928
        %988 = vmatprep.subr.bf16.mxu0 0
        %989 = vmatpush1.bf16.msra.mxu0 %v929
        %990 = vmatprep.subr.bf16.mxu0 0
        %991 = vmatpush1.bf16.msra.mxu0 %v930
        %992 = vmatprep.subr.bf16.mxu0 0
        %993 = vmatpush1.bf16.msra.mxu0 %v931
        %994 = vmatprep.subr.bf16.mxu0 0
        %995 = vmatpush1.bf16.msra.mxu0 %v932
        %996 = vmatprep.subr.bf16.mxu0 0
        %997 = vmatpush1.bf16.msra.mxu0 %v933
        %998 = vmatprep.mubr.bf16.mxu0 %v727
        %999 = vmatmul.mubr.bf16.gmra.mrb[0].mxu0 %v726
        %v1000 = vpop.f32.mrb[0].mxu0
        %v1001 = vadd.f32 0.0, %v1000
        %v1002 = vpop.f32.mrb[0].mxu0
        %v1003 = vpop.f32.mrb[0].mxu0
        %v1004 = vadd.f32 0.0, %v1003
        %v1005 = vpop.f32.mrb[0].mxu0
        %1006 = vmatprep.mubr.bf16.mxu0 %v730
        %1007 = vmatmul.mubr.bf16.gmra.mrb[0].mxu0 %v729
        %v1008 = vpop.f32.mrb[0].mxu0
        %v1009 = vadd.f32 0.0, %v1008
        %v1010 = vpop.f32.mrb[0].mxu0
        %v1011 = vpop.f32.mrb[0].mxu0
        %v1012 = vadd.f32 0.0, %v1011
        %v1013 = vpop.f32.mrb[0].mxu0
        %1014 = vmatprep.mubr.bf16.mxu0 %v733
        %1015 = vmatmul.mubr.bf16.gmra.mrb[0].mxu0 %v732
        %v1016 = vpop.f32.mrb[0].mxu0
        %v1017 = vadd.f32 0.0, %v1016
        %v1018 = vpop.f32.mrb[0].mxu0
        %v1019 = vpop.f32.mrb[0].mxu0
        %v1020 = vadd.f32 0.0, %v1019
        %v1021 = vpop.f32.mrb[0].mxu0
        %1022 = vmatprep.mubr.bf16.mxu0 %v736
        %1023 = vmatmul.mubr.bf16.gmra.mrb[0].mxu0 %v735
        %v1024 = vpop.f32.mrb[0].mxu0
        %v1025 = vadd.f32 0.0, %v1024
        %v1026 = vpop.f32.mrb[0].mxu0
        %v1027 = vpop.f32.mrb[0].mxu0
        %v1028 = vadd.f32 0.0, %v1027
        %v1029 = vpop.f32.mrb[0].mxu0
        %1030 = vmatprep.mubr.bf16.mxu0 %v739
        %1031 = vmatmul.mubr.bf16.gmra.mrb[0].mxu0 %v738
        %v1032 = vpop.f32.mrb[0].mxu0
        %v1033 = vadd.f32 0.0, %v1032
        %v1034 = vpop.f32.mrb[0].mxu0
        %v1035 = vpop.f32.mrb[0].mxu0
        %v1036 = vadd.f32 0.0, %v1035
        %v1037 = vpop.f32.mrb[0].mxu0
        %1038 = vmatprep.mubr.bf16.mxu0 %v742
        %1039 = vmatmul.mubr.bf16.gmra.mrb[0].mxu0 %v741
        %v1040 = vpop.f32.mrb[0].mxu0
        %v1041 = vadd.f32 0.0, %v1040
        %v1042 = vpop.f32.mrb[0].mxu0
        %v1043 = vpop.f32.mrb[0].mxu0
        %v1044 = vadd.f32 0.0, %v1043
        %v1045 = vpop.f32.mrb[0].mxu0
        %1046 = vmatprep.mubr.bf16.mxu0 %v745
        %1047 = vmatmul.mubr.bf16.gmra.mrb[0].mxu0 %v744
        %v1048 = vpop.f32.mrb[0].mxu0
        %v1049 = vadd.f32 0.0, %v1048
        %v1050 = vpop.f32.mrb[0].mxu0
        %v1051 = vpop.f32.mrb[0].mxu0
        %v1052 = vadd.f32 0.0, %v1051
        %v1053 = vpop.f32.mrb[0].mxu0
        %1054 = vmatprep.mubr.bf16.mxu0 %v748
        %1055 = vmatmul.mubr.bf16.gmra.mrb[0].mxu0 %v747
        %v1056 = vpop.f32.mrb[0].mxu0
        %v1057 = vadd.f32 0.0, %v1056
        %v1058 = vpop.f32.mrb[0].mxu0
        %v1059 = vpop.f32.mrb[0].mxu0
        %v1060 = vadd.f32 0.0, %v1059
        %v1061 = vpop.f32.mrb[0].mxu0
        %1062 = vmatprep.mubr.bf16.mxu0 %v751
        %1063 = vmatmul.mubr.bf16.gmra.mrb[0].mxu0 %v750
        %v1064 = vpop.f32.mrb[0].mxu0
        %v1065 = vadd.f32 0.0, %v1064
        %v1066 = vpop.f32.mrb[0].mxu0
        %v1067 = vpop.f32.mrb[0].mxu0
        %v1068 = vadd.f32 0.0, %v1067
        %v1069 = vpop.f32.mrb[0].mxu0
        %1070 = vmatprep.mubr.bf16.mxu0 %v754
        %1071 = vmatmul.mubr.bf16.gmra.mrb[0].mxu0 %v753
        %v1072 = vpop.f32.mrb[0].mxu0
        %v1073 = vadd.f32 0.0, %v1072
        %v1074 = vpop.f32.mrb[0].mxu0
        %v1075 = vpop.f32.mrb[0].mxu0
        %v1076 = vadd.f32 0.0, %v1075
        %v1077 = vpop.f32.mrb[0].mxu0
        %1078 = vmatprep.mubr.bf16.mxu0 %v757
        %1079 = vmatmul.mubr.bf16.gmra.mrb[0].mxu0 %v756
        %v1080 = vpop.f32.mrb[0].mxu0
        %v1081 = vadd.f32 0.0, %v1080
        %v1082 = vpop.f32.mrb[0].mxu0
        %v1083 = vpop.f32.mrb[0].mxu0
        %v1084 = vadd.f32 0.0, %v1083
        %v1085 = vpop.f32.mrb[0].mxu0
        %1086 = vmatprep.mubr.bf16.mxu0 %v760
        %1087 = vmatmul.mubr.bf16.gmra.mrb[0].mxu0 %v759
        %v1088 = vpop.f32.mrb[0].mxu0
        %v1089 = vadd.f32 0.0, %v1088
        %v1090 = vpop.f32.mrb[0].mxu0
        %v1091 = vpop.f32.mrb[0].mxu0
        %v1092 = vadd.f32 0.0, %v1091
        %v1093 = vpop.f32.mrb[0].mxu0
        %1094 = vmatprep.mubr.bf16.mxu0 %v763
        %1095 = vmatmul.mubr.bf16.gmra.mrb[0].mxu0 %v762
        %v1096 = vpop.f32.mrb[0].mxu0
        %v1097 = vadd.f32 0.0, %v1096
        %v1098 = vpop.f32.mrb[0].mxu0
        %v1099 = vpop.f32.mrb[0].mxu0
        %v1100 = vadd.f32 0.0, %v1099
        %v1101 = vpop.f32.mrb[0].mxu0
        %1102 = vmatprep.mubr.bf16.mxu0 %v766
        %1103 = vmatmul.mubr.bf16.gmra.mrb[0].mxu0 %v765
        %v1104 = vpop.f32.mrb[0].mxu0
        %v1105 = vadd.f32 0.0, %v1104
        %v1106 = vpop.f32.mrb[0].mxu0
        %v1107 = vpop.f32.mrb[0].mxu0
        %v1108 = vadd.f32 0.0, %v1107
        %v1109 = vpop.f32.mrb[0].mxu0
        %1110 = vmatprep.mubr.bf16.mxu0 %v769
        %1111 = vmatmul.mubr.bf16.gmra.mrb[0].mxu0 %v768
        %v1112 = vpop.f32.mrb[0].mxu0
        %v1113 = vadd.f32 0.0, %v1112
        %v1114 = vpop.f32.mrb[0].mxu0
        %v1115 = vpop.f32.mrb[0].mxu0
        %v1116 = vadd.f32 0.0, %v1115
        %v1117 = vpop.f32.mrb[0].mxu0
        %1118 = vmatprep.mubr.bf16.mxu0 %v772
        %1119 = vmatmul.mubr.bf16.gmra.mrb[0].mxu0 %v771
        %v1120 = vpop.f32.mrb[0].mxu0
        %v1121 = vadd.f32 0.0, %v1120
        %v1122 = vpop.f32.mrb[0].mxu0
        %v1123 = vpop.f32.mrb[0].mxu0
        %v1124 = vadd.f32 0.0, %v1123
        %v1125 = vpop.f32.mrb[0].mxu0
        %1126 = vdwg.mxu0
        %1127 = vmatprep.subr.bf16.mxu0 0
        %1128 = vmatpush1.bf16.msra.mxu0 %v934
        %1129 = vmatprep.subr.bf16.mxu0 0
        %1130 = vmatpush1.bf16.msra.mxu0 %v935
        %1131 = vmatprep.subr.bf16.mxu0 0
        %1132 = vmatpush1.bf16.msra.mxu0 %v936
        %1133 = vmatprep.subr.bf16.mxu0 0
        %1134 = vmatpush1.bf16.msra.mxu0 %v937
        %1135 = vmatprep.subr.bf16.mxu0 0
        %1136 = vmatpush1.bf16.msra.mxu0 %v938
        %1137 = vmatprep.subr.bf16.mxu0 0
        %1138 = vmatpush1.bf16.msra.mxu0 %v939
        %1139 = vmatprep.subr.bf16.mxu0 0
        %1140 = vmatpush1.bf16.msra.mxu0 %v940
        %1141 = vmatprep.subr.bf16.mxu0 0
        %1142 = vmatpush1.bf16.msra.mxu0 %v941
        %1143 = vmatprep.subr.bf16.mxu0 0
        %1144 = vmatpush1.bf16.msra.mxu0 0
        %1145 = vmatprep.subr.bf16.mxu0 0
        %1146 = vmatpush1.bf16.msra.mxu0 0
        %1147 = vmatprep.subr.bf16.mxu0 0
        %1148 = vmatpush1.bf16.msra.mxu0 0
        %1149 = vmatprep.subr.bf16.mxu0 0
        %1150 = vmatpush1.bf16.msra.mxu0 0
        %1151 = vmatprep.subr.bf16.mxu0 0
        %1152 = vmatpush1.bf16.msra.mxu0 0
        %1153 = vmatprep.subr.bf16.mxu0 0
        %1154 = vmatpush1.bf16.msra.mxu0 0
        %1155 = vmatprep.subr.bf16.mxu0 0
        %1156 = vmatpush1.bf16.msra.mxu0 0
        %1157 = vmatprep.subr.bf16.mxu0 0
        %1158 = vmatpush1.bf16.msra.mxu0 0
        %1159 = vmatprep.mubr.bf16.mxu0 0
        %1160 = vmatmul.mubr.bf16.gmra.mrb[0].mxu0 %v728
        %v1161 = vpop.f32.mrb[0].mxu0
        %v1162 = vadd.f32 %v1001, %v1161
        %v1163 = vpop.f32.mrb[0].mxu0
        %v1164 = vpop.f32.mrb[0].mxu0
        %v1165 = vadd.f32 %v1004, %v1164
        %v1166 = vpop.f32.mrb[0].mxu0
        %1167 = vmatprep.mubr.bf16.mxu0 0
        %1168 = vmatmul.mubr.bf16.gmra.mrb[0].mxu0 %v731
        %v1169 = vpop.f32.mrb[0].mxu0
        %v1170 = vadd.f32 %v1009, %v1169
        %v1171 = vpop.f32.mrb[0].mxu0
        %v1172 = vpop.f32.mrb[0].mxu0
        %v1173 = vadd.f32 %v1012, %v1172
        %v1174 = vpop.f32.mrb[0].mxu0
        %1175 = vmatprep.mubr.bf16.mxu0 0
        %1176 = vmatmul.mubr.bf16.gmra.mrb[0].mxu0 %v734
        %v1177 = vpop.f32.mrb[0].mxu0
        %v1178 = vadd.f32 %v1017, %v1177
        %v1179 = vpop.f32.mrb[0].mxu0
        %v1180 = vpop.f32.mrb[0].mxu0
        %v1181 = vadd.f32 %v1020, %v1180
        %v1182 = vpop.f32.mrb[0].mxu0
        %1183 = vmatprep.mubr.bf16.mxu0 0
        %1184 = vmatmul.mubr.bf16.gmra.mrb[0].mxu0 %v737
        %v1185 = vpop.f32.mrb[0].mxu0
        %v1186 = vadd.f32 %v1025, %v1185
        %v1187 = vpop.f32.mrb[0].mxu0
        %v1188 = vpop.f32.mrb[0].mxu0
        %v1189 = vadd.f32 %v1028, %v1188
        %v1190 = vpop.f32.mrb[0].mxu0
        %1191 = vmatprep.mubr.bf16.mxu0 0
        %1192 = vmatmul.mubr.bf16.gmra.mrb[0].mxu0 %v740
        %v1193 = vpop.f32.mrb[0].mxu0
        %v1194 = vadd.f32 %v1033, %v1193
        %v1195 = vpop.f32.mrb[0].mxu0
        %v1196 = vpop.f32.mrb[0].mxu0
        %v1197 = vadd.f32 %v1036, %v1196
        %v1198 = vpop.f32.mrb[0].mxu0
        %1199 = vmatprep.mubr.bf16.mxu0 0
        %1200 = vmatmul.mubr.bf16.gmra.mrb[0].mxu0 %v743
        %v1201 = vpop.f32.mrb[0].mxu0
        %v1202 = vadd.f32 %v1041, %v1201
        %v1203 = vpop.f32.mrb[0].mxu0
        %v1204 = vpop.f32.mrb[0].mxu0
        %v1205 = vadd.f32 %v1044, %v1204
        %v1206 = vpop.f32.mrb[0].mxu0
        %1207 = vmatprep.mubr.bf16.mxu0 0
        %1208 = vmatmul.mubr.bf16.gmra.mrb[0].mxu0 %v746
        %v1209 = vpop.f32.mrb[0].mxu0
        %v1210 = vadd.f32 %v1049, %v1209
        %v1211 = vpop.f32.mrb[0].mxu0
        %v1212 = vpop.f32.mrb[0].mxu0
        %v1213 = vadd.f32 %v1052, %v1212
        %v1214 = vpop.f32.mrb[0].mxu0
        %1215 = vmatprep.mubr.bf16.mxu0 0
        %1216 = vmatmul.mubr.bf16.gmra.mrb[0].mxu0 %v749
        %v1217 = vpop.f32.mrb[0].mxu0
        %v1218 = vadd.f32 %v1057, %v1217
        %v1219 = vpop.f32.mrb[0].mxu0
        %v1220 = vpop.f32.mrb[0].mxu0
        %v1221 = vadd.f32 %v1060, %v1220
        %v1222 = vpop.f32.mrb[0].mxu0
        %1223 = vmatprep.mubr.bf16.mxu0 0
        %1224 = vmatmul.mubr.bf16.gmra.mrb[0].mxu0 %v752
        %v1225 = vpop.f32.mrb[0].mxu0
        %v1226 = vadd.f32 %v1065, %v1225
        %v1227 = vpop.f32.mrb[0].mxu0
        %v1228 = vpop.f32.mrb[0].mxu0
        %v1229 = vadd.f32 %v1068, %v1228
        %v1230 = vpop.f32.mrb[0].mxu0
        %1231 = vmatprep.mubr.bf16.mxu0 0
        %1232 = vmatmul.mubr.bf16.gmra.mrb[0].mxu0 %v755
        %v1233 = vpop.f32.mrb[0].mxu0
        %v1234 = vadd.f32 %v1073, %v1233
        %v1235 = vpop.f32.mrb[0].mxu0
        %v1236 = vpop.f32.mrb[0].mxu0
        %v1237 = vadd.f32 %v1076, %v1236
        %v1238 = vpop.f32.mrb[0].mxu0
        %1239 = vmatprep.mubr.bf16.mxu0 0
        %1240 = vmatmul.mubr.bf16.gmra.mrb[0].mxu0 %v758
        %v1241 = vpop.f32.mrb[0].mxu0
        %v1242 = vadd.f32 %v1081, %v1241
        %v1243 = vpop.f32.mrb[0].mxu0
        %v1244 = vpop.f32.mrb[0].mxu0
        %v1245 = vadd.f32 %v1084, %v1244
        %v1246 = vpop.f32.mrb[0].mxu0
        %1247 = vmatprep.mubr.bf16.mxu0 0
        %1248 = vmatmul.mubr.bf16.gmra.mrb[0].mxu0 %v761
        %v1249 = vpop.f32.mrb[0].mxu0
        %v1250 = vadd.f32 %v1089, %v1249
        %v1251 = vpop.f32.mrb[0].mxu0
        %v1252 = vpop.f32.mrb[0].mxu0
        %v1253 = vadd.f32 %v1092, %v1252
        %v1254 = vpop.f32.mrb[0].mxu0
        %1255 = vmatprep.mubr.bf16.mxu0 0
        %1256 = vmatmul.mubr.bf16.gmra.mrb[0].mxu0 %v764
        %v1257 = vpop.f32.mrb[0].mxu0
        %v1258 = vadd.f32 %v1097, %v1257
        %v1259 = vpop.f32.mrb[0].mxu0
        %v1260 = vpop.f32.mrb[0].mxu0
        %v1261 = vadd.f32 %v1100, %v1260
        %v1262 = vpop.f32.mrb[0].mxu0
        %1263 = vmatprep.mubr.bf16.mxu0 0
        %1264 = vmatmul.mubr.bf16.gmra.mrb[0].mxu0 %v767
        %v1265 = vpop.f32.mrb[0].mxu0
        %v1266 = vadd.f32 %v1105, %v1265
        %v1267 = vpop.f32.mrb[0].mxu0
        %v1268 = vpop.f32.mrb[0].mxu0
        %v1269 = vadd.f32 %v1108, %v1268
        %v1270 = vpop.f32.mrb[0].mxu0
        %1271 = vmatprep.mubr.bf16.mxu0 0
        %1272 = vmatmul.mubr.bf16.gmra.mrb[0].mxu0 %v770
        %v1273 = vpop.f32.mrb[0].mxu0
        %v1274 = vadd.f32 %v1113, %v1273
        %v1275 = vpop.f32.mrb[0].mxu0
        %v1276 = vpop.f32.mrb[0].mxu0
        %v1277 = vadd.f32 %v1116, %v1276
        %v1278 = vpop.f32.mrb[0].mxu0
        %1279 = vmatprep.mubr.bf16.mxu0 0
        %1280 = vmatmul.mubr.bf16.gmra.mrb[0].mxu0 %v773
        %v1281 = vpop.f32.mrb[0].mxu0
        %v1282 = vadd.f32 %v1121, %v1281
        %v1283 = vpop.f32.mrb[0].mxu0
        %v1284 = vpop.f32.mrb[0].mxu0
        %v1285 = vadd.f32 %v1124, %v1284
        %v1286 = vpop.f32.mrb[0].mxu0
        %1287 = vdwg.mxu0
        %1288 = vst [vmem:[#allocation3] sm:$0xff] %v1162
        %1289 = vst [vmem:[#allocation3 + $0x8] sm:$0xff] %v1165
        %1290 = vst [vmem:[#allocation3 + $0x10] sm:$0xff] %v1170
        %1291 = vst [vmem:[#allocation3 + $0x18] sm:$0xff] %v1173
        %1292 = vst [vmem:[#allocation3 + $0x20] sm:$0xff] %v1178
        %1293 = vst [vmem:[#allocation3 + $0x28] sm:$0xff] %v1181
        %1294 = vst [vmem:[#allocation3 + $0x30] sm:$0xff] %v1186
        %1295 = vst [vmem:[#allocation3 + $0x38] sm:$0xff] %v1189
        %1296 = vst [vmem:[#allocation3 + $0x40] sm:$0xff] %v1194
        %1297 = vst [vmem:[#allocation3 + $0x48] sm:$0xff] %v1197
        %1298 = vst [vmem:[#allocation3 + $0x50] sm:$0xff] %v1202
        %1299 = vst [vmem:[#allocation3 + $0x58] sm:$0xff] %v1205
        %1300 = vst [vmem:[#allocation3 + $0x60] sm:$0xff] %v1210
        %1301 = vst [vmem:[#allocation3 + $0x68] sm:$0xff] %v1213
        %1302 = vst [vmem:[#allocation3 + $0x70] sm:$0xff] %v1218
        %1303 = vst [vmem:[#allocation3 + $0x78] sm:$0xff] %v1221
        %1304 = vst [vmem:[#allocation3 + $0x80] sm:$0xff] %v1226
        %1305 = vst [vmem:[#allocation3 + $0x88] sm:$0xff] %v1229
        %1306 = vst [vmem:[#allocation3 + $0x90] sm:$0xff] %v1234
        %1307 = vst [vmem:[#allocation3 + $0x98] sm:$0xff] %v1237
        %1308 = vst [vmem:[#allocation3 + $0xa0] sm:$0xff] %v1242
        %1309 = vst [vmem:[#allocation3 + $0xa8] sm:$0xff] %v1245
        %1310 = vst [vmem:[#allocation3 + $0xb0] sm:$0xff] %v1250
        %1311 = vst [vmem:[#allocation3 + $0xb8] sm:$0xff] %v1253
        %1312 = vst [vmem:[#allocation3 + $0xc0] sm:$0xff] %v1258
        %1313 = vst [vmem:[#allocation3 + $0xc8] sm:$0xff] %v1261
        %1314 = vst [vmem:[#allocation3 + $0xd0] sm:$0xff] %v1266
        %1315 = vst [vmem:[#allocation3 + $0xd8] sm:$0xff] %v1269
        %1316 = vst [vmem:[#allocation3 + $0xe0] sm:$0xff] %v1274
        %1317 = vst [vmem:[#allocation3 + $0xe8] sm:$0xff] %v1277
        %1318 = vst [vmem:[#allocation3 + $0xf0] sm:$0xff] %v1282
        %1319 = vst [vmem:[#allocation3 + $0xf8] sm:$0xff] %v1285
        %v1320 = vld [vmem:[%s282] sm:$0xff]
        %v1321 = vld [vmem:[%s282 + $0x8] sm:$0xff]
        %v1322 = vld [vmem:[%s282 + $0x10] sm:$0xff]
        %v1323 = vld [vmem:[%s282 + $0x18] sm:$0xff]
        %v1324 = vld [vmem:[%s282 + $0x20] sm:$0xff]
        %v1325 = vld [vmem:[%s282 + $0x28] sm:$0xff]
        %v1326 = vld [vmem:[%s282 + $0x30] sm:$0xff]
        %v1327 = vld [vmem:[%s282 + $0x38] sm:$0xff]
        %v1328 = vld [vmem:[%s282 + $0x40] sm:$0xff]
        %v1329 = vld [vmem:[%s282 + $0x48] sm:$0xff]
        %v1330 = vld [vmem:[%s282 + $0x50] sm:$0xff]
        %v1331 = vld [vmem:[%s282 + $0x58] sm:$0xff]
        %v1332 = vld [vmem:[%s282 + $0x60] sm:$0xff]
        %v1333 = vld [vmem:[%s282 + $0x68] sm:$0xff]
        %v1334 = vld [vmem:[%s282 + $0x70] sm:$0xff]
        %v1335 = vld [vmem:[%s282 + $0x78] sm:$0xff]
        %v1336 = vld [vmem:[%s282 + $0x80] sm:$0xff]
        %v1337 = vld [vmem:[%s282 + $0x88] sm:$0xff]
        %v1338 = vld [vmem:[%s282 + $0x90] sm:$0xff]
        %v1339 = vld [vmem:[%s282 + $0x98] sm:$0xff]
        %v1340 = vld [vmem:[%s282 + $0xa0] sm:$0xff]
        %v1341 = vld [vmem:[%s282 + $0xa8] sm:$0xff]
        %v1342 = vld [vmem:[%s282 + $0xb0] sm:$0xff]
        %v1343 = vld [vmem:[%s282 + $0xb8] sm:$0xff]
        %v1344 = vld [vmem:[%s282 + $0xc0] sm:$0xff]
        %v1345 = vld [vmem:[%s282 + $0xc8] sm:$0xff]
        %v1346 = vld [vmem:[%s282 + $0xd0] sm:$0xff]
        %v1347 = vld [vmem:[%s282 + $0xd8] sm:$0xff]
        %v1348 = vld [vmem:[%s282 + $0xe0] sm:$0xff]
        %v1349 = vld [vmem:[%s282 + $0xe8] sm:$0xff]
        %v1350 = vld [vmem:[%s282 + $0xf0] sm:$0xff]
        %v1351 = vld [vmem:[%s282 + $0xf8] sm:$0xff]
        %v1352 = vld [vmem:[%s282 + $0x100] sm:$0xff]
        %v1353 = vld [vmem:[%s282 + $0x108] sm:$0xff]
        %v1354 = vld [vmem:[%s282 + $0x110] sm:$0xff]
        %v1355 = vld [vmem:[%s282 + $0x118] sm:$0xff]
        %v1356 = vld [vmem:[%s282 + $0x120] sm:$0xff]
        %v1357 = vld [vmem:[%s282 + $0x128] sm:$0xff]
        %v1358 = vld [vmem:[%s282 + $0x130] sm:$0xff]
        %v1359 = vld [vmem:[%s282 + $0x138] sm:$0xff]
        %v1360 = vld [vmem:[%s282 + $0x140] sm:$0xff]
        %v1361 = vld [vmem:[%s282 + $0x148] sm:$0xff]
        %v1362 = vld [vmem:[%s282 + $0x150] sm:$0xff]
        %v1363 = vld [vmem:[%s282 + $0x158] sm:$0xff]
        %v1364 = vld [vmem:[%s282 + $0x160] sm:$0xff]
        %v1365 = vld [vmem:[%s282 + $0x168] sm:$0xff]
        %v1366 = vld [vmem:[%s282 + $0x170] sm:$0xff]
        %v1367 = vld [vmem:[%s282 + $0x178] sm:$0xff]
        %s1368 = scalar_lea.vmem [#allocation6], 192
        %v1369 = vld [vmem:[%s1368] sm:$0xf]
        %v1370 = vld [vmem:[%s1368 + $0x4] sm:$0xf]
        %v1371 = vld [vmem:[%s1368 + $0x8] sm:$0xf]
        %v1372 = vld [vmem:[%s1368 + $0xc] sm:$0xf]
        %v1373 = vld [vmem:[%s1368 + $0x10] sm:$0xf]
        %v1374 = vld [vmem:[%s1368 + $0x14] sm:$0xf]
        %v1375 = vld [vmem:[%s1368 + $0x18] sm:$0xf]
        %v1376 = vld [vmem:[%s1368 + $0x1c] sm:$0xf]
        %v1377 = vld [vmem:[%s1368 + $0x20] sm:$0xf]
        %v1378 = vld [vmem:[%s1368 + $0x24] sm:$0xf]
        %v1379 = vld [vmem:[%s1368 + $0x28] sm:$0xf]
        %v1380 = vld [vmem:[%s1368 + $0x2c] sm:$0xf]
        %v1381 = vld [vmem:[%s1368 + $0x30] sm:$0xf]
        %v1382 = vld [vmem:[%s1368 + $0x34] sm:$0xf]
        %v1383 = vld [vmem:[%s1368 + $0x38] sm:$0xf]
        %v1384 = vld [vmem:[%s1368 + $0x3c] sm:$0xf]
        %v1385 = vld [vmem:[%s1368 + $0x40] sm:$0xf]
        %v1386 = vld [vmem:[%s1368 + $0x44] sm:$0xf]
        %v1387 = vld [vmem:[%s1368 + $0x48] sm:$0xf]
        %v1388 = vld [vmem:[%s1368 + $0x4c] sm:$0xf]
        %v1389 = vld [vmem:[%s1368 + $0x50] sm:$0xf]
        %v1390 = vld [vmem:[%s1368 + $0x54] sm:$0xf]
        %v1391 = vld [vmem:[%s1368 + $0x58] sm:$0xf]
        %v1392 = vld [vmem:[%s1368 + $0x5c] sm:$0xf]
        %v1393 = vld [vmem:[%s1368 + $0x60] sm:$0xf]
        %v1394 = vld [vmem:[%s1368 + $0x64] sm:$0xf]
        %v1395 = vld [vmem:[%s1368 + $0x68] sm:$0xf]
        %v1396 = vld [vmem:[%s1368 + $0x6c] sm:$0xf]
        %v1397 = vld [vmem:[%s1368 + $0x70] sm:$0xf]
        %v1398 = vld [vmem:[%s1368 + $0x74] sm:$0xf]
        %v1399 = vld [vmem:[%s1368 + $0x78] sm:$0xf]
        %v1400 = vld [vmem:[%s1368 + $0x7c] sm:$0xf]
        %v1401 = vld [vmem:[%s1368 + $0x80] sm:$0xf]
        %v1402 = vld [vmem:[%s1368 + $0x84] sm:$0xf]
        %v1403 = vld [vmem:[%s1368 + $0x88] sm:$0xf]
        %v1404 = vld [vmem:[%s1368 + $0x8c] sm:$0xf]
        %v1405 = vld [vmem:[%s1368 + $0x90] sm:$0xf]
        %v1406 = vld [vmem:[%s1368 + $0x94] sm:$0xf]
        %v1407 = vld [vmem:[%s1368 + $0x98] sm:$0xf]
        %v1408 = vld [vmem:[%s1368 + $0x9c] sm:$0xf]
        %v1409 = vld [vmem:[%s1368 + $0xa0] sm:$0xf]
        %v1410 = vld [vmem:[%s1368 + $0xa4] sm:$0xf]
        %v1411 = vld [vmem:[%s1368 + $0xa8] sm:$0xf]
        %v1412 = vld [vmem:[%s1368 + $0xac] sm:$0xf]
        %v1413 = vld [vmem:[%s1368 + $0xb0] sm:$0xf]
        %v1414 = vld [vmem:[%s1368 + $0xb4] sm:$0xf]
        %v1415 = vld [vmem:[%s1368 + $0xb8] sm:$0xf]
        %v1416 = vld [vmem:[%s1368 + $0xbc] sm:$0xf]
        %v1465 = vunpack.c.l.b16 %v1369
        %v1466 = vunpack.c.l.b16 %v1370
        %v1467 = vunpack.c.l.b16 %v1371
        %v1468 = vunpack.c.l.b16 %v1372
        %v1469 = vunpack.c.l.b16 %v1373
        %v1470 = vunpack.c.l.b16 %v1374
        %v1471 = vunpack.c.l.b16 %v1375
        %v1472 = vunpack.c.l.b16 %v1376
        %v1473 = vunpack.c.l.b16 %v1377
        %v1474 = vunpack.c.l.b16 %v1378
        %v1475 = vunpack.c.l.b16 %v1379
        %v1476 = vunpack.c.l.b16 %v1380
        %v1477 = vunpack.c.l.b16 %v1381
        %v1478 = vunpack.c.l.b16 %v1382
        %v1479 = vunpack.c.l.b16 %v1383
        %v1480 = vunpack.c.l.b16 %v1384
        %v1481 = vunpack.c.l.b16 %v1385
        %v1482 = vunpack.c.l.b16 %v1386
        %v1483 = vunpack.c.l.b16 %v1387
        %v1484 = vunpack.c.l.b16 %v1388
        %v1485 = vunpack.c.l.b16 %v1389
        %v1486 = vunpack.c.l.b16 %v1390
        %v1487 = vunpack.c.l.b16 %v1391
        %v1488 = vunpack.c.l.b16 %v1392
        %v1489 = vunpack.c.l.b16 %v1393
        %v1490 = vunpack.c.l.b16 %v1394
        %v1491 = vunpack.c.l.b16 %v1395
        %v1492 = vunpack.c.l.b16 %v1396
        %v1493 = vunpack.c.l.b16 %v1397
        %v1494 = vunpack.c.l.b16 %v1398
        %v1495 = vunpack.c.l.b16 %v1399
        %v1496 = vunpack.c.l.b16 %v1400
        %v1497 = vunpack.c.l.b16 %v1401
        %v1498 = vunpack.c.l.b16 %v1402
        %v1499 = vunpack.c.l.b16 %v1403
        %v1500 = vunpack.c.l.b16 %v1404
        %v1501 = vunpack.c.l.b16 %v1405
        %v1502 = vunpack.c.l.b16 %v1406
        %v1503 = vunpack.c.l.b16 %v1407
        %v1504 = vunpack.c.l.b16 %v1408
        %v1505 = vunpack.c.l.b16 %v1409
        %v1506 = vunpack.c.l.b16 %v1410
        %v1507 = vunpack.c.l.b16 %v1411
        %v1508 = vunpack.c.l.b16 %v1412
        %v1509 = vunpack.c.l.b16 %v1413
        %v1510 = vunpack.c.l.b16 %v1414
        %v1511 = vunpack.c.l.b16 %v1415
        %v1512 = vunpack.c.l.b16 %v1416
        %v1513 = vpack.c.b16 %v1466, %v1465
        %v1514 = vpack.c.b16 %v1468, %v1467
        %v1515 = vpack.c.b16 %v1470, %v1469
        %v1516 = vpack.c.b16 %v1472, %v1471
        %v1517 = vpack.c.b16 %v1474, %v1473
        %v1518 = vpack.c.b16 %v1476, %v1475
        %v1519 = vpack.c.b16 %v1478, %v1477
        %v1520 = vpack.c.b16 %v1480, %v1479
        %v1521 = vpack.c.b16 %v1482, %v1481
        %v1522 = vpack.c.b16 %v1484, %v1483
        %v1523 = vpack.c.b16 %v1486, %v1485
        %v1524 = vpack.c.b16 %v1488, %v1487
        %v1525 = vpack.c.b16 %v1490, %v1489
        %v1526 = vpack.c.b16 %v1492, %v1491
        %v1527 = vpack.c.b16 %v1494, %v1493
        %v1528 = vpack.c.b16 %v1496, %v1495
        %v1529 = vpack.c.b16 %v1498, %v1497
        %v1530 = vpack.c.b16 %v1500, %v1499
        %v1531 = vpack.c.b16 %v1502, %v1501
        %v1532 = vpack.c.b16 %v1504, %v1503
        %v1533 = vpack.c.b16 %v1506, %v1505
        %v1534 = vpack.c.b16 %v1508, %v1507
        %v1535 = vpack.c.b16 %v1510, %v1509
        %v1536 = vpack.c.b16 %v1512, %v1511
        %1561 = vmatprep.subr.bf16.mxu0 0
        %1562 = vmatpush1.bf16.msra.mxu0 %v1513
        %1563 = vmatprep.subr.bf16.mxu0 0
        %1564 = vmatpush1.bf16.msra.mxu0 %v1514
        %1565 = vmatprep.subr.bf16.mxu0 0
        %1566 = vmatpush1.bf16.msra.mxu0 %v1515
        %1567 = vmatprep.subr.bf16.mxu0 0
        %1568 = vmatpush1.bf16.msra.mxu0 %v1516
        %1569 = vmatprep.subr.bf16.mxu0 0
        %1570 = vmatpush1.bf16.msra.mxu0 %v1517
        %1571 = vmatprep.subr.bf16.mxu0 0
        %1572 = vmatpush1.bf16.msra.mxu0 %v1518
        %1573 = vmatprep.subr.bf16.mxu0 0
        %1574 = vmatpush1.bf16.msra.mxu0 %v1519
        %1575 = vmatprep.subr.bf16.mxu0 0
        %1576 = vmatpush1.bf16.msra.mxu0 %v1520
        %1577 = vmatprep.subr.bf16.mxu0 0
        %1578 = vmatpush1.bf16.msra.mxu0 %v1521
        %1579 = vmatprep.subr.bf16.mxu0 0
        %1580 = vmatpush1.bf16.msra.mxu0 %v1522
        %1581 = vmatprep.subr.bf16.mxu0 0
        %1582 = vmatpush1.bf16.msra.mxu0 %v1523
        %1583 = vmatprep.subr.bf16.mxu0 0
        %1584 = vmatpush1.bf16.msra.mxu0 %v1524
        %1585 = vmatprep.subr.bf16.mxu0 0
        %1586 = vmatpush1.bf16.msra.mxu0 %v1525
        %1587 = vmatprep.subr.bf16.mxu0 0
        %1588 = vmatpush1.bf16.msra.mxu0 %v1526
        %1589 = vmatprep.subr.bf16.mxu0 0
        %1590 = vmatpush1.bf16.msra.mxu0 %v1527
        %1591 = vmatprep.subr.bf16.mxu0 0
        %1592 = vmatpush1.bf16.msra.mxu0 %v1528
        %1593 = vmatprep.mubr.bf16.mxu0 %v1321
        %1594 = vmatmul.mubr.bf16.gmra.mrb[0].mxu0 %v1320
        %v1595 = vpop.f32.mrb[0].mxu0
        %v1596 = vadd.f32 0.0, %v1595
        %v1597 = vpop.f32.mrb[0].mxu0
        %v1598 = vpop.f32.mrb[0].mxu0
        %v1599 = vadd.f32 0.0, %v1598
        %v1600 = vpop.f32.mrb[0].mxu0
        %1601 = vmatprep.mubr.bf16.mxu0 %v1324
        %1602 = vmatmul.mubr.bf16.gmra.mrb[0].mxu0 %v1323
        %v1603 = vpop.f32.mrb[0].mxu0
        %v1604 = vadd.f32 0.0, %v1603
        %v1605 = vpop.f32.mrb[0].mxu0
        %v1606 = vpop.f32.mrb[0].mxu0
        %v1607 = vadd.f32 0.0, %v1606
        %v1608 = vpop.f32.mrb[0].mxu0
        %1609 = vmatprep.mubr.bf16.mxu0 %v1327
        %1610 = vmatmul.mubr.bf16.gmra.mrb[0].mxu0 %v1326
        %v1611 = vpop.f32.mrb[0].mxu0
        %v1612 = vadd.f32 0.0, %v1611
        %v1613 = vpop.f32.mrb[0].mxu0
        %v1614 = vpop.f32.mrb[0].mxu0
        %v1615 = vadd.f32 0.0, %v1614
        %v1616 = vpop.f32.mrb[0].mxu0
        %1617 = vmatprep.mubr.bf16.mxu0 %v1330
        %1618 = vmatmul.mubr.bf16.gmra.mrb[0].mxu0 %v1329
        %v1619 = vpop.f32.mrb[0].mxu0
        %v1620 = vadd.f32 0.0, %v1619
        %v1621 = vpop.f32.mrb[0].mxu0
        %v1622 = vpop.f32.mrb[0].mxu0
        %v1623 = vadd.f32 0.0, %v1622
        %v1624 = vpop.f32.mrb[0].mxu0
        %1625 = vmatprep.mubr.bf16.mxu0 %v1333
        %1626 = vmatmul.mubr.bf16.gmra.mrb[0].mxu0 %v1332
        %v1627 = vpop.f32.mrb[0].mxu0
        %v1628 = vadd.f32 0.0, %v1627
        %v1629 = vpop.f32.mrb[0].mxu0
        %v1630 = vpop.f32.mrb[0].mxu0
        %v1631 = vadd.f32 0.0, %v1630
        %v1632 = vpop.f32.mrb[0].mxu0
        %1633 = vmatprep.mubr.bf16.mxu0 %v1336
        %1634 = vmatmul.mubr.bf16.gmra.mrb[0].mxu0 %v1335
        %v1635 = vpop.f32.mrb[0].mxu0
        %v1636 = vadd.f32 0.0, %v1635
        %v1637 = vpop.f32.mrb[0].mxu0
        %v1638 = vpop.f32.mrb[0].mxu0
        %v1639 = vadd.f32 0.0, %v1638
        %v1640 = vpop.f32.mrb[0].mxu0
        %1641 = vmatprep.mubr.bf16.mxu0 %v1339
        %1642 = vmatmul.mubr.bf16.gmra.mrb[0].mxu0 %v1338
        %v1643 = vpop.f32.mrb[0].mxu0
        %v1644 = vadd.f32 0.0, %v1643
        %v1645 = vpop.f32.mrb[0].mxu0
        %v1646 = vpop.f32.mrb[0].mxu0
        %v1647 = vadd.f32 0.0, %v1646
        %v1648 = vpop.f32.mrb[0].mxu0
        %1649 = vmatprep.mubr.bf16.mxu0 %v1342
        %1650 = vmatmul.mubr.bf16.gmra.mrb[0].mxu0 %v1341
        %v1651 = vpop.f32.mrb[0].mxu0
        %v1652 = vadd.f32 0.0, %v1651
        %v1653 = vpop.f32.mrb[0].mxu0
        %v1654 = vpop.f32.mrb[0].mxu0
        %v1655 = vadd.f32 0.0, %v1654
        %v1656 = vpop.f32.mrb[0].mxu0
        %1657 = vmatprep.mubr.bf16.mxu0 %v1345
        %1658 = vmatmul.mubr.bf16.gmra.mrb[0].mxu0 %v1344
        %v1659 = vpop.f32.mrb[0].mxu0
        %v1660 = vadd.f32 0.0, %v1659
        %v1661 = vpop.f32.mrb[0].mxu0
        %v1662 = vpop.f32.mrb[0].mxu0
        %v1663 = vadd.f32 0.0, %v1662
        %v1664 = vpop.f32.mrb[0].mxu0
        %1665 = vmatprep.mubr.bf16.mxu0 %v1348
        %1666 = vmatmul.mubr.bf16.gmra.mrb[0].mxu0 %v1347
        %v1667 = vpop.f32.mrb[0].mxu0
        %v1668 = vadd.f32 0.0, %v1667
        %v1669 = vpop.f32.mrb[0].mxu0
        %v1670 = vpop.f32.mrb[0].mxu0
        %v1671 = vadd.f32 0.0, %v1670
        %v1672 = vpop.f32.mrb[0].mxu0
        %1673 = vmatprep.mubr.bf16.mxu0 %v1351
        %1674 = vmatmul.mubr.bf16.gmra.mrb[0].mxu0 %v1350
        %v1675 = vpop.f32.mrb[0].mxu0
        %v1676 = vadd.f32 0.0, %v1675
        %v1677 = vpop.f32.mrb[0].mxu0
        %v1678 = vpop.f32.mrb[0].mxu0
        %v1679 = vadd.f32 0.0, %v1678
        %v1680 = vpop.f32.mrb[0].mxu0
        %1681 = vmatprep.mubr.bf16.mxu0 %v1354
        %1682 = vmatmul.mubr.bf16.gmra.mrb[0].mxu0 %v1353
        %v1683 = vpop.f32.mrb[0].mxu0
        %v1684 = vadd.f32 0.0, %v1683
        %v1685 = vpop.f32.mrb[0].mxu0
        %v1686 = vpop.f32.mrb[0].mxu0
        %v1687 = vadd.f32 0.0, %v1686
        %v1688 = vpop.f32.mrb[0].mxu0
        %1689 = vmatprep.mubr.bf16.mxu0 %v1357
        %1690 = vmatmul.mubr.bf16.gmra.mrb[0].mxu0 %v1356
        %v1691 = vpop.f32.mrb[0].mxu0
        %v1692 = vadd.f32 0.0, %v1691
        %v1693 = vpop.f32.mrb[0].mxu0
        %v1694 = vpop.f32.mrb[0].mxu0
        %v1695 = vadd.f32 0.0, %v1694
        %v1696 = vpop.f32.mrb[0].mxu0
        %1697 = vmatprep.mubr.bf16.mxu0 %v1360
        %1698 = vmatmul.mubr.bf16.gmra.mrb[0].mxu0 %v1359
        %v1699 = vpop.f32.mrb[0].mxu0
        %v1700 = vadd.f32 0.0, %v1699
        %v1701 = vpop.f32.mrb[0].mxu0
        %v1702 = vpop.f32.mrb[0].mxu0
        %v1703 = vadd.f32 0.0, %v1702
        %v1704 = vpop.f32.mrb[0].mxu0
        %1705 = vmatprep.mubr.bf16.mxu0 %v1363
        %1706 = vmatmul.mubr.bf16.gmra.mrb[0].mxu0 %v1362
        %v1707 = vpop.f32.mrb[0].mxu0
        %v1708 = vadd.f32 0.0, %v1707
        %v1709 = vpop.f32.mrb[0].mxu0
        %v1710 = vpop.f32.mrb[0].mxu0
        %v1711 = vadd.f32 0.0, %v1710
        %v1712 = vpop.f32.mrb[0].mxu0
        %1713 = vmatprep.mubr.bf16.mxu0 %v1366
        %1714 = vmatmul.mubr.bf16.gmra.mrb[0].mxu0 %v1365
        %v1715 = vpop.f32.mrb[0].mxu0
        %v1716 = vadd.f32 0.0, %v1715
        %v1717 = vpop.f32.mrb[0].mxu0
        %v1718 = vpop.f32.mrb[0].mxu0
        %v1719 = vadd.f32 0.0, %v1718
        %v1720 = vpop.f32.mrb[0].mxu0
        %1721 = vdwg.mxu0
        %1722 = vmatprep.subr.bf16.mxu0 0
        %1723 = vmatpush1.bf16.msra.mxu0 %v1529
        %1724 = vmatprep.subr.bf16.mxu0 0
        %1725 = vmatpush1.bf16.msra.mxu0 %v1530
        %1726 = vmatprep.subr.bf16.mxu0 0
        %1727 = vmatpush1.bf16.msra.mxu0 %v1531
        %1728 = vmatprep.subr.bf16.mxu0 0
        %1729 = vmatpush1.bf16.msra.mxu0 %v1532
        %1730 = vmatprep.subr.bf16.mxu0 0
        %1731 = vmatpush1.bf16.msra.mxu0 %v1533
        %1732 = vmatprep.subr.bf16.mxu0 0
        %1733 = vmatpush1.bf16.msra.mxu0 %v1534
        %1734 = vmatprep.subr.bf16.mxu0 0
        %1735 = vmatpush1.bf16.msra.mxu0 %v1535
        %1736 = vmatprep.subr.bf16.mxu0 0
        %1737 = vmatpush1.bf16.msra.mxu0 %v1536
        %1738 = vmatprep.subr.bf16.mxu0 0
        %1739 = vmatpush1.bf16.msra.mxu0 0
        %1740 = vmatprep.subr.bf16.mxu0 0
        %1741 = vmatpush1.bf16.msra.mxu0 0
        %1742 = vmatprep.subr.bf16.mxu0 0
        %1743 = vmatpush1.bf16.msra.mxu0 0
        %1744 = vmatprep.subr.bf16.mxu0 0
        %1745 = vmatpush1.bf16.msra.mxu0 0
        %1746 = vmatprep.subr.bf16.mxu0 0
        %1747 = vmatpush1.bf16.msra.mxu0 0
        %1748 = vmatprep.subr.bf16.mxu0 0
        %1749 = vmatpush1.bf16.msra.mxu0 0
        %1750 = vmatprep.subr.bf16.mxu0 0
        %1751 = vmatpush1.bf16.msra.mxu0 0
        %1752 = vmatprep.subr.bf16.mxu0 0
        %1753 = vmatpush1.bf16.msra.mxu0 0
        %1754 = vmatprep.mubr.bf16.mxu0 0
        %1755 = vmatmul.mubr.bf16.gmra.mrb[0].mxu0 %v1322
        %v1756 = vpop.f32.mrb[0].mxu0
        %v1757 = vadd.f32 %v1596, %v1756
        %v1758 = vpop.f32.mrb[0].mxu0
        %v1759 = vpop.f32.mrb[0].mxu0
        %v1760 = vadd.f32 %v1599, %v1759
        %v1761 = vpop.f32.mrb[0].mxu0
        %1762 = vmatprep.mubr.bf16.mxu0 0
        %1763 = vmatmul.mubr.bf16.gmra.mrb[0].mxu0 %v1325
        %v1764 = vpop.f32.mrb[0].mxu0
        %v1765 = vadd.f32 %v1604, %v1764
        %v1766 = vpop.f32.mrb[0].mxu0
        %v1767 = vpop.f32.mrb[0].mxu0
        %v1768 = vadd.f32 %v1607, %v1767
        %v1769 = vpop.f32.mrb[0].mxu0
        %1770 = vmatprep.mubr.bf16.mxu0 0
        %1771 = vmatmul.mubr.bf16.gmra.mrb[0].mxu0 %v1328
        %v1772 = vpop.f32.mrb[0].mxu0
        %v1773 = vadd.f32 %v1612, %v1772
        %v1774 = vpop.f32.mrb[0].mxu0
        %v1775 = vpop.f32.mrb[0].mxu0
        %v1776 = vadd.f32 %v1615, %v1775
        %v1777 = vpop.f32.mrb[0].mxu0
        %1778 = vmatprep.mubr.bf16.mxu0 0
        %1779 = vmatmul.mubr.bf16.gmra.mrb[0].mxu0 %v1331
        %v1780 = vpop.f32.mrb[0].mxu0
        %v1781 = vadd.f32 %v1620, %v1780
        %v1782 = vpop.f32.mrb[0].mxu0
        %v1783 = vpop.f32.mrb[0].mxu0
        %v1784 = vadd.f32 %v1623, %v1783
        %v1785 = vpop.f32.mrb[0].mxu0
        %1786 = vmatprep.mubr.bf16.mxu0 0
        %1787 = vmatmul.mubr.bf16.gmra.mrb[0].mxu0 %v1334
        %v1788 = vpop.f32.mrb[0].mxu0
        %v1789 = vadd.f32 %v1628, %v1788
        %v1790 = vpop.f32.mrb[0].mxu0
        %v1791 = vpop.f32.mrb[0].mxu0
        %v1792 = vadd.f32 %v1631, %v1791
        %v1793 = vpop.f32.mrb[0].mxu0
        %1794 = vmatprep.mubr.bf16.mxu0 0
        %1795 = vmatmul.mubr.bf16.gmra.mrb[0].mxu0 %v1337
        %v1796 = vpop.f32.mrb[0].mxu0
        %v1797 = vadd.f32 %v1636, %v1796
        %v1798 = vpop.f32.mrb[0].mxu0
        %v1799 = vpop.f32.mrb[0].mxu0
        %v1800 = vadd.f32 %v1639, %v1799
        %v1801 = vpop.f32.mrb[0].mxu0
        %1802 = vmatprep.mubr.bf16.mxu0 0
        %1803 = vmatmul.mubr.bf16.gmra.mrb[0].mxu0 %v1340
        %v1804 = vpop.f32.mrb[0].mxu0
        %v1805 = vadd.f32 %v1644, %v1804
        %v1806 = vpop.f32.mrb[0].mxu0
        %v1807 = vpop.f32.mrb[0].mxu0
        %v1808 = vadd.f32 %v1647, %v1807
        %v1809 = vpop.f32.mrb[0].mxu0
        %1810 = vmatprep.mubr.bf16.mxu0 0
        %1811 = vmatmul.mubr.bf16.gmra.mrb[0].mxu0 %v1343
        %v1812 = vpop.f32.mrb[0].mxu0
        %v1813 = vadd.f32 %v1652, %v1812
        %v1814 = vpop.f32.mrb[0].mxu0
        %v1815 = vpop.f32.mrb[0].mxu0
        %v1816 = vadd.f32 %v1655, %v1815
        %v1817 = vpop.f32.mrb[0].mxu0
        %1818 = vmatprep.mubr.bf16.mxu0 0
        %1819 = vmatmul.mubr.bf16.gmra.mrb[0].mxu0 %v1346
        %v1820 = vpop.f32.mrb[0].mxu0
        %v1821 = vadd.f32 %v1660, %v1820
        %v1822 = vpop.f32.mrb[0].mxu0
        %v1823 = vpop.f32.mrb[0].mxu0
        %v1824 = vadd.f32 %v1663, %v1823
        %v1825 = vpop.f32.mrb[0].mxu0
        %1826 = vmatprep.mubr.bf16.mxu0 0
        %1827 = vmatmul.mubr.bf16.gmra.mrb[0].mxu0 %v1349
        %v1828 = vpop.f32.mrb[0].mxu0
        %v1829 = vadd.f32 %v1668, %v1828
        %v1830 = vpop.f32.mrb[0].mxu0
        %v1831 = vpop.f32.mrb[0].mxu0
        %v1832 = vadd.f32 %v1671, %v1831
        %v1833 = vpop.f32.mrb[0].mxu0
        %1834 = vmatprep.mubr.bf16.mxu0 0
        %1835 = vmatmul.mubr.bf16.gmra.mrb[0].mxu0 %v1352
        %v1836 = vpop.f32.mrb[0].mxu0
        %v1837 = vadd.f32 %v1676, %v1836
        %v1838 = vpop.f32.mrb[0].mxu0
        %v1839 = vpop.f32.mrb[0].mxu0
        %v1840 = vadd.f32 %v1679, %v1839
        %v1841 = vpop.f32.mrb[0].mxu0
        %1842 = vmatprep.mubr.bf16.mxu0 0
        %1843 = vmatmul.mubr.bf16.gmra.mrb[0].mxu0 %v1355
        %v1844 = vpop.f32.mrb[0].mxu0
        %v1845 = vadd.f32 %v1684, %v1844
        %v1846 = vpop.f32.mrb[0].mxu0
        %v1847 = vpop.f32.mrb[0].mxu0
        %v1848 = vadd.f32 %v1687, %v1847
        %v1849 = vpop.f32.mrb[0].mxu0
        %1850 = vmatprep.mubr.bf16.mxu0 0
        %1851 = vmatmul.mubr.bf16.gmra.mrb[0].mxu0 %v1358
        %v1852 = vpop.f32.mrb[0].mxu0
        %v1853 = vadd.f32 %v1692, %v1852
        %v1854 = vpop.f32.mrb[0].mxu0
        %v1855 = vpop.f32.mrb[0].mxu0
        %v1856 = vadd.f32 %v1695, %v1855
        %v1857 = vpop.f32.mrb[0].mxu0
        %1858 = vmatprep.mubr.bf16.mxu0 0
        %1859 = vmatmul.mubr.bf16.gmra.mrb[0].mxu0 %v1361
        %v1860 = vpop.f32.mrb[0].mxu0
        %v1861 = vadd.f32 %v1700, %v1860
        %v1862 = vpop.f32.mrb[0].mxu0
        %v1863 = vpop.f32.mrb[0].mxu0
        %v1864 = vadd.f32 %v1703, %v1863
        %v1865 = vpop.f32.mrb[0].mxu0
        %1866 = vmatprep.mubr.bf16.mxu0 0
        %1867 = vmatmul.mubr.bf16.gmra.mrb[0].mxu0 %v1364
        %v1868 = vpop.f32.mrb[0].mxu0
        %v1869 = vadd.f32 %v1708, %v1868
        %v1870 = vpop.f32.mrb[0].mxu0
        %v1871 = vpop.f32.mrb[0].mxu0
        %v1872 = vadd.f32 %v1711, %v1871
        %v1873 = vpop.f32.mrb[0].mxu0
        %1874 = vmatprep.mubr.bf16.mxu0 0
        %1875 = vmatmul.mubr.bf16.gmra.mrb[0].mxu0 %v1367
        %v1876 = vpop.f32.mrb[0].mxu0
        %v1877 = vadd.f32 %v1716, %v1876
        %v1878 = vpop.f32.mrb[0].mxu0
        %v1879 = vpop.f32.mrb[0].mxu0
        %v1880 = vadd.f32 %v1719, %v1879
        %v1881 = vpop.f32.mrb[0].mxu0
        %1882 = vdwg.mxu0
        %v1883 = vld [vmem:[#allocation3] sm:$0xff]
        %v1884 = vld [vmem:[#allocation3 + $0x8] sm:$0xff]
        %v1885 = vld [vmem:[#allocation3 + $0x10] sm:$0xff]
        %v1886 = vld [vmem:[#allocation3 + $0x18] sm:$0xff]
        %v1887 = vld [vmem:[#allocation3 + $0x20] sm:$0xff]
        %v1888 = vld [vmem:[#allocation3 + $0x28] sm:$0xff]
        %v1889 = vld [vmem:[#allocation3 + $0x30] sm:$0xff]
        %v1890 = vld [vmem:[#allocation3 + $0x38] sm:$0xff]
        %v1891 = vld [vmem:[#allocation3 + $0x40] sm:$0xff]
        %v1892 = vld [vmem:[#allocation3 + $0x48] sm:$0xff]
        %v1893 = vld [vmem:[#allocation3 + $0x50] sm:$0xff]
        %v1894 = vld [vmem:[#allocation3 + $0x58] sm:$0xff]
        %v1895 = vld [vmem:[#allocation3 + $0x60] sm:$0xff]
        %v1896 = vld [vmem:[#allocation3 + $0x68] sm:$0xff]
        %v1897 = vld [vmem:[#allocation3 + $0x70] sm:$0xff]
        %v1898 = vld [vmem:[#allocation3 + $0x78] sm:$0xff]
        %v1899 = vld [vmem:[#allocation3 + $0x80] sm:$0xff]
        %v1900 = vld [vmem:[#allocation3 + $0x88] sm:$0xff]
        %v1901 = vld [vmem:[#allocation3 + $0x90] sm:$0xff]
        %v1902 = vld [vmem:[#allocation3 + $0x98] sm:$0xff]
        %v1903 = vld [vmem:[#allocation3 + $0xa0] sm:$0xff]
        %v1904 = vld [vmem:[#allocation3 + $0xa8] sm:$0xff]
        %v1905 = vld [vmem:[#allocation3 + $0xb0] sm:$0xff]
        %v1906 = vld [vmem:[#allocation3 + $0xb8] sm:$0xff]
        %v1907 = vld [vmem:[#allocation3 + $0xc0] sm:$0xff]
        %v1908 = vld [vmem:[#allocation3 + $0xc8] sm:$0xff]
        %v1909 = vld [vmem:[#allocation3 + $0xd0] sm:$0xff]
        %v1910 = vld [vmem:[#allocation3 + $0xd8] sm:$0xff]
        %v1911 = vld [vmem:[#allocation3 + $0xe0] sm:$0xff]
        %v1912 = vld [vmem:[#allocation3 + $0xe8] sm:$0xff]
        %v1913 = vld [vmem:[#allocation3 + $0xf0] sm:$0xff]
        %v1914 = vld [vmem:[#allocation3 + $0xf8] sm:$0xff]
        %v1915 = vadd.f32 %v1883, %v1757
        %v1916 = vadd.f32 %v1884, %v1760
        %v1917 = vadd.f32 %v1885, %v1765
        %v1918 = vadd.f32 %v1886, %v1768
        %v1919 = vadd.f32 %v1887, %v1773
        %v1920 = vadd.f32 %v1888, %v1776
        %v1921 = vadd.f32 %v1889, %v1781
        %v1922 = vadd.f32 %v1890, %v1784
        %v1923 = vadd.f32 %v1891, %v1789
        %v1924 = vadd.f32 %v1892, %v1792
        %v1925 = vadd.f32 %v1893, %v1797
        %v1926 = vadd.f32 %v1894, %v1800
        %v1927 = vadd.f32 %v1895, %v1805
        %v1928 = vadd.f32 %v1896, %v1808
        %v1929 = vadd.f32 %v1897, %v1813
        %v1930 = vadd.f32 %v1898, %v1816
        %v1931 = vadd.f32 %v1899, %v1821
        %v1932 = vadd.f32 %v1900, %v1824
        %v1933 = vadd.f32 %v1901, %v1829
        %v1934 = vadd.f32 %v1902, %v1832
        %v1935 = vadd.f32 %v1903, %v1837
        %v1936 = vadd.f32 %v1904, %v1840
        %v1937 = vadd.f32 %v1905, %v1845
        %v1938 = vadd.f32 %v1906, %v1848
        %v1939 = vadd.f32 %v1907, %v1853
        %v1940 = vadd.f32 %v1908, %v1856
        %v1941 = vadd.f32 %v1909, %v1861
        %v1942 = vadd.f32 %v1910, %v1864
        %v1943 = vadd.f32 %v1911, %v1869
        %v1944 = vadd.f32 %v1912, %v1872
        %v1945 = vadd.f32 %v1913, %v1877
        %v1946 = vadd.f32 %v1914, %v1880
        %1947 = vst [vmem:[#allocation3] sm:$0xff] %v1915
        %1948 = vst [vmem:[#allocation3 + $0x8] sm:$0xff] %v1916
        %1949 = vst [vmem:[#allocation3 + $0x10] sm:$0xff] %v1917
        %1950 = vst [vmem:[#allocation3 + $0x18] sm:$0xff] %v1918
        %1951 = vst [vmem:[#allocation3 + $0x20] sm:$0xff] %v1919
        %1952 = vst [vmem:[#allocation3 + $0x28] sm:$0xff] %v1920
        %1953 = vst [vmem:[#allocation3 + $0x30] sm:$0xff] %v1921
        %1954 = vst [vmem:[#allocation3 + $0x38] sm:$0xff] %v1922
        %1955 = vst [vmem:[#allocation3 + $0x40] sm:$0xff] %v1923
        %1956 = vst [vmem:[#allocation3 + $0x48] sm:$0xff] %v1924
        %1957 = vst [vmem:[#allocation3 + $0x50] sm:$0xff] %v1925
        %1958 = vst [vmem:[#allocation3 + $0x58] sm:$0xff] %v1926
        %1959 = vst [vmem:[#allocation3 + $0x60] sm:$0xff] %v1927
        %1960 = vst [vmem:[#allocation3 + $0x68] sm:$0xff] %v1928
        %1961 = vst [vmem:[#allocation3 + $0x70] sm:$0xff] %v1929
        %1962 = vst [vmem:[#allocation3 + $0x78] sm:$0xff] %v1930
        %1963 = vst [vmem:[#allocation3 + $0x80] sm:$0xff] %v1931
        %1964 = vst [vmem:[#allocation3 + $0x88] sm:$0xff] %v1932
        %1965 = vst [vmem:[#allocation3 + $0x90] sm:$0xff] %v1933
        %1966 = vst [vmem:[#allocation3 + $0x98] sm:$0xff] %v1934
        %1967 = vst [vmem:[#allocation3 + $0xa0] sm:$0xff] %v1935
        %1968 = vst [vmem:[#allocation3 + $0xa8] sm:$0xff] %v1936
        %1969 = vst [vmem:[#allocation3 + $0xb0] sm:$0xff] %v1937
        %1970 = vst [vmem:[#allocation3 + $0xb8] sm:$0xff] %v1938
        %1971 = vst [vmem:[#allocation3 + $0xc0] sm:$0xff] %v1939
        %1972 = vst [vmem:[#allocation3 + $0xc8] sm:$0xff] %v1940
        %1973 = vst [vmem:[#allocation3 + $0xd0] sm:$0xff] %v1941
        %1974 = vst [vmem:[#allocation3 + $0xd8] sm:$0xff] %v1942
        %1975 = vst [vmem:[#allocation3 + $0xe0] sm:$0xff] %v1943
        %1976 = vst [vmem:[#allocation3 + $0xe8] sm:$0xff] %v1944
        %1977 = vst [vmem:[#allocation3 + $0xf0] sm:$0xff] %v1945
        %1978 = vst [vmem:[#allocation3 + $0xf8] sm:$0xff] %v1946
        %s1979 = scalar_lea.vmem [#allocation2], 48
        %v1980 = vld [vmem:[%s1979] sm:$0xff]
        %v1981 = vld [vmem:[%s1979 + $0x8] sm:$0xff]
        %v1982 = vld [vmem:[%s1979 + $0x10] sm:$0xff]
        %v1983 = vld [vmem:[%s1979 + $0x18] sm:$0xff]
        %v1984 = vld [vmem:[%s1979 + $0x20] sm:$0xff]
        %v1985 = vld [vmem:[%s1979 + $0x28] sm:$0xff]
        %v1986 = vld [vmem:[%s1979 + $0x30] sm:$0xff]
        %v1987 = vld [vmem:[%s1979 + $0x38] sm:$0xff]
        %v1988 = vld [vmem:[%s1979 + $0x40] sm:$0xff]
        %v1989 = vld [vmem:[%s1979 + $0x48] sm:$0xff]
        %v1990 = vld [vmem:[%s1979 + $0x50] sm:$0xff]
        %v1991 = vld [vmem:[%s1979 + $0x58] sm:$0xff]
        %v1992 = vld [vmem:[%s1979 + $0x60] sm:$0xff]
        %v1993 = vld [vmem:[%s1979 + $0x68] sm:$0xff]
        %v1994 = vld [vmem:[%s1979 + $0x70] sm:$0xff]
        %v1995 = vld [vmem:[%s1979 + $0x78] sm:$0xff]
        %v1996 = vld [vmem:[%s1979 + $0x80] sm:$0xff]
        %v1997 = vld [vmem:[%s1979 + $0x88] sm:$0xff]
        %v1998 = vld [vmem:[%s1979 + $0x90] sm:$0xff]
        %v1999 = vld [vmem:[%s1979 + $0x98] sm:$0xff]
        %v2000 = vld [vmem:[%s1979 + $0xa0] sm:$0xff]
        %v2001 = vld [vmem:[%s1979 + $0xa8] sm:$0xff]
        %v2002 = vld [vmem:[%s1979 + $0xb0] sm:$0xff]
        %v2003 = vld [vmem:[%s1979 + $0xb8] sm:$0xff]
        %v2004 = vld [vmem:[%s1979 + $0xc0] sm:$0xff]
        %v2005 = vld [vmem:[%s1979 + $0xc8] sm:$0xff]
        %v2006 = vld [vmem:[%s1979 + $0xd0] sm:$0xff]
        %v2007 = vld [vmem:[%s1979 + $0xd8] sm:$0xff]
        %v2008 = vld [vmem:[%s1979 + $0xe0] sm:$0xff]
        %v2009 = vld [vmem:[%s1979 + $0xe8] sm:$0xff]
        %v2010 = vld [vmem:[%s1979 + $0xf0] sm:$0xff]
        %v2011 = vld [vmem:[%s1979 + $0xf8] sm:$0xff]
        %v2012 = vld [vmem:[%s1979 + $0x100] sm:$0xff]
        %v2013 = vld [vmem:[%s1979 + $0x108] sm:$0xff]
        %v2014 = vld [vmem:[%s1979 + $0x110] sm:$0xff]
        %v2015 = vld [vmem:[%s1979 + $0x118] sm:$0xff]
        %v2016 = vld [vmem:[%s1979 + $0x120] sm:$0xff]
        %v2017 = vld [vmem:[%s1979 + $0x128] sm:$0xff]
        %v2018 = vld [vmem:[%s1979 + $0x130] sm:$0xff]
        %v2019 = vld [vmem:[%s1979 + $0x138] sm:$0xff]
        %v2020 = vld [vmem:[%s1979 + $0x140] sm:$0xff]
        %v2021 = vld [vmem:[%s1979 + $0x148] sm:$0xff]
        %v2022 = vld [vmem:[%s1979 + $0x150] sm:$0xff]
        %v2023 = vld [vmem:[%s1979 + $0x158] sm:$0xff]
        %v2024 = vld [vmem:[%s1979 + $0x160] sm:$0xff]
        %v2025 = vld [vmem:[%s1979 + $0x168] sm:$0xff]
        %v2026 = vld [vmem:[%s1979 + $0x170] sm:$0xff]
        %v2027 = vld [vmem:[%s1979 + $0x178] sm:$0xff]
        %s2028 = scalar_lea.vmem [#allocation6], 384
        %v2029 = vld [vmem:[%s2028] sm:$0xf]
        %v2030 = vld [vmem:[%s2028 + $0x4] sm:$0xf]
        %v2031 = vld [vmem:[%s2028 + $0x8] sm:$0xf]
        %v2032 = vld [vmem:[%s2028 + $0xc] sm:$0xf]
        %v2033 = vld [vmem:[%s2028 + $0x10] sm:$0xf]
        %v2034 = vld [vmem:[%s2028 + $0x14] sm:$0xf]
        %v2035 = vld [vmem:[%s2028 + $0x18] sm:$0xf]
        %v2036 = vld [vmem:[%s2028 + $0x1c] sm:$0xf]
        %v2037 = vld [vmem:[%s2028 + $0x20] sm:$0xf]
        %v2038 = vld [vmem:[%s2028 + $0x24] sm:$0xf]
        %v2039 = vld [vmem:[%s2028 + $0x28] sm:$0xf]
        %v2040 = vld [vmem:[%s2028 + $0x2c] sm:$0xf]
        %v2041 = vld [vmem:[%s2028 + $0x30] sm:$0xf]
        %v2042 = vld [vmem:[%s2028 + $0x34] sm:$0xf]
        %v2043 = vld [vmem:[%s2028 + $0x38] sm:$0xf]
        %v2044 = vld [vmem:[%s2028 + $0x3c] sm:$0xf]
        %v2045 = vld [vmem:[%s2028 + $0x40] sm:$0xf]
        %v2046 = vld [vmem:[%s2028 + $0x44] sm:$0xf]
        %v2047 = vld [vmem:[%s2028 + $0x48] sm:$0xf]
        %v2048 = vld [vmem:[%s2028 + $0x4c] sm:$0xf]
        %v2049 = vld [vmem:[%s2028 + $0x50] sm:$0xf]
        %v2050 = vld [vmem:[%s2028 + $0x54] sm:$0xf]
        %v2051 = vld [vmem:[%s2028 + $0x58] sm:$0xf]
        %v2052 = vld [vmem:[%s2028 + $0x5c] sm:$0xf]
        %v2053 = vld [vmem:[%s2028 + $0x60] sm:$0xf]
        %v2054 = vld [vmem:[%s2028 + $0x64] sm:$0xf]
        %v2055 = vld [vmem:[%s2028 + $0x68] sm:$0xf]
        %v2056 = vld [vmem:[%s2028 + $0x6c] sm:$0xf]
        %v2057 = vld [vmem:[%s2028 + $0x70] sm:$0xf]
        %v2058 = vld [vmem:[%s2028 + $0x74] sm:$0xf]
        %v2059 = vld [vmem:[%s2028 + $0x78] sm:$0xf]
        %v2060 = vld [vmem:[%s2028 + $0x7c] sm:$0xf]
        %v2061 = vld [vmem:[%s2028 + $0x80] sm:$0xf]
        %v2062 = vld [vmem:[%s2028 + $0x84] sm:$0xf]
        %v2063 = vld [vmem:[%s2028 + $0x88] sm:$0xf]
        %v2064 = vld [vmem:[%s2028 + $0x8c] sm:$0xf]
        %v2065 = vld [vmem:[%s2028 + $0x90] sm:$0xf]
        %v2066 = vld [vmem:[%s2028 + $0x94] sm:$0xf]
        %v2067 = vld [vmem:[%s2028 + $0x98] sm:$0xf]
        %v2068 = vld [vmem:[%s2028 + $0x9c] sm:$0xf]
        %v2069 = vld [vmem:[%s2028 + $0xa0] sm:$0xf]
        %v2070 = vld [vmem:[%s2028 + $0xa4] sm:$0xf]
        %v2071 = vld [vmem:[%s2028 + $0xa8] sm:$0xf]
        %v2072 = vld [vmem:[%s2028 + $0xac] sm:$0xf]
        %v2073 = vld [vmem:[%s2028 + $0xb0] sm:$0xf]
        %v2074 = vld [vmem:[%s2028 + $0xb4] sm:$0xf]
        %v2075 = vld [vmem:[%s2028 + $0xb8] sm:$0xf]
        %v2076 = vld [vmem:[%s2028 + $0xbc] sm:$0xf]
        %v2125 = vunpack.c.l.b16 %v2029
        %v2126 = vunpack.c.l.b16 %v2030
        %v2127 = vunpack.c.l.b16 %v2031
        %v2128 = vunpack.c.l.b16 %v2032
        %v2129 = vunpack.c.l.b16 %v2033
        %v2130 = vunpack.c.l.b16 %v2034
        %v2131 = vunpack.c.l.b16 %v2035
        %v2132 = vunpack.c.l.b16 %v2036
        %v2133 = vunpack.c.l.b16 %v2037
        %v2134 = vunpack.c.l.b16 %v2038
        %v2135 = vunpack.c.l.b16 %v2039
        %v2136 = vunpack.c.l.b16 %v2040
        %v2137 = vunpack.c.l.b16 %v2041
        %v2138 = vunpack.c.l.b16 %v2042
        %v2139 = vunpack.c.l.b16 %v2043
        %v2140 = vunpack.c.l.b16 %v2044
        %v2141 = vunpack.c.l.b16 %v2045
        %v2142 = vunpack.c.l.b16 %v2046
        %v2143 = vunpack.c.l.b16 %v2047
        %v2144 = vunpack.c.l.b16 %v2048
        %v2145 = vunpack.c.l.b16 %v2049
        %v2146 = vunpack.c.l.b16 %v2050
        %v2147 = vunpack.c.l.b16 %v2051
        %v2148 = vunpack.c.l.b16 %v2052
        %v2149 = vunpack.c.l.b16 %v2053
        %v2150 = vunpack.c.l.b16 %v2054
        %v2151 = vunpack.c.l.b16 %v2055
        %v2152 = vunpack.c.l.b16 %v2056
        %v2153 = vunpack.c.l.b16 %v2057
        %v2154 = vunpack.c.l.b16 %v2058
        %v2155 = vunpack.c.l.b16 %v2059
        %v2156 = vunpack.c.l.b16 %v2060
        %v2157 = vunpack.c.l.b16 %v2061
        %v2158 = vunpack.c.l.b16 %v2062
        %v2159 = vunpack.c.l.b16 %v2063
        %v2160 = vunpack.c.l.b16 %v2064
        %v2161 = vunpack.c.l.b16 %v2065
        %v2162 = vunpack.c.l.b16 %v2066
        %v2163 = vunpack.c.l.b16 %v2067
        %v2164 = vunpack.c.l.b16 %v2068
        %v2165 = vunpack.c.l.b16 %v2069
        %v2166 = vunpack.c.l.b16 %v2070
        %v2167 = vunpack.c.l.b16 %v2071
        %v2168 = vunpack.c.l.b16 %v2072
        %v2169 = vunpack.c.l.b16 %v2073
        %v2170 = vunpack.c.l.b16 %v2074
        %v2171 = vunpack.c.l.b16 %v2075
        %v2172 = vunpack.c.l.b16 %v2076
        %v2173 = vpack.c.b16 %v2126, %v2125
        %v2174 = vpack.c.b16 %v2128, %v2127
        %v2175 = vpack.c.b16 %v2130, %v2129
        %v2176 = vpack.c.b16 %v2132, %v2131
        %v2177 = vpack.c.b16 %v2134, %v2133
        %v2178 = vpack.c.b16 %v2136, %v2135
        %v2179 = vpack.c.b16 %v2138, %v2137
        %v2180 = vpack.c.b16 %v2140, %v2139
        %v2181 = vpack.c.b16 %v2142, %v2141
        %v2182 = vpack.c.b16 %v2144, %v2143
        %v2183 = vpack.c.b16 %v2146, %v2145
        %v2184 = vpack.c.b16 %v2148, %v2147
        %v2185 = vpack.c.b16 %v2150, %v2149
        %v2186 = vpack.c.b16 %v2152, %v2151
        %v2187 = vpack.c.b16 %v2154, %v2153
        %v2188 = vpack.c.b16 %v2156, %v2155
        %v2189 = vpack.c.b16 %v2158, %v2157
        %v2190 = vpack.c.b16 %v2160, %v2159
        %v2191 = vpack.c.b16 %v2162, %v2161
        %v2192 = vpack.c.b16 %v2164, %v2163
        %v2193 = vpack.c.b16 %v2166, %v2165
        %v2194 = vpack.c.b16 %v2168, %v2167
        %v2195 = vpack.c.b16 %v2170, %v2169
        %v2196 = vpack.c.b16 %v2172, %v2171
        %2221 = vmatprep.subr.bf16.mxu0 0
        %2222 = vmatpush1.bf16.msra.mxu0 %v2173
        %2223 = vmatprep.subr.bf16.mxu0 0
        %2224 = vmatpush1.bf16.msra.mxu0 %v2174
        %2225 = vmatprep.subr.bf16.mxu0 0
        %2226 = vmatpush1.bf16.msra.mxu0 %v2175
        %2227 = vmatprep.subr.bf16.mxu0 0
        %2228 = vmatpush1.bf16.msra.mxu0 %v2176
        %2229 = vmatprep.subr.bf16.mxu0 0
        %2230 = vmatpush1.bf16.msra.mxu0 %v2177
        %2231 = vmatprep.subr.bf16.mxu0 0
        %2232 = vmatpush1.bf16.msra.mxu0 %v2178
        %2233 = vmatprep.subr.bf16.mxu0 0
        %2234 = vmatpush1.bf16.msra.mxu0 %v2179
        %2235 = vmatprep.subr.bf16.mxu0 0
        %2236 = vmatpush1.bf16.msra.mxu0 %v2180
        %2237 = vmatprep.subr.bf16.mxu0 0
        %2238 = vmatpush1.bf16.msra.mxu0 %v2181
        %2239 = vmatprep.subr.bf16.mxu0 0
        %2240 = vmatpush1.bf16.msra.mxu0 %v2182
        %2241 = vmatprep.subr.bf16.mxu0 0
        %2242 = vmatpush1.bf16.msra.mxu0 %v2183
        %2243 = vmatprep.subr.bf16.mxu0 0
        %2244 = vmatpush1.bf16.msra.mxu0 %v2184
        %2245 = vmatprep.subr.bf16.mxu0 0
        %2246 = vmatpush1.bf16.msra.mxu0 %v2185
        %2247 = vmatprep.subr.bf16.mxu0 0
        %2248 = vmatpush1.bf16.msra.mxu0 %v2186
        %2249 = vmatprep.subr.bf16.mxu0 0
        %2250 = vmatpush1.bf16.msra.mxu0 %v2187
        %2251 = vmatprep.subr.bf16.mxu0 0
        %2252 = vmatpush1.bf16.msra.mxu0 %v2188
        %2253 = vmatprep.mubr.bf16.mxu0 %v1981
        %2254 = vmatmul.mubr.bf16.gmra.mrb[0].mxu0 %v1980
        %v2255 = vpop.f32.mrb[0].mxu0
        %v2256 = vadd.f32 0.0, %v2255
        %v2257 = vpop.f32.mrb[0].mxu0
        %v2258 = vpop.f32.mrb[0].mxu0
        %v2259 = vadd.f32 0.0, %v2258
        %v2260 = vpop.f32.mrb[0].mxu0
        %2261 = vmatprep.mubr.bf16.mxu0 %v1984
        %2262 = vmatmul.mubr.bf16.gmra.mrb[0].mxu0 %v1983
        %v2263 = vpop.f32.mrb[0].mxu0
        %v2264 = vadd.f32 0.0, %v2263
        %v2265 = vpop.f32.mrb[0].mxu0
        %v2266 = vpop.f32.mrb[0].mxu0
        %v2267 = vadd.f32 0.0, %v2266
        %v2268 = vpop.f32.mrb[0].mxu0
        %2269 = vmatprep.mubr.bf16.mxu0 %v1987
        %2270 = vmatmul.mubr.bf16.gmra.mrb[0].mxu0 %v1986
        %v2271 = vpop.f32.mrb[0].mxu0
        %v2272 = vadd.f32 0.0, %v2271
        %v2273 = vpop.f32.mrb[0].mxu0
        %v2274 = vpop.f32.mrb[0].mxu0
        %v2275 = vadd.f32 0.0, %v2274
        %v2276 = vpop.f32.mrb[0].mxu0
        %2277 = vmatprep.mubr.bf16.mxu0 %v1990
        %2278 = vmatmul.mubr.bf16.gmra.mrb[0].mxu0 %v1989
        %v2279 = vpop.f32.mrb[0].mxu0
        %v2280 = vadd.f32 0.0, %v2279
        %v2281 = vpop.f32.mrb[0].mxu0
        %v2282 = vpop.f32.mrb[0].mxu0
        %v2283 = vadd.f32 0.0, %v2282
        %v2284 = vpop.f32.mrb[0].mxu0
        %2285 = vmatprep.mubr.bf16.mxu0 %v1993
        %2286 = vmatmul.mubr.bf16.gmra.mrb[0].mxu0 %v1992
        %v2287 = vpop.f32.mrb[0].mxu0
        %v2288 = vadd.f32 0.0, %v2287
        %v2289 = vpop.f32.mrb[0].mxu0
        %v2290 = vpop.f32.mrb[0].mxu0
        %v2291 = vadd.f32 0.0, %v2290
        %v2292 = vpop.f32.mrb[0].mxu0
        %2293 = vmatprep.mubr.bf16.mxu0 %v1996
        %2294 = vmatmul.mubr.bf16.gmra.mrb[0].mxu0 %v1995
        %v2295 = vpop.f32.mrb[0].mxu0
        %v2296 = vadd.f32 0.0, %v2295
        %v2297 = vpop.f32.mrb[0].mxu0
        %v2298 = vpop.f32.mrb[0].mxu0
        %v2299 = vadd.f32 0.0, %v2298
        %v2300 = vpop.f32.mrb[0].mxu0
        %2301 = vmatprep.mubr.bf16.mxu0 %v1999
        %2302 = vmatmul.mubr.bf16.gmra.mrb[0].mxu0 %v1998
        %v2303 = vpop.f32.mrb[0].mxu0
        %v2304 = vadd.f32 0.0, %v2303
        %v2305 = vpop.f32.mrb[0].mxu0
        %v2306 = vpop.f32.mrb[0].mxu0
        %v2307 = vadd.f32 0.0, %v2306
        %v2308 = vpop.f32.mrb[0].mxu0
        %2309 = vmatprep.mubr.bf16.mxu0 %v2002
        %2310 = vmatmul.mubr.bf16.gmra.mrb[0].mxu0 %v2001
        %v2311 = vpop.f32.mrb[0].mxu0
        %v2312 = vadd.f32 0.0, %v2311
        %v2313 = vpop.f32.mrb[0].mxu0
        %v2314 = vpop.f32.mrb[0].mxu0
        %v2315 = vadd.f32 0.0, %v2314
        %v2316 = vpop.f32.mrb[0].mxu0
        %2317 = vmatprep.mubr.bf16.mxu0 %v2005
        %2318 = vmatmul.mubr.bf16.gmra.mrb[0].mxu0 %v2004
        %v2319 = vpop.f32.mrb[0].mxu0
        %v2320 = vadd.f32 0.0, %v2319
        %v2321 = vpop.f32.mrb[0].mxu0
        %v2322 = vpop.f32.mrb[0].mxu0
        %v2323 = vadd.f32 0.0, %v2322
        %v2324 = vpop.f32.mrb[0].mxu0
        %2325 = vmatprep.mubr.bf16.mxu0 %v2008
        %2326 = vmatmul.mubr.bf16.gmra.mrb[0].mxu0 %v2007
        %v2327 = vpop.f32.mrb[0].mxu0
        %v2328 = vadd.f32 0.0, %v2327
        %v2329 = vpop.f32.mrb[0].mxu0
        %v2330 = vpop.f32.mrb[0].mxu0
        %v2331 = vadd.f32 0.0, %v2330
        %v2332 = vpop.f32.mrb[0].mxu0
        %2333 = vmatprep.mubr.bf16.mxu0 %v2011
        %2334 = vmatmul.mubr.bf16.gmra.mrb[0].mxu0 %v2010
        %v2335 = vpop.f32.mrb[0].mxu0
        %v2336 = vadd.f32 0.0, %v2335
        %v2337 = vpop.f32.mrb[0].mxu0
        %v2338 = vpop.f32.mrb[0].mxu0
        %v2339 = vadd.f32 0.0, %v2338
        %v2340 = vpop.f32.mrb[0].mxu0
        %2341 = vmatprep.mubr.bf16.mxu0 %v2014
        %2342 = vmatmul.mubr.bf16.gmra.mrb[0].mxu0 %v2013
        %v2343 = vpop.f32.mrb[0].mxu0
        %v2344 = vadd.f32 0.0, %v2343
        %v2345 = vpop.f32.mrb[0].mxu0
        %v2346 = vpop.f32.mrb[0].mxu0
        %v2347 = vadd.f32 0.0, %v2346
        %v2348 = vpop.f32.mrb[0].mxu0
        %2349 = vmatprep.mubr.bf16.mxu0 %v2017
        %2350 = vmatmul.mubr.bf16.gmra.mrb[0].mxu0 %v2016
        %v2351 = vpop.f32.mrb[0].mxu0
        %v2352 = vadd.f32 0.0, %v2351
        %v2353 = vpop.f32.mrb[0].mxu0
        %v2354 = vpop.f32.mrb[0].mxu0
        %v2355 = vadd.f32 0.0, %v2354
        %v2356 = vpop.f32.mrb[0].mxu0
        %2357 = vmatprep.mubr.bf16.mxu0 %v2020
        %2358 = vmatmul.mubr.bf16.gmra.mrb[0].mxu0 %v2019
        %v2359 = vpop.f32.mrb[0].mxu0
        %v2360 = vadd.f32 0.0, %v2359
        %v2361 = vpop.f32.mrb[0].mxu0
        %v2362 = vpop.f32.mrb[0].mxu0
        %v2363 = vadd.f32 0.0, %v2362
        %v2364 = vpop.f32.mrb[0].mxu0
        %2365 = vmatprep.mubr.bf16.mxu0 %v2023
        %2366 = vmatmul.mubr.bf16.gmra.mrb[0].mxu0 %v2022
        %v2367 = vpop.f32.mrb[0].mxu0
        %v2368 = vadd.f32 0.0, %v2367
        %v2369 = vpop.f32.mrb[0].mxu0
        %v2370 = vpop.f32.mrb[0].mxu0
        %v2371 = vadd.f32 0.0, %v2370
        %v2372 = vpop.f32.mrb[0].mxu0
        %2373 = vmatprep.mubr.bf16.mxu0 %v2026
        %2374 = vmatmul.mubr.bf16.gmra.mrb[0].mxu0 %v2025
        %v2375 = vpop.f32.mrb[0].mxu0
        %v2376 = vadd.f32 0.0, %v2375
        %v2377 = vpop.f32.mrb[0].mxu0
        %v2378 = vpop.f32.mrb[0].mxu0
        %v2379 = vadd.f32 0.0, %v2378
        %v2380 = vpop.f32.mrb[0].mxu0
        %2381 = vdwg.mxu0
        %2382 = vmatprep.subr.bf16.mxu0 0
        %2383 = vmatpush1.bf16.msra.mxu0 %v2189
        %2384 = vmatprep.subr.bf16.mxu0 0
        %2385 = vmatpush1.bf16.msra.mxu0 %v2190
        %2386 = vmatprep.subr.bf16.mxu0 0
        %2387 = vmatpush1.bf16.msra.mxu0 %v2191
        %2388 = vmatprep.subr.bf16.mxu0 0
        %2389 = vmatpush1.bf16.msra.mxu0 %v2192
        %2390 = vmatprep.subr.bf16.mxu0 0
        %2391 = vmatpush1.bf16.msra.mxu0 %v2193
        %2392 = vmatprep.subr.bf16.mxu0 0
        %2393 = vmatpush1.bf16.msra.mxu0 %v2194
        %2394 = vmatprep.subr.bf16.mxu0 0
        %2395 = vmatpush1.bf16.msra.mxu0 %v2195
        %2396 = vmatprep.subr.bf16.mxu0 0
        %2397 = vmatpush1.bf16.msra.mxu0 %v2196
        %2398 = vmatprep.subr.bf16.mxu0 0
        %2399 = vmatpush1.bf16.msra.mxu0 0
        %2400 = vmatprep.subr.bf16.mxu0 0
        %2401 = vmatpush1.bf16.msra.mxu0 0
        %2402 = vmatprep.subr.bf16.mxu0 0
        %2403 = vmatpush1.bf16.msra.mxu0 0
        %2404 = vmatprep.subr.bf16.mxu0 0
        %2405 = vmatpush1.bf16.msra.mxu0 0
        %2406 = vmatprep.subr.bf16.mxu0 0
        %2407 = vmatpush1.bf16.msra.mxu0 0
        %2408 = vmatprep.subr.bf16.mxu0 0
        %2409 = vmatpush1.bf16.msra.mxu0 0
        %2410 = vmatprep.subr.bf16.mxu0 0
        %2411 = vmatpush1.bf16.msra.mxu0 0
        %2412 = vmatprep.subr.bf16.mxu0 0
        %2413 = vmatpush1.bf16.msra.mxu0 0
        %2414 = vmatprep.mubr.bf16.mxu0 0
        %2415 = vmatmul.mubr.bf16.gmra.mrb[0].mxu0 %v1982
        %v2416 = vpop.f32.mrb[0].mxu0
        %v2417 = vadd.f32 %v2256, %v2416
        %v2418 = vpop.f32.mrb[0].mxu0
        %v2419 = vpop.f32.mrb[0].mxu0
        %v2420 = vadd.f32 %v2259, %v2419
        %v2421 = vpop.f32.mrb[0].mxu0
        %2422 = vmatprep.mubr.bf16.mxu0 0
        %2423 = vmatmul.mubr.bf16.gmra.mrb[0].mxu0 %v1985
        %v2424 = vpop.f32.mrb[0].mxu0
        %v2425 = vadd.f32 %v2264, %v2424
        %v2426 = vpop.f32.mrb[0].mxu0
        %v2427 = vpop.f32.mrb[0].mxu0
        %v2428 = vadd.f32 %v2267, %v2427
        %v2429 = vpop.f32.mrb[0].mxu0
        %2430 = vmatprep.mubr.bf16.mxu0 0
        %2431 = vmatmul.mubr.bf16.gmra.mrb[0].mxu0 %v1988
        %v2432 = vpop.f32.mrb[0].mxu0
        %v2433 = vadd.f32 %v2272, %v2432
        %v2434 = vpop.f32.mrb[0].mxu0
        %v2435 = vpop.f32.mrb[0].mxu0
        %v2436 = vadd.f32 %v2275, %v2435
        %v2437 = vpop.f32.mrb[0].mxu0
        %2438 = vmatprep.mubr.bf16.mxu0 0
        %2439 = vmatmul.mubr.bf16.gmra.mrb[0].mxu0 %v1991
        %v2440 = vpop.f32.mrb[0].mxu0
        %v2441 = vadd.f32 %v2280, %v2440
        %v2442 = vpop.f32.mrb[0].mxu0
        %v2443 = vpop.f32.mrb[0].mxu0
        %v2444 = vadd.f32 %v2283, %v2443
        %v2445 = vpop.f32.mrb[0].mxu0
        %2446 = vmatprep.mubr.bf16.mxu0 0
        %2447 = vmatmul.mubr.bf16.gmra.mrb[0].mxu0 %v1994
        %v2448 = vpop.f32.mrb[0].mxu0
        %v2449 = vadd.f32 %v2288, %v2448
        %v2450 = vpop.f32.mrb[0].mxu0
        %v2451 = vpop.f32.mrb[0].mxu0
        %v2452 = vadd.f32 %v2291, %v2451
        %v2453 = vpop.f32.mrb[0].mxu0
        %2454 = vmatprep.mubr.bf16.mxu0 0
        %2455 = vmatmul.mubr.bf16.gmra.mrb[0].mxu0 %v1997
        %v2456 = vpop.f32.mrb[0].mxu0
        %v2457 = vadd.f32 %v2296, %v2456
        %v2458 = vpop.f32.mrb[0].mxu0
        %v2459 = vpop.f32.mrb[0].mxu0
        %v2460 = vadd.f32 %v2299, %v2459
        %v2461 = vpop.f32.mrb[0].mxu0
        %2462 = vmatprep.mubr.bf16.mxu0 0
        %2463 = vmatmul.mubr.bf16.gmra.mrb[0].mxu0 %v2000
        %v2464 = vpop.f32.mrb[0].mxu0
        %v2465 = vadd.f32 %v2304, %v2464
        %v2466 = vpop.f32.mrb[0].mxu0
        %v2467 = vpop.f32.mrb[0].mxu0
        %v2468 = vadd.f32 %v2307, %v2467
        %v2469 = vpop.f32.mrb[0].mxu0
        %2470 = vmatprep.mubr.bf16.mxu0 0
        %2471 = vmatmul.mubr.bf16.gmra.mrb[0].mxu0 %v2003
        %v2472 = vpop.f32.mrb[0].mxu0
        %v2473 = vadd.f32 %v2312, %v2472
        %v2474 = vpop.f32.mrb[0].mxu0
        %v2475 = vpop.f32.mrb[0].mxu0
        %v2476 = vadd.f32 %v2315, %v2475
        %v2477 = vpop.f32.mrb[0].mxu0
        %2478 = vmatprep.mubr.bf16.mxu0 0
        %2479 = vmatmul.mubr.bf16.gmra.mrb[0].mxu0 %v2006
        %v2480 = vpop.f32.mrb[0].mxu0
        %v2481 = vadd.f32 %v2320, %v2480
        %v2482 = vpop.f32.mrb[0].mxu0
        %v2483 = vpop.f32.mrb[0].mxu0
        %v2484 = vadd.f32 %v2323, %v2483
        %v2485 = vpop.f32.mrb[0].mxu0
        %2486 = vmatprep.mubr.bf16.mxu0 0
        %2487 = vmatmul.mubr.bf16.gmra.mrb[0].mxu0 %v2009
        %v2488 = vpop.f32.mrb[0].mxu0
        %v2489 = vadd.f32 %v2328, %v2488
        %v2490 = vpop.f32.mrb[0].mxu0
        %v2491 = vpop.f32.mrb[0].mxu0
        %v2492 = vadd.f32 %v2331, %v2491
        %v2493 = vpop.f32.mrb[0].mxu0
        %2494 = vmatprep.mubr.bf16.mxu0 0
        %2495 = vmatmul.mubr.bf16.gmra.mrb[0].mxu0 %v2012
        %v2496 = vpop.f32.mrb[0].mxu0
        %v2497 = vadd.f32 %v2336, %v2496
        %v2498 = vpop.f32.mrb[0].mxu0
        %v2499 = vpop.f32.mrb[0].mxu0
        %v2500 = vadd.f32 %v2339, %v2499
        %v2501 = vpop.f32.mrb[0].mxu0
        %2502 = vmatprep.mubr.bf16.mxu0 0
        %2503 = vmatmul.mubr.bf16.gmra.mrb[0].mxu0 %v2015
        %v2504 = vpop.f32.mrb[0].mxu0
        %v2505 = vadd.f32 %v2344, %v2504
        %v2506 = vpop.f32.mrb[0].mxu0
        %v2507 = vpop.f32.mrb[0].mxu0
        %v2508 = vadd.f32 %v2347, %v2507
        %v2509 = vpop.f32.mrb[0].mxu0
        %2510 = vmatprep.mubr.bf16.mxu0 0
        %2511 = vmatmul.mubr.bf16.gmra.mrb[0].mxu0 %v2018
        %v2512 = vpop.f32.mrb[0].mxu0
        %v2513 = vadd.f32 %v2352, %v2512
        %v2514 = vpop.f32.mrb[0].mxu0
        %v2515 = vpop.f32.mrb[0].mxu0
        %v2516 = vadd.f32 %v2355, %v2515
        %v2517 = vpop.f32.mrb[0].mxu0
        %2518 = vmatprep.mubr.bf16.mxu0 0
        %2519 = vmatmul.mubr.bf16.gmra.mrb[0].mxu0 %v2021
        %v2520 = vpop.f32.mrb[0].mxu0
        %v2521 = vadd.f32 %v2360, %v2520
        %v2522 = vpop.f32.mrb[0].mxu0
        %v2523 = vpop.f32.mrb[0].mxu0
        %v2524 = vadd.f32 %v2363, %v2523
        %v2525 = vpop.f32.mrb[0].mxu0
        %2526 = vmatprep.mubr.bf16.mxu0 0
        %2527 = vmatmul.mubr.bf16.gmra.mrb[0].mxu0 %v2024
        %v2528 = vpop.f32.mrb[0].mxu0
        %v2529 = vadd.f32 %v2368, %v2528
        %v2530 = vpop.f32.mrb[0].mxu0
        %v2531 = vpop.f32.mrb[0].mxu0
        %v2532 = vadd.f32 %v2371, %v2531
        %v2533 = vpop.f32.mrb[0].mxu0
        %2534 = vmatprep.mubr.bf16.mxu0 0
        %2535 = vmatmul.mubr.bf16.gmra.mrb[0].mxu0 %v2027
        %v2536 = vpop.f32.mrb[0].mxu0
        %v2537 = vadd.f32 %v2376, %v2536
        %v2538 = vpop.f32.mrb[0].mxu0
        %v2539 = vpop.f32.mrb[0].mxu0
        %v2540 = vadd.f32 %v2379, %v2539
        %v2541 = vpop.f32.mrb[0].mxu0
        %2542 = vdwg.mxu0
        %v2543 = vld [vmem:[#allocation3] sm:$0xff]
        %v2544 = vld [vmem:[#allocation3 + $0x8] sm:$0xff]
        %v2545 = vld [vmem:[#allocation3 + $0x10] sm:$0xff]
        %v2546 = vld [vmem:[#allocation3 + $0x18] sm:$0xff]
        %v2547 = vld [vmem:[#allocation3 + $0x20] sm:$0xff]
        %v2548 = vld [vmem:[#allocation3 + $0x28] sm:$0xff]
        %v2549 = vld [vmem:[#allocation3 + $0x30] sm:$0xff]
        %v2550 = vld [vmem:[#allocation3 + $0x38] sm:$0xff]
        %v2551 = vld [vmem:[#allocation3 + $0x40] sm:$0xff]
        %v2552 = vld [vmem:[#allocation3 + $0x48] sm:$0xff]
        %v2553 = vld [vmem:[#allocation3 + $0x50] sm:$0xff]
        %v2554 = vld [vmem:[#allocation3 + $0x58] sm:$0xff]
        %v2555 = vld [vmem:[#allocation3 + $0x60] sm:$0xff]
        %v2556 = vld [vmem:[#allocation3 + $0x68] sm:$0xff]
        %v2557 = vld [vmem:[#allocation3 + $0x70] sm:$0xff]
        %v2558 = vld [vmem:[#allocation3 + $0x78] sm:$0xff]
        %v2559 = vld [vmem:[#allocation3 + $0x80] sm:$0xff]
        %v2560 = vld [vmem:[#allocation3 + $0x88] sm:$0xff]
        %v2561 = vld [vmem:[#allocation3 + $0x90] sm:$0xff]
        %v2562 = vld [vmem:[#allocation3 + $0x98] sm:$0xff]
        %v2563 = vld [vmem:[#allocation3 + $0xa0] sm:$0xff]
        %v2564 = vld [vmem:[#allocation3 + $0xa8] sm:$0xff]
        %v2565 = vld [vmem:[#allocation3 + $0xb0] sm:$0xff]
        %v2566 = vld [vmem:[#allocation3 + $0xb8] sm:$0xff]
        %v2567 = vld [vmem:[#allocation3 + $0xc0] sm:$0xff]
        %v2568 = vld [vmem:[#allocation3 + $0xc8] sm:$0xff]
        %v2569 = vld [vmem:[#allocation3 + $0xd0] sm:$0xff]
        %v2570 = vld [vmem:[#allocation3 + $0xd8] sm:$0xff]
        %v2571 = vld [vmem:[#allocation3 + $0xe0] sm:$0xff]
        %v2572 = vld [vmem:[#allocation3 + $0xe8] sm:$0xff]
        %v2573 = vld [vmem:[#allocation3 + $0xf0] sm:$0xff]
        %v2574 = vld [vmem:[#allocation3 + $0xf8] sm:$0xff]
        %v2575 = vadd.f32 %v2543, %v2417
        %v2576 = vadd.f32 %v2544, %v2420
        %v2577 = vadd.f32 %v2545, %v2425
        %v2578 = vadd.f32 %v2546, %v2428
        %v2579 = vadd.f32 %v2547, %v2433
        %v2580 = vadd.f32 %v2548, %v2436
        %v2581 = vadd.f32 %v2549, %v2441
        %v2582 = vadd.f32 %v2550, %v2444
        %v2583 = vadd.f32 %v2551, %v2449
        %v2584 = vadd.f32 %v2552, %v2452
        %v2585 = vadd.f32 %v2553, %v2457
        %v2586 = vadd.f32 %v2554, %v2460
        %v2587 = vadd.f32 %v2555, %v2465
        %v2588 = vadd.f32 %v2556, %v2468
        %v2589 = vadd.f32 %v2557, %v2473
        %v2590 = vadd.f32 %v2558, %v2476
        %v2591 = vadd.f32 %v2559, %v2481
        %v2592 = vadd.f32 %v2560, %v2484
        %v2593 = vadd.f32 %v2561, %v2489
        %v2594 = vadd.f32 %v2562, %v2492
        %v2595 = vadd.f32 %v2563, %v2497
        %v2596 = vadd.f32 %v2564, %v2500
        %v2597 = vadd.f32 %v2565, %v2505
        %v2598 = vadd.f32 %v2566, %v2508
        %v2599 = vadd.f32 %v2567, %v2513
        %v2600 = vadd.f32 %v2568, %v2516
        %v2601 = vadd.f32 %v2569, %v2521
        %v2602 = vadd.f32 %v2570, %v2524
        %v2603 = vadd.f32 %v2571, %v2529
        %v2604 = vadd.f32 %v2572, %v2532
        %v2605 = vadd.f32 %v2573, %v2537
        %v2606 = vadd.f32 %v2574, %v2540
        %2607 = vst [vmem:[#allocation3] sm:$0xff] %v2575
        %2608 = vst [vmem:[#allocation3 + $0x8] sm:$0xff] %v2576
        %2609 = vst [vmem:[#allocation3 + $0x10] sm:$0xff] %v2577
        %2610 = vst [vmem:[#allocation3 + $0x18] sm:$0xff] %v2578
        %2611 = vst [vmem:[#allocation3 + $0x20] sm:$0xff] %v2579
        %2612 = vst [vmem:[#allocation3 + $0x28] sm:$0xff] %v2580
        %2613 = vst [vmem:[#allocation3 + $0x30] sm:$0xff] %v2581
        %2614 = vst [vmem:[#allocation3 + $0x38] sm:$0xff] %v2582
        %2615 = vst [vmem:[#allocation3 + $0x40] sm:$0xff] %v2583
        %2616 = vst [vmem:[#allocation3 + $0x48] sm:$0xff] %v2584
        %2617 = vst [vmem:[#allocation3 + $0x50] sm:$0xff] %v2585
        %2618 = vst [vmem:[#allocation3 + $0x58] sm:$0xff] %v2586
        %2619 = vst [vmem:[#allocation3 + $0x60] sm:$0xff] %v2587
        %2620 = vst [vmem:[#allocation3 + $0x68] sm:$0xff] %v2588
        %2621 = vst [vmem:[#allocation3 + $0x70] sm:$0xff] %v2589
        %2622 = vst [vmem:[#allocation3 + $0x78] sm:$0xff] %v2590
        %2623 = vst [vmem:[#allocation3 + $0x80] sm:$0xff] %v2591
        %2624 = vst [vmem:[#allocation3 + $0x88] sm:$0xff] %v2592
        %2625 = vst [vmem:[#allocation3 + $0x90] sm:$0xff] %v2593
        %2626 = vst [vmem:[#allocation3 + $0x98] sm:$0xff] %v2594
        %2627 = vst [vmem:[#allocation3 + $0xa0] sm:$0xff] %v2595
        %2628 = vst [vmem:[#allocation3 + $0xa8] sm:$0xff] %v2596
        %2629 = vst [vmem:[#allocation3 + $0xb0] sm:$0xff] %v2597
        %2630 = vst [vmem:[#allocation3 + $0xb8] sm:$0xff] %v2598
        %2631 = vst [vmem:[#allocation3 + $0xc0] sm:$0xff] %v2599
        %2632 = vst [vmem:[#allocation3 + $0xc8] sm:$0xff] %v2600
        %2633 = vst [vmem:[#allocation3 + $0xd0] sm:$0xff] %v2601
        %2634 = vst [vmem:[#allocation3 + $0xd8] sm:$0xff] %v2602
        %2635 = vst [vmem:[#allocation3 + $0xe0] sm:$0xff] %v2603
        %2636 = vst [vmem:[#allocation3 + $0xe8] sm:$0xff] %v2604
        %2637 = vst [vmem:[#allocation3 + $0xf0] sm:$0xff] %v2605
        %2638 = vst [vmem:[#allocation3 + $0xf8] sm:$0xff] %v2606
        %v2639 = vld [vmem:[#allocation3] sm:$0xff]
        %v2640 = vld [vmem:[#allocation3 + $0x8] sm:$0xff]
        %v2641 = vld [vmem:[#allocation3 + $0x10] sm:$0xff]
        %v2642 = vld [vmem:[#allocation3 + $0x18] sm:$0xff]
        %v2643 = vld [vmem:[#allocation3 + $0x20] sm:$0xff]
        %v2644 = vld [vmem:[#allocation3 + $0x28] sm:$0xff]
        %v2645 = vld [vmem:[#allocation3 + $0x30] sm:$0xff]
        %v2646 = vld [vmem:[#allocation3 + $0x38] sm:$0xff]
        %v2647 = vld [vmem:[#allocation3 + $0x40] sm:$0xff]
        %v2648 = vld [vmem:[#allocation3 + $0x48] sm:$0xff]
        %v2649 = vld [vmem:[#allocation3 + $0x50] sm:$0xff]
        %v2650 = vld [vmem:[#allocation3 + $0x58] sm:$0xff]
        %v2651 = vld [vmem:[#allocation3 + $0x60] sm:$0xff]
        %v2652 = vld [vmem:[#allocation3 + $0x68] sm:$0xff]
        %v2653 = vld [vmem:[#allocation3 + $0x70] sm:$0xff]
        %v2654 = vld [vmem:[#allocation3 + $0x78] sm:$0xff]
        %v2655 = vld [vmem:[#allocation3 + $0x80] sm:$0xff]
        %v2656 = vld [vmem:[#allocation3 + $0x88] sm:$0xff]
        %v2657 = vld [vmem:[#allocation3 + $0x90] sm:$0xff]
        %v2658 = vld [vmem:[#allocation3 + $0x98] sm:$0xff]
        %v2659 = vld [vmem:[#allocation3 + $0xa0] sm:$0xff]
        %v2660 = vld [vmem:[#allocation3 + $0xa8] sm:$0xff]
        %v2661 = vld [vmem:[#allocation3 + $0xb0] sm:$0xff]
        %v2662 = vld [vmem:[#allocation3 + $0xb8] sm:$0xff]
        %v2663 = vld [vmem:[#allocation3 + $0xc0] sm:$0xff]
        %v2664 = vld [vmem:[#allocation3 + $0xc8] sm:$0xff]
        %v2665 = vld [vmem:[#allocation3 + $0xd0] sm:$0xff]
        %v2666 = vld [vmem:[#allocation3 + $0xd8] sm:$0xff]
        %v2667 = vld [vmem:[#allocation3 + $0xe0] sm:$0xff]
        %v2668 = vld [vmem:[#allocation3 + $0xe8] sm:$0xff]
        %v2669 = vld [vmem:[#allocation3 + $0xf0] sm:$0xff]
        %v2670 = vld [vmem:[#allocation3 + $0xf8] sm:$0xff]
        %v2671 = vld [vmem:[%s2] sm:$0x1]
        %v2673 = vlaneseq
        %v2674 = vshrl.u32 %v2673, 7
        %v2675 = vsub.s32 0, %v2674
        %v2676 = vrot.slane %v2671, %v2675
        %v2678 = vadd.f32 %v2639, %v2676
        %v2679 = vadd.f32 %v2640, %v2676
        %v2680 = vadd.f32 %v2641, %v2676
        %v2681 = vadd.f32 %v2642, %v2676
        %v2682 = vadd.f32 %v2643, %v2676
        %v2683 = vadd.f32 %v2644, %v2676
        %v2684 = vadd.f32 %v2645, %v2676
        %v2685 = vadd.f32 %v2646, %v2676
        %v2686 = vadd.f32 %v2647, %v2676
        %v2687 = vadd.f32 %v2648, %v2676
        %v2688 = vadd.f32 %v2649, %v2676
        %v2689 = vadd.f32 %v2650, %v2676
        %v2690 = vadd.f32 %v2651, %v2676
        %v2691 = vadd.f32 %v2652, %v2676
        %v2692 = vadd.f32 %v2653, %v2676
        %v2693 = vadd.f32 %v2654, %v2676
        %v2694 = vadd.f32 %v2655, %v2676
        %v2695 = vadd.f32 %v2656, %v2676
        %v2696 = vadd.f32 %v2657, %v2676
        %v2697 = vadd.f32 %v2658, %v2676
        %v2698 = vadd.f32 %v2659, %v2676
        %v2699 = vadd.f32 %v2660, %v2676
        %v2700 = vadd.f32 %v2661, %v2676
        %v2701 = vadd.f32 %v2662, %v2676
        %v2702 = vadd.f32 %v2663, %v2676
        %v2703 = vadd.f32 %v2664, %v2676
        %v2704 = vadd.f32 %v2665, %v2676
        %v2705 = vadd.f32 %v2666, %v2676
        %v2706 = vadd.f32 %v2667, %v2676
        %v2707 = vadd.f32 %v2668, %v2676
        %v2708 = vadd.f32 %v2669, %v2676
        %v2709 = vadd.f32 %v2670, %v2676
        %v2710 = vmax.f32 %v2678, 0.0
        %v2711 = vmax.f32 %v2679, 0.0
        %v2712 = vmax.f32 %v2680, 0.0
        %v2713 = vmax.f32 %v2681, 0.0
        %v2714 = vmax.f32 %v2682, 0.0
        %v2715 = vmax.f32 %v2683, 0.0
        %v2716 = vmax.f32 %v2684, 0.0
        %v2717 = vmax.f32 %v2685, 0.0
        %v2718 = vmax.f32 %v2686, 0.0
        %v2719 = vmax.f32 %v2687, 0.0
        %v2720 = vmax.f32 %v2688, 0.0
        %v2721 = vmax.f32 %v2689, 0.0
        %v2722 = vmax.f32 %v2690, 0.0
        %v2723 = vmax.f32 %v2691, 0.0
        %v2724 = vmax.f32 %v2692, 0.0
        %v2725 = vmax.f32 %v2693, 0.0
        %v2726 = vmax.f32 %v2694, 0.0
        %v2727 = vmax.f32 %v2695, 0.0
        %v2728 = vmax.f32 %v2696, 0.0
        %v2729 = vmax.f32 %v2697, 0.0
        %v2730 = vmax.f32 %v2698, 0.0
        %v2731 = vmax.f32 %v2699, 0.0
        %v2732 = vmax.f32 %v2700, 0.0
        %v2733 = vmax.f32 %v2701, 0.0
        %v2734 = vmax.f32 %v2702, 0.0
        %v2735 = vmax.f32 %v2703, 0.0
        %v2736 = vmax.f32 %v2704, 0.0
        %v2737 = vmax.f32 %v2705, 0.0
        %v2738 = vmax.f32 %v2706, 0.0
        %v2739 = vmax.f32 %v2707, 0.0
        %v2740 = vmax.f32 %v2708, 0.0
        %v2741 = vmax.f32 %v2709, 0.0
        %v2742 = vpack.c.bf16 %v2711, %v2710
        %v2743 = vpack.c.bf16 %v2713, %v2712
        %v2744 = vpack.c.bf16 %v2715, %v2714
        %v2745 = vpack.c.bf16 %v2717, %v2716
        %v2746 = vpack.c.bf16 %v2719, %v2718
        %v2747 = vpack.c.bf16 %v2721, %v2720
        %v2748 = vpack.c.bf16 %v2723, %v2722
        %v2749 = vpack.c.bf16 %v2725, %v2724
        %v2750 = vpack.c.bf16 %v2727, %v2726
        %v2751 = vpack.c.bf16 %v2729, %v2728
        %v2752 = vpack.c.bf16 %v2731, %v2730
        %v2753 = vpack.c.bf16 %v2733, %v2732
        %v2754 = vpack.c.bf16 %v2735, %v2734
        %v2755 = vpack.c.bf16 %v2737, %v2736
        %v2756 = vpack.c.bf16 %v2739, %v2738
        %v2757 = vpack.c.bf16 %v2741, %v2740
        %v2759 = vshrl.u32 %v2742, 16
        %v2761 = vrot.slane %v2759, 7
        %v2762 = vshll.u32 %v2742, 16
        %v2764 = vor.u32 %v2761, %v2762
        %v2766 = vshrl.u32 %v2743, 16
        %v2768 = vrot.slane %v2766, 7
        %v2769 = vshll.u32 %v2743, 16
        %v2771 = vor.u32 %v2768, %v2769
        %v2773 = vshrl.u32 %v2744, 16
        %v2775 = vrot.slane %v2773, 7
        %v2776 = vshll.u32 %v2744, 16
        %v2778 = vor.u32 %v2775, %v2776
        %v2780 = vshrl.u32 %v2745, 16
        %v2782 = vrot.slane %v2780, 7
        %v2783 = vshll.u32 %v2745, 16
        %v2785 = vor.u32 %v2782, %v2783
        %v2787 = vshrl.u32 %v2746, 16
        %v2789 = vrot.slane %v2787, 7
        %v2790 = vshll.u32 %v2746, 16
        %v2792 = vor.u32 %v2789, %v2790
        %v2794 = vshrl.u32 %v2747, 16
        %v2796 = vrot.slane %v2794, 7
        %v2797 = vshll.u32 %v2747, 16
        %v2799 = vor.u32 %v2796, %v2797
        %v2801 = vshrl.u32 %v2748, 16
        %v2803 = vrot.slane %v2801, 7
        %v2804 = vshll.u32 %v2748, 16
        %v2806 = vor.u32 %v2803, %v2804
        %v2808 = vshrl.u32 %v2749, 16
        %v2810 = vrot.slane %v2808, 7
        %v2811 = vshll.u32 %v2749, 16
        %v2813 = vor.u32 %v2810, %v2811
        %v2815 = vshrl.u32 %v2750, 16
        %v2817 = vrot.slane %v2815, 7
        %v2818 = vshll.u32 %v2750, 16
        %v2820 = vor.u32 %v2817, %v2818
        %v2822 = vshrl.u32 %v2751, 16
        %v2824 = vrot.slane %v2822, 7
        %v2825 = vshll.u32 %v2751, 16
        %v2827 = vor.u32 %v2824, %v2825
        %v2829 = vshrl.u32 %v2752, 16
        %v2831 = vrot.slane %v2829, 7
        %v2832 = vshll.u32 %v2752, 16
        %v2834 = vor.u32 %v2831, %v2832
        %v2836 = vshrl.u32 %v2753, 16
        %v2838 = vrot.slane %v2836, 7
        %v2839 = vshll.u32 %v2753, 16
        %v2841 = vor.u32 %v2838, %v2839
        %v2843 = vshrl.u32 %v2754, 16
        %v2845 = vrot.slane %v2843, 7
        %v2846 = vshll.u32 %v2754, 16
        %v2848 = vor.u32 %v2845, %v2846
        %v2850 = vshrl.u32 %v2755, 16
        %v2852 = vrot.slane %v2850, 7
        %v2853 = vshll.u32 %v2755, 16
        %v2855 = vor.u32 %v2852, %v2853
        %v2857 = vshrl.u32 %v2756, 16
        %v2859 = vrot.slane %v2857, 7
        %v2860 = vshll.u32 %v2756, 16
        %v2862 = vor.u32 %v2859, %v2860
        %v2864 = vshrl.u32 %v2757, 16
        %v2866 = vrot.slane %v2864, 7
        %v2867 = vshll.u32 %v2757, 16
        %v2869 = vor.u32 %v2866, %v2867
        %v2886 = vld [vmem:[%s282] sm:$0xff]
        %v2887 = vsel %vm563, %v2764, %v2886
        %2888 = vst [vmem:[%s282] sm:$0xff] %v2887
        %v2889 = vld [vmem:[%s282 + $0x18] sm:$0xff]
        %v2890 = vsel %vm563, %v2771, %v2889
        %2891 = vst [vmem:[%s282 + $0x18] sm:$0xff] %v2890
        %v2892 = vld [vmem:[%s282 + $0x30] sm:$0xff]
        %v2893 = vsel %vm563, %v2778, %v2892
        %2894 = vst [vmem:[%s282 + $0x30] sm:$0xff] %v2893
        %v2895 = vld [vmem:[%s282 + $0x48] sm:$0xff]
        %v2896 = vsel %vm563, %v2785, %v2895
        %2897 = vst [vmem:[%s282 + $0x48] sm:$0xff] %v2896
        %v2898 = vld [vmem:[%s282 + $0x60] sm:$0xff]
        %v2899 = vsel %vm563, %v2792, %v2898
        %2900 = vst [vmem:[%s282 + $0x60] sm:$0xff] %v2899
        %v2901 = vld [vmem:[%s282 + $0x78] sm:$0xff]
        %v2902 = vsel %vm563, %v2799, %v2901
        %2903 = vst [vmem:[%s282 + $0x78] sm:$0xff] %v2902
        %v2904 = vld [vmem:[%s282 + $0x90] sm:$0xff]
        %v2905 = vsel %vm563, %v2806, %v2904
        %2906 = vst [vmem:[%s282 + $0x90] sm:$0xff] %v2905
        %v2907 = vld [vmem:[%s282 + $0xa8] sm:$0xff]
        %v2908 = vsel %vm563, %v2813, %v2907
        %2909 = vst [vmem:[%s282 + $0xa8] sm:$0xff] %v2908
        %v2910 = vld [vmem:[%s282 + $0xc0] sm:$0xff]
        %v2911 = vsel %vm563, %v2820, %v2910
        %2912 = vst [vmem:[%s282 + $0xc0] sm:$0xff] %v2911
        %v2913 = vld [vmem:[%s282 + $0xd8] sm:$0xff]
        %v2914 = vsel %vm563, %v2827, %v2913
        %2915 = vst [vmem:[%s282 + $0xd8] sm:$0xff] %v2914
        %v2916 = vld [vmem:[%s282 + $0xf0] sm:$0xff]
        %v2917 = vsel %vm563, %v2834, %v2916
        %2918 = vst [vmem:[%s282 + $0xf0] sm:$0xff] %v2917
        %v2919 = vld [vmem:[%s282 + $0x108] sm:$0xff]
        %v2920 = vsel %vm563, %v2841, %v2919
        %2921 = vst [vmem:[%s282 + $0x108] sm:$0xff] %v2920
        %v2922 = vld [vmem:[%s282 + $0x120] sm:$0xff]
        %v2923 = vsel %vm563, %v2848, %v2922
        %2924 = vst [vmem:[%s282 + $0x120] sm:$0xff] %v2923
        %v2925 = vld [vmem:[%s282 + $0x138] sm:$0xff]
        %v2926 = vsel %vm563, %v2855, %v2925
        %2927 = vst [vmem:[%s282 + $0x138] sm:$0xff] %v2926
        %v2928 = vld [vmem:[%s282 + $0x150] sm:$0xff]
        %v2929 = vsel %vm563, %v2862, %v2928
        %2930 = vst [vmem:[%s282 + $0x150] sm:$0xff] %v2929
        %v2931 = vld [vmem:[%s282 + $0x168] sm:$0xff]
        %v2932 = vsel %vm563, %v2869, %v2931
        %2933 = vst [vmem:[%s282 + $0x168] sm:$0xff] %v2932
        %2934 = vst [vmem:[%s282 + $0x8] sm:$0xff] %v2742
        %2935 = vst [vmem:[%s282 + $0x20] sm:$0xff] %v2743
        %2936 = vst [vmem:[%s282 + $0x38] sm:$0xff] %v2744
        %2937 = vst [vmem:[%s282 + $0x50] sm:$0xff] %v2745
        %2938 = vst [vmem:[%s282 + $0x68] sm:$0xff] %v2746
        %2939 = vst [vmem:[%s282 + $0x80] sm:$0xff] %v2747
        %2940 = vst [vmem:[%s282 + $0x98] sm:$0xff] %v2748
        %2941 = vst [vmem:[%s282 + $0xb0] sm:$0xff] %v2749
        %2942 = vst [vmem:[%s282 + $0xc8] sm:$0xff] %v2750
        %2943 = vst [vmem:[%s282 + $0xe0] sm:$0xff] %v2751
        %2944 = vst [vmem:[%s282 + $0xf8] sm:$0xff] %v2752
        %2945 = vst [vmem:[%s282 + $0x110] sm:$0xff] %v2753
        %2946 = vst [vmem:[%s282 + $0x128] sm:$0xff] %v2754
        %2947 = vst [vmem:[%s282 + $0x140] sm:$0xff] %v2755
        %2948 = vst [vmem:[%s282 + $0x158] sm:$0xff] %v2756
        %2949 = vst [vmem:[%s282 + $0x170] sm:$0xff] %v2757
        %v2950 = vrot.slane %v2762, 1
        %v2951 = vor.u32 %v2759, %v2950
        %v2952 = vrot.slane %v2769, 1
        %v2953 = vor.u32 %v2766, %v2952
        %v2954 = vrot.slane %v2776, 1
        %v2955 = vor.u32 %v2773, %v2954
        %v2956 = vrot.slane %v2783, 1
        %v2957 = vor.u32 %v2780, %v2956
        %v2958 = vrot.slane %v2790, 1
        %v2959 = vor.u32 %v2787, %v2958
        %v2960 = vrot.slane %v2797, 1
        %v2961 = vor.u32 %v2794, %v2960
        %v2962 = vrot.slane %v2804, 1
        %v2963 = vor.u32 %v2801, %v2962
        %v2964 = vrot.slane %v2811, 1
        %v2965 = vor.u32 %v2808, %v2964
        %v2966 = vrot.slane %v2818, 1
        %v2967 = vor.u32 %v2815, %v2966
        %v2968 = vrot.slane %v2825, 1
        %v2969 = vor.u32 %v2822, %v2968
        %v2970 = vrot.slane %v2832, 1
        %v2971 = vor.u32 %v2829, %v2970
        %v2972 = vrot.slane %v2839, 1
        %v2973 = vor.u32 %v2836, %v2972
        %v2974 = vrot.slane %v2846, 1
        %v2975 = vor.u32 %v2843, %v2974
        %v2976 = vrot.slane %v2853, 1
        %v2977 = vor.u32 %v2850, %v2976
        %v2978 = vrot.slane %v2860, 1
        %v2979 = vor.u32 %v2857, %v2978
        %v2980 = vrot.slane %v2867, 1
        %v2981 = vor.u32 %v2864, %v2980
        %v2998 = vld [vmem:[%s282 + $0x10] sm:$0xff]
        %v2999 = vsel %vm677, %v2951, %v2998
        %3000 = vst [vmem:[%s282 + $0x10] sm:$0xff] %v2999
        %v3001 = vld [vmem:[%s282 + $0x28] sm:$0xff]
        %v3002 = vsel %vm677, %v2953, %v3001
        %3003 = vst [vmem:[%s282 + $0x28] sm:$0xff] %v3002
        %v3004 = vld [vmem:[%s282 + $0x40] sm:$0xff]
        %v3005 = vsel %vm677, %v2955, %v3004
        %3006 = vst [vmem:[%s282 + $0x40] sm:$0xff] %v3005
        %v3007 = vld [vmem:[%s282 + $0x58] sm:$0xff]
        %v3008 = vsel %vm677, %v2957, %v3007
        %3009 = vst [vmem:[%s282 + $0x58] sm:$0xff] %v3008
        %v3010 = vld [vmem:[%s282 + $0x70] sm:$0xff]
        %v3011 = vsel %vm677, %v2959, %v3010
        %3012 = vst [vmem:[%s282 + $0x70] sm:$0xff] %v3011
        %v3013 = vld [vmem:[%s282 + $0x88] sm:$0xff]
        %v3014 = vsel %vm677, %v2961, %v3013
        %3015 = vst [vmem:[%s282 + $0x88] sm:$0xff] %v3014
        %v3016 = vld [vmem:[%s282 + $0xa0] sm:$0xff]
        %v3017 = vsel %vm677, %v2963, %v3016
        %3018 = vst [vmem:[%s282 + $0xa0] sm:$0xff] %v3017
        %v3019 = vld [vmem:[%s282 + $0xb8] sm:$0xff]
        %v3020 = vsel %vm677, %v2965, %v3019
        %3021 = vst [vmem:[%s282 + $0xb8] sm:$0xff] %v3020
        %v3022 = vld [vmem:[%s282 + $0xd0] sm:$0xff]
        %v3023 = vsel %vm677, %v2967, %v3022
        %3024 = vst [vmem:[%s282 + $0xd0] sm:$0xff] %v3023
        %v3025 = vld [vmem:[%s282 + $0xe8] sm:$0xff]
        %v3026 = vsel %vm677, %v2969, %v3025
        %3027 = vst [vmem:[%s282 + $0xe8] sm:$0xff] %v3026
        %v3028 = vld [vmem:[%s282 + $0x100] sm:$0xff]
        %v3029 = vsel %vm677, %v2971, %v3028
        %3030 = vst [vmem:[%s282 + $0x100] sm:$0xff] %v3029
        %v3031 = vld [vmem:[%s282 + $0x118] sm:$0xff]
        %v3032 = vsel %vm677, %v2973, %v3031
        %3033 = vst [vmem:[%s282 + $0x118] sm:$0xff] %v3032
        %v3034 = vld [vmem:[%s282 + $0x130] sm:$0xff]
        %v3035 = vsel %vm677, %v2975, %v3034
        %3036 = vst [vmem:[%s282 + $0x130] sm:$0xff] %v3035
        %v3037 = vld [vmem:[%s282 + $0x148] sm:$0xff]
        %v3038 = vsel %vm677, %v2977, %v3037
        %3039 = vst [vmem:[%s282 + $0x148] sm:$0xff] %v3038
        %v3040 = vld [vmem:[%s282 + $0x160] sm:$0xff]
        %v3041 = vsel %vm677, %v2979, %v3040
        %3042 = vst [vmem:[%s282 + $0x160] sm:$0xff] %v3041
        %v3043 = vld [vmem:[%s282 + $0x178] sm:$0xff]
        %v3044 = vsel %vm677, %v2981, %v3043
        %3045 = vst [vmem:[%s282 + $0x178] sm:$0xff] %v3044
        %v3046 = vld [vmem:[#allocation2] sm:$0xff]
        %v3047 = vld [vmem:[#allocation2 + $0x8] sm:$0xff]
        %v3048 = vld [vmem:[#allocation2 + $0x10] sm:$0xff]
        %v3049 = vld [vmem:[#allocation2 + $0x18] sm:$0xff]
        %v3050 = vld [vmem:[#allocation2 + $0x20] sm:$0xff]
        %v3051 = vld [vmem:[#allocation2 + $0x28] sm:$0xff]
        %v3052 = vld [vmem:[#allocation2 + $0x30] sm:$0xff]
        %v3053 = vld [vmem:[#allocation2 + $0x38] sm:$0xff]
        %v3054 = vld [vmem:[#allocation2 + $0x40] sm:$0xff]
        %v3055 = vld [vmem:[#allocation2 + $0x48] sm:$0xff]
        %v3056 = vld [vmem:[#allocation2 + $0x50] sm:$0xff]
        %v3057 = vld [vmem:[#allocation2 + $0x58] sm:$0xff]
        %v3058 = vld [vmem:[#allocation2 + $0x60] sm:$0xff]
        %v3059 = vld [vmem:[#allocation2 + $0x68] sm:$0xff]
        %v3060 = vld [vmem:[#allocation2 + $0x70] sm:$0xff]
        %v3061 = vld [vmem:[#allocation2 + $0x78] sm:$0xff]
        %v3062 = vld [vmem:[#allocation2 + $0x80] sm:$0xff]
        %v3063 = vld [vmem:[#allocation2 + $0x88] sm:$0xff]
        %v3064 = vld [vmem:[#allocation2 + $0x90] sm:$0xff]
        %v3065 = vld [vmem:[#allocation2 + $0x98] sm:$0xff]
        %v3066 = vld [vmem:[#allocation2 + $0xa0] sm:$0xff]
        %v3067 = vld [vmem:[#allocation2 + $0xa8] sm:$0xff]
        %v3068 = vld [vmem:[#allocation2 + $0xb0] sm:$0xff]
        %v3069 = vld [vmem:[#allocation2 + $0xb8] sm:$0xff]
        %v3070 = vld [vmem:[#allocation2 + $0xc0] sm:$0xff]
        %v3071 = vld [vmem:[#allocation2 + $0xc8] sm:$0xff]
        %v3072 = vld [vmem:[#allocation2 + $0xd0] sm:$0xff]
        %v3073 = vld [vmem:[#allocation2 + $0xd8] sm:$0xff]
        %v3074 = vld [vmem:[#allocation2 + $0xe0] sm:$0xff]
        %v3075 = vld [vmem:[#allocation2 + $0xe8] sm:$0xff]
        %v3076 = vld [vmem:[#allocation2 + $0xf0] sm:$0xff]
        %v3077 = vld [vmem:[#allocation2 + $0xf8] sm:$0xff]
        %v3078 = vld [vmem:[#allocation2 + $0x100] sm:$0xff]
        %v3079 = vld [vmem:[#allocation2 + $0x108] sm:$0xff]
        %v3080 = vld [vmem:[#allocation2 + $0x110] sm:$0xff]
        %v3081 = vld [vmem:[#allocation2 + $0x118] sm:$0xff]
        %v3082 = vld [vmem:[#allocation2 + $0x120] sm:$0xff]
        %v3083 = vld [vmem:[#allocation2 + $0x128] sm:$0xff]
        %v3084 = vld [vmem:[#allocation2 + $0x130] sm:$0xff]
        %v3085 = vld [vmem:[#allocation2 + $0x138] sm:$0xff]
        %v3086 = vld [vmem:[#allocation2 + $0x140] sm:$0xff]
        %v3087 = vld [vmem:[#allocation2 + $0x148] sm:$0xff]
        %v3088 = vld [vmem:[#allocation2 + $0x150] sm:$0xff]
        %v3089 = vld [vmem:[#allocation2 + $0x158] sm:$0xff]
        %v3090 = vld [vmem:[#allocation2 + $0x160] sm:$0xff]
        %v3091 = vld [vmem:[#allocation2 + $0x168] sm:$0xff]
        %v3092 = vld [vmem:[#allocation2 + $0x170] sm:$0xff]
        %v3093 = vld [vmem:[#allocation2 + $0x178] sm:$0xff]
        %v3094 = vld [vmem:[#allocation8] sm:$0xf]
        %v3095 = vld [vmem:[#allocation8 + $0x4] sm:$0xf]
        %v3096 = vld [vmem:[#allocation8 + $0x8] sm:$0xf]
        %v3097 = vld [vmem:[#allocation8 + $0xc] sm:$0xf]
        %v3098 = vld [vmem:[#allocation8 + $0x10] sm:$0xf]
        %v3099 = vld [vmem:[#allocation8 + $0x14] sm:$0xf]
        %v3100 = vld [vmem:[#allocation8 + $0x18] sm:$0xf]
        %v3101 = vld [vmem:[#allocation8 + $0x1c] sm:$0xf]
        %v3102 = vld [vmem:[#allocation8 + $0x20] sm:$0xf]
        %v3103 = vld [vmem:[#allocation8 + $0x24] sm:$0xf]
        %v3104 = vld [vmem:[#allocation8 + $0x28] sm:$0xf]
        %v3105 = vld [vmem:[#allocation8 + $0x2c] sm:$0xf]
        %v3106 = vld [vmem:[#allocation8 + $0x30] sm:$0xf]
        %v3107 = vld [vmem:[#allocation8 + $0x34] sm:$0xf]
        %v3108 = vld [vmem:[#allocation8 + $0x38] sm:$0xf]
        %v3109 = vld [vmem:[#allocation8 + $0x3c] sm:$0xf]
        %v3110 = vld [vmem:[#allocation8 + $0x40] sm:$0xf]
        %v3111 = vld [vmem:[#allocation8 + $0x44] sm:$0xf]
        %v3112 = vld [vmem:[#allocation8 + $0x48] sm:$0xf]
        %v3113 = vld [vmem:[#allocation8 + $0x4c] sm:$0xf]
        %v3114 = vld [vmem:[#allocation8 + $0x50] sm:$0xf]
        %v3115 = vld [vmem:[#allocation8 + $0x54] sm:$0xf]
        %v3116 = vld [vmem:[#allocation8 + $0x58] sm:$0xf]
        %v3117 = vld [vmem:[#allocation8 + $0x5c] sm:$0xf]
        %v3118 = vld [vmem:[#allocation8 + $0x60] sm:$0xf]
        %v3119 = vld [vmem:[#allocation8 + $0x64] sm:$0xf]
        %v3120 = vld [vmem:[#allocation8 + $0x68] sm:$0xf]
        %v3121 = vld [vmem:[#allocation8 + $0x6c] sm:$0xf]
        %v3122 = vld [vmem:[#allocation8 + $0x70] sm:$0xf]
        %v3123 = vld [vmem:[#allocation8 + $0x74] sm:$0xf]
        %v3124 = vld [vmem:[#allocation8 + $0x78] sm:$0xf]
        %v3125 = vld [vmem:[#allocation8 + $0x7c] sm:$0xf]
        %v3126 = vld [vmem:[#allocation8 + $0x80] sm:$0xf]
        %v3127 = vld [vmem:[#allocation8 + $0x84] sm:$0xf]
        %v3128 = vld [vmem:[#allocation8 + $0x88] sm:$0xf]
        %v3129 = vld [vmem:[#allocation8 + $0x8c] sm:$0xf]
        %v3130 = vld [vmem:[#allocation8 + $0x90] sm:$0xf]
        %v3131 = vld [vmem:[#allocation8 + $0x94] sm:$0xf]
        %v3132 = vld [vmem:[#allocation8 + $0x98] sm:$0xf]
        %v3133 = vld [vmem:[#allocation8 + $0x9c] sm:$0xf]
        %v3134 = vld [vmem:[#allocation8 + $0xa0] sm:$0xf]
        %v3135 = vld [vmem:[#allocation8 + $0xa4] sm:$0xf]
        %v3136 = vld [vmem:[#allocation8 + $0xa8] sm:$0xf]
        %v3137 = vld [vmem:[#allocation8 + $0xac] sm:$0xf]
        %v3138 = vld [vmem:[#allocation8 + $0xb0] sm:$0xf]
        %v3139 = vld [vmem:[#allocation8 + $0xb4] sm:$0xf]
        %v3140 = vld [vmem:[#allocation8 + $0xb8] sm:$0xf]
        %v3141 = vld [vmem:[#allocation8 + $0xbc] sm:$0xf]
        %v3190 = vunpack.c.l.b16 %v3094
        %v3191 = vunpack.c.l.b16 %v3095
        %v3192 = vunpack.c.l.b16 %v3096
        %v3193 = vunpack.c.l.b16 %v3097
        %v3194 = vunpack.c.l.b16 %v3098
        %v3195 = vunpack.c.l.b16 %v3099
        %v3196 = vunpack.c.l.b16 %v3100
        %v3197 = vunpack.c.l.b16 %v3101
        %v3198 = vunpack.c.l.b16 %v3102
        %v3199 = vunpack.c.l.b16 %v3103
        %v3200 = vunpack.c.l.b16 %v3104
        %v3201 = vunpack.c.l.b16 %v3105
        %v3202 = vunpack.c.l.b16 %v3106
        %v3203 = vunpack.c.l.b16 %v3107
        %v3204 = vunpack.c.l.b16 %v3108
        %v3205 = vunpack.c.l.b16 %v3109
        %v3206 = vunpack.c.l.b16 %v3110
        %v3207 = vunpack.c.l.b16 %v3111
        %v3208 = vunpack.c.l.b16 %v3112
        %v3209 = vunpack.c.l.b16 %v3113
        %v3210 = vunpack.c.l.b16 %v3114
        %v3211 = vunpack.c.l.b16 %v3115
        %v3212 = vunpack.c.l.b16 %v3116
        %v3213 = vunpack.c.l.b16 %v3117
        %v3214 = vunpack.c.l.b16 %v3118
        %v3215 = vunpack.c.l.b16 %v3119
        %v3216 = vunpack.c.l.b16 %v3120
        %v3217 = vunpack.c.l.b16 %v3121
        %v3218 = vunpack.c.l.b16 %v3122
        %v3219 = vunpack.c.l.b16 %v3123
        %v3220 = vunpack.c.l.b16 %v3124
        %v3221 = vunpack.c.l.b16 %v3125
        %v3222 = vunpack.c.l.b16 %v3126
        %v3223 = vunpack.c.l.b16 %v3127
        %v3224 = vunpack.c.l.b16 %v3128
        %v3225 = vunpack.c.l.b16 %v3129
        %v3226 = vunpack.c.l.b16 %v3130
        %v3227 = vunpack.c.l.b16 %v3131
        %v3228 = vunpack.c.l.b16 %v3132
        %v3229 = vunpack.c.l.b16 %v3133
        %v3230 = vunpack.c.l.b16 %v3134
        %v3231 = vunpack.c.l.b16 %v3135
        %v3232 = vunpack.c.l.b16 %v3136
        %v3233 = vunpack.c.l.b16 %v3137
        %v3234 = vunpack.c.l.b16 %v3138
        %v3235 = vunpack.c.l.b16 %v3139
        %v3236 = vunpack.c.l.b16 %v3140
        %v3237 = vunpack.c.l.b16 %v3141
        %v3238 = vpack.c.b16 %v3191, %v3190
        %v3239 = vpack.c.b16 %v3193, %v3192
        %v3240 = vpack.c.b16 %v3195, %v3194
        %v3241 = vpack.c.b16 %v3197, %v3196
        %v3242 = vpack.c.b16 %v3199, %v3198
        %v3243 = vpack.c.b16 %v3201, %v3200
        %v3244 = vpack.c.b16 %v3203, %v3202
        %v3245 = vpack.c.b16 %v3205, %v3204
        %v3246 = vpack.c.b16 %v3207, %v3206
        %v3247 = vpack.c.b16 %v3209, %v3208
        %v3248 = vpack.c.b16 %v3211, %v3210
        %v3249 = vpack.c.b16 %v3213, %v3212
        %v3250 = vpack.c.b16 %v3215, %v3214
        %v3251 = vpack.c.b16 %v3217, %v3216
        %v3252 = vpack.c.b16 %v3219, %v3218
        %v3253 = vpack.c.b16 %v3221, %v3220
        %v3254 = vpack.c.b16 %v3223, %v3222
        %v3255 = vpack.c.b16 %v3225, %v3224
        %v3256 = vpack.c.b16 %v3227, %v3226
        %v3257 = vpack.c.b16 %v3229, %v3228
        %v3258 = vpack.c.b16 %v3231, %v3230
        %v3259 = vpack.c.b16 %v3233, %v3232
        %v3260 = vpack.c.b16 %v3235, %v3234
        %v3261 = vpack.c.b16 %v3237, %v3236
        %3286 = vmatprep.subr.bf16.mxu0 0
        %3287 = vmatpush1.bf16.msra.mxu0 %v3238
        %3288 = vmatprep.subr.bf16.mxu0 0
        %3289 = vmatpush1.bf16.msra.mxu0 %v3239
        %3290 = vmatprep.subr.bf16.mxu0 0
        %3291 = vmatpush1.bf16.msra.mxu0 %v3240
        %3292 = vmatprep.subr.bf16.mxu0 0
        %3293 = vmatpush1.bf16.msra.mxu0 %v3241
        %3294 = vmatprep.subr.bf16.mxu0 0
        %3295 = vmatpush1.bf16.msra.mxu0 %v3242
        %3296 = vmatprep.subr.bf16.mxu0 0
        %3297 = vmatpush1.bf16.msra.mxu0 %v3243
        %3298 = vmatprep.subr.bf16.mxu0 0
        %3299 = vmatpush1.bf16.msra.mxu0 %v3244
        %3300 = vmatprep.subr.bf16.mxu0 0
        %3301 = vmatpush1.bf16.msra.mxu0 %v3245
        %3302 = vmatprep.subr.bf16.mxu0 0
        %3303 = vmatpush1.bf16.msra.mxu0 %v3246
        %3304 = vmatprep.subr.bf16.mxu0 0
        %3305 = vmatpush1.bf16.msra.mxu0 %v3247
        %3306 = vmatprep.subr.bf16.mxu0 0
        %3307 = vmatpush1.bf16.msra.mxu0 %v3248
        %3308 = vmatprep.subr.bf16.mxu0 0
        %3309 = vmatpush1.bf16.msra.mxu0 %v3249
        %3310 = vmatprep.subr.bf16.mxu0 0
        %3311 = vmatpush1.bf16.msra.mxu0 %v3250
        %3312 = vmatprep.subr.bf16.mxu0 0
        %3313 = vmatpush1.bf16.msra.mxu0 %v3251
        %3314 = vmatprep.subr.bf16.mxu0 0
        %3315 = vmatpush1.bf16.msra.mxu0 %v3252
        %3316 = vmatprep.subr.bf16.mxu0 0
        %3317 = vmatpush1.bf16.msra.mxu0 %v3253
        %3318 = vmatprep.mubr.bf16.mxu0 %v3047
        %3319 = vmatmul.mubr.bf16.gmra.mrb[0].mxu0 %v3046
        %v3320 = vpop.f32.mrb[0].mxu0
        %v3321 = vadd.f32 0.0, %v3320
        %v3322 = vpop.f32.mrb[0].mxu0
        %v3323 = vpop.f32.mrb[0].mxu0
        %v3324 = vadd.f32 0.0, %v3323
        %v3325 = vpop.f32.mrb[0].mxu0
        %3326 = vmatprep.mubr.bf16.mxu0 %v3050
        %3327 = vmatmul.mubr.bf16.gmra.mrb[0].mxu0 %v3049
        %v3328 = vpop.f32.mrb[0].mxu0
        %v3329 = vadd.f32 0.0, %v3328
        %v3330 = vpop.f32.mrb[0].mxu0
        %v3331 = vpop.f32.mrb[0].mxu0
        %v3332 = vadd.f32 0.0, %v3331
        %v3333 = vpop.f32.mrb[0].mxu0
        %3334 = vmatprep.mubr.bf16.mxu0 %v3053
        %3335 = vmatmul.mubr.bf16.gmra.mrb[0].mxu0 %v3052
        %v3336 = vpop.f32.mrb[0].mxu0
        %v3337 = vadd.f32 0.0, %v3336
        %v3338 = vpop.f32.mrb[0].mxu0
        %v3339 = vpop.f32.mrb[0].mxu0
        %v3340 = vadd.f32 0.0, %v3339
        %v3341 = vpop.f32.mrb[0].mxu0
        %3342 = vmatprep.mubr.bf16.mxu0 %v3056
        %3343 = vmatmul.mubr.bf16.gmra.mrb[0].mxu0 %v3055
        %v3344 = vpop.f32.mrb[0].mxu0
        %v3345 = vadd.f32 0.0, %v3344
        %v3346 = vpop.f32.mrb[0].mxu0
        %v3347 = vpop.f32.mrb[0].mxu0
        %v3348 = vadd.f32 0.0, %v3347
        %v3349 = vpop.f32.mrb[0].mxu0
        %3350 = vmatprep.mubr.bf16.mxu0 %v3059
        %3351 = vmatmul.mubr.bf16.gmra.mrb[0].mxu0 %v3058
        %v3352 = vpop.f32.mrb[0].mxu0
        %v3353 = vadd.f32 0.0, %v3352
        %v3354 = vpop.f32.mrb[0].mxu0
        %v3355 = vpop.f32.mrb[0].mxu0
        %v3356 = vadd.f32 0.0, %v3355
        %v3357 = vpop.f32.mrb[0].mxu0
        %3358 = vmatprep.mubr.bf16.mxu0 %v3062
        %3359 = vmatmul.mubr.bf16.gmra.mrb[0].mxu0 %v3061
        %v3360 = vpop.f32.mrb[0].mxu0
        %v3361 = vadd.f32 0.0, %v3360
        %v3362 = vpop.f32.mrb[0].mxu0
        %v3363 = vpop.f32.mrb[0].mxu0
        %v3364 = vadd.f32 0.0, %v3363
        %v3365 = vpop.f32.mrb[0].mxu0
        %3366 = vmatprep.mubr.bf16.mxu0 %v3065
        %3367 = vmatmul.mubr.bf16.gmra.mrb[0].mxu0 %v3064
        %v3368 = vpop.f32.mrb[0].mxu0
        %v3369 = vadd.f32 0.0, %v3368
        %v3370 = vpop.f32.mrb[0].mxu0
        %v3371 = vpop.f32.mrb[0].mxu0
        %v3372 = vadd.f32 0.0, %v3371
        %v3373 = vpop.f32.mrb[0].mxu0
        %3374 = vmatprep.mubr.bf16.mxu0 %v3068
        %3375 = vmatmul.mubr.bf16.gmra.mrb[0].mxu0 %v3067
        %v3376 = vpop.f32.mrb[0].mxu0
        %v3377 = vadd.f32 0.0, %v3376
        %v3378 = vpop.f32.mrb[0].mxu0
        %v3379 = vpop.f32.mrb[0].mxu0
        %v3380 = vadd.f32 0.0, %v3379
        %v3381 = vpop.f32.mrb[0].mxu0
        %3382 = vmatprep.mubr.bf16.mxu0 %v3071
        %3383 = vmatmul.mubr.bf16.gmra.mrb[0].mxu0 %v3070
        %v3384 = vpop.f32.mrb[0].mxu0
        %v3385 = vadd.f32 0.0, %v3384
        %v3386 = vpop.f32.mrb[0].mxu0
        %v3387 = vpop.f32.mrb[0].mxu0
        %v3388 = vadd.f32 0.0, %v3387
        %v3389 = vpop.f32.mrb[0].mxu0
        %3390 = vmatprep.mubr.bf16.mxu0 %v3074
        %3391 = vmatmul.mubr.bf16.gmra.mrb[0].mxu0 %v3073
        %v3392 = vpop.f32.mrb[0].mxu0
        %v3393 = vadd.f32 0.0, %v3392
        %v3394 = vpop.f32.mrb[0].mxu0
        %v3395 = vpop.f32.mrb[0].mxu0
        %v3396 = vadd.f32 0.0, %v3395
        %v3397 = vpop.f32.mrb[0].mxu0
        %3398 = vmatprep.mubr.bf16.mxu0 %v3077
        %3399 = vmatmul.mubr.bf16.gmra.mrb[0].mxu0 %v3076
        %v3400 = vpop.f32.mrb[0].mxu0
        %v3401 = vadd.f32 0.0, %v3400
        %v3402 = vpop.f32.mrb[0].mxu0
        %v3403 = vpop.f32.mrb[0].mxu0
        %v3404 = vadd.f32 0.0, %v3403
        %v3405 = vpop.f32.mrb[0].mxu0
        %3406 = vmatprep.mubr.bf16.mxu0 %v3080
        %3407 = vmatmul.mubr.bf16.gmra.mrb[0].mxu0 %v3079
        %v3408 = vpop.f32.mrb[0].mxu0
        %v3409 = vadd.f32 0.0, %v3408
        %v3410 = vpop.f32.mrb[0].mxu0
        %v3411 = vpop.f32.mrb[0].mxu0
        %v3412 = vadd.f32 0.0, %v3411
        %v3413 = vpop.f32.mrb[0].mxu0
        %3414 = vmatprep.mubr.bf16.mxu0 %v3083
        %3415 = vmatmul.mubr.bf16.gmra.mrb[0].mxu0 %v3082
        %v3416 = vpop.f32.mrb[0].mxu0
        %v3417 = vadd.f32 0.0, %v3416
        %v3418 = vpop.f32.mrb[0].mxu0
        %v3419 = vpop.f32.mrb[0].mxu0
        %v3420 = vadd.f32 0.0, %v3419
        %v3421 = vpop.f32.mrb[0].mxu0
        %3422 = vmatprep.mubr.bf16.mxu0 %v3086
        %3423 = vmatmul.mubr.bf16.gmra.mrb[0].mxu0 %v3085
        %v3424 = vpop.f32.mrb[0].mxu0
        %v3425 = vadd.f32 0.0, %v3424
        %v3426 = vpop.f32.mrb[0].mxu0
        %v3427 = vpop.f32.mrb[0].mxu0
        %v3428 = vadd.f32 0.0, %v3427
        %v3429 = vpop.f32.mrb[0].mxu0
        %3430 = vmatprep.mubr.bf16.mxu0 %v3089
        %3431 = vmatmul.mubr.bf16.gmra.mrb[0].mxu0 %v3088
        %v3432 = vpop.f32.mrb[0].mxu0
        %v3433 = vadd.f32 0.0, %v3432
        %v3434 = vpop.f32.mrb[0].mxu0
        %v3435 = vpop.f32.mrb[0].mxu0
        %v3436 = vadd.f32 0.0, %v3435
        %v3437 = vpop.f32.mrb[0].mxu0
        %3438 = vmatprep.mubr.bf16.mxu0 %v3092
        %3439 = vmatmul.mubr.bf16.gmra.mrb[0].mxu0 %v3091
        %v3440 = vpop.f32.mrb[0].mxu0
        %v3441 = vadd.f32 0.0, %v3440
        %v3442 = vpop.f32.mrb[0].mxu0
        %v3443 = vpop.f32.mrb[0].mxu0
        %v3444 = vadd.f32 0.0, %v3443
        %v3445 = vpop.f32.mrb[0].mxu0
        %3446 = vdwg.mxu0
        %3447 = vmatprep.subr.bf16.mxu0 0
        %3448 = vmatpush1.bf16.msra.mxu0 %v3254
        %3449 = vmatprep.subr.bf16.mxu0 0
        %3450 = vmatpush1.bf16.msra.mxu0 %v3255
        %3451 = vmatprep.subr.bf16.mxu0 0
        %3452 = vmatpush1.bf16.msra.mxu0 %v3256
        %3453 = vmatprep.subr.bf16.mxu0 0
        %3454 = vmatpush1.bf16.msra.mxu0 %v3257
        %3455 = vmatprep.subr.bf16.mxu0 0
        %3456 = vmatpush1.bf16.msra.mxu0 %v3258
        %3457 = vmatprep.subr.bf16.mxu0 0
        %3458 = vmatpush1.bf16.msra.mxu0 %v3259
        %3459 = vmatprep.subr.bf16.mxu0 0
        %3460 = vmatpush1.bf16.msra.mxu0 %v3260
        %3461 = vmatprep.subr.bf16.mxu0 0
        %3462 = vmatpush1.bf16.msra.mxu0 %v3261
        %3463 = vmatprep.subr.bf16.mxu0 0
        %3464 = vmatpush1.bf16.msra.mxu0 0
        %3465 = vmatprep.subr.bf16.mxu0 0
        %3466 = vmatpush1.bf16.msra.mxu0 0
        %3467 = vmatprep.subr.bf16.mxu0 0
        %3468 = vmatpush1.bf16.msra.mxu0 0
        %3469 = vmatprep.subr.bf16.mxu0 0
        %3470 = vmatpush1.bf16.msra.mxu0 0
        %3471 = vmatprep.subr.bf16.mxu0 0
        %3472 = vmatpush1.bf16.msra.mxu0 0
        %3473 = vmatprep.subr.bf16.mxu0 0
        %3474 = vmatpush1.bf16.msra.mxu0 0
        %3475 = vmatprep.subr.bf16.mxu0 0
        %3476 = vmatpush1.bf16.msra.mxu0 0
        %3477 = vmatprep.subr.bf16.mxu0 0
        %3478 = vmatpush1.bf16.msra.mxu0 0
        %3479 = vmatprep.mubr.bf16.mxu0 0
        %3480 = vmatmul.mubr.bf16.gmra.mrb[0].mxu0 %v3048
        %v3481 = vpop.f32.mrb[0].mxu0
        %v3482 = vadd.f32 %v3321, %v3481
        %v3483 = vpop.f32.mrb[0].mxu0
        %v3484 = vpop.f32.mrb[0].mxu0
        %v3485 = vadd.f32 %v3324, %v3484
        %v3486 = vpop.f32.mrb[0].mxu0
        %3487 = vmatprep.mubr.bf16.mxu0 0
        %3488 = vmatmul.mubr.bf16.gmra.mrb[0].mxu0 %v3051
        %v3489 = vpop.f32.mrb[0].mxu0
        %v3490 = vadd.f32 %v3329, %v3489
        %v3491 = vpop.f32.mrb[0].mxu0
        %v3492 = vpop.f32.mrb[0].mxu0
        %v3493 = vadd.f32 %v3332, %v3492
        %v3494 = vpop.f32.mrb[0].mxu0
        %3495 = vmatprep.mubr.bf16.mxu0 0
        %3496 = vmatmul.mubr.bf16.gmra.mrb[0].mxu0 %v3054
        %v3497 = vpop.f32.mrb[0].mxu0
        %v3498 = vadd.f32 %v3337, %v3497
        %v3499 = vpop.f32.mrb[0].mxu0
        %v3500 = vpop.f32.mrb[0].mxu0
        %v3501 = vadd.f32 %v3340, %v3500
        %v3502 = vpop.f32.mrb[0].mxu0
        %3503 = vmatprep.mubr.bf16.mxu0 0
        %3504 = vmatmul.mubr.bf16.gmra.mrb[0].mxu0 %v3057
        %v3505 = vpop.f32.mrb[0].mxu0
        %v3506 = vadd.f32 %v3345, %v3505
        %v3507 = vpop.f32.mrb[0].mxu0
        %v3508 = vpop.f32.mrb[0].mxu0
        %v3509 = vadd.f32 %v3348, %v3508
        %v3510 = vpop.f32.mrb[0].mxu0
        %3511 = vmatprep.mubr.bf16.mxu0 0
        %3512 = vmatmul.mubr.bf16.gmra.mrb[0].mxu0 %v3060
        %v3513 = vpop.f32.mrb[0].mxu0
        %v3514 = vadd.f32 %v3353, %v3513
        %v3515 = vpop.f32.mrb[0].mxu0
        %v3516 = vpop.f32.mrb[0].mxu0
        %v3517 = vadd.f32 %v3356, %v3516
        %v3518 = vpop.f32.mrb[0].mxu0
        %3519 = vmatprep.mubr.bf16.mxu0 0
        %3520 = vmatmul.mubr.bf16.gmra.mrb[0].mxu0 %v3063
        %v3521 = vpop.f32.mrb[0].mxu0
        %v3522 = vadd.f32 %v3361, %v3521
        %v3523 = vpop.f32.mrb[0].mxu0
        %v3524 = vpop.f32.mrb[0].mxu0
        %v3525 = vadd.f32 %v3364, %v3524
        %v3526 = vpop.f32.mrb[0].mxu0
        %3527 = vmatprep.mubr.bf16.mxu0 0
        %3528 = vmatmul.mubr.bf16.gmra.mrb[0].mxu0 %v3066
        %v3529 = vpop.f32.mrb[0].mxu0
        %v3530 = vadd.f32 %v3369, %v3529
        %v3531 = vpop.f32.mrb[0].mxu0
        %v3532 = vpop.f32.mrb[0].mxu0
        %v3533 = vadd.f32 %v3372, %v3532
        %v3534 = vpop.f32.mrb[0].mxu0
        %3535 = vmatprep.mubr.bf16.mxu0 0
        %3536 = vmatmul.mubr.bf16.gmra.mrb[0].mxu0 %v3069
        %v3537 = vpop.f32.mrb[0].mxu0
        %v3538 = vadd.f32 %v3377, %v3537
        %v3539 = vpop.f32.mrb[0].mxu0
        %v3540 = vpop.f32.mrb[0].mxu0
        %v3541 = vadd.f32 %v3380, %v3540
        %v3542 = vpop.f32.mrb[0].mxu0
        %3543 = vmatprep.mubr.bf16.mxu0 0
        %3544 = vmatmul.mubr.bf16.gmra.mrb[0].mxu0 %v3072
        %v3545 = vpop.f32.mrb[0].mxu0
        %v3546 = vadd.f32 %v3385, %v3545
        %v3547 = vpop.f32.mrb[0].mxu0
        %v3548 = vpop.f32.mrb[0].mxu0
        %v3549 = vadd.f32 %v3388, %v3548
        %v3550 = vpop.f32.mrb[0].mxu0
        %3551 = vmatprep.mubr.bf16.mxu0 0
        %3552 = vmatmul.mubr.bf16.gmra.mrb[0].mxu0 %v3075
        %v3553 = vpop.f32.mrb[0].mxu0
        %v3554 = vadd.f32 %v3393, %v3553
        %v3555 = vpop.f32.mrb[0].mxu0
        %v3556 = vpop.f32.mrb[0].mxu0
        %v3557 = vadd.f32 %v3396, %v3556
        %v3558 = vpop.f32.mrb[0].mxu0
        %3559 = vmatprep.mubr.bf16.mxu0 0
        %3560 = vmatmul.mubr.bf16.gmra.mrb[0].mxu0 %v3078
        %v3561 = vpop.f32.mrb[0].mxu0
        %v3562 = vadd.f32 %v3401, %v3561
        %v3563 = vpop.f32.mrb[0].mxu0
        %v3564 = vpop.f32.mrb[0].mxu0
        %v3565 = vadd.f32 %v3404, %v3564
        %v3566 = vpop.f32.mrb[0].mxu0
        %3567 = vmatprep.mubr.bf16.mxu0 0
        %3568 = vmatmul.mubr.bf16.gmra.mrb[0].mxu0 %v3081
        %v3569 = vpop.f32.mrb[0].mxu0
        %v3570 = vadd.f32 %v3409, %v3569
        %v3571 = vpop.f32.mrb[0].mxu0
        %v3572 = vpop.f32.mrb[0].mxu0
        %v3573 = vadd.f32 %v3412, %v3572
        %v3574 = vpop.f32.mrb[0].mxu0
        %3575 = vmatprep.mubr.bf16.mxu0 0
        %3576 = vmatmul.mubr.bf16.gmra.mrb[0].mxu0 %v3084
        %v3577 = vpop.f32.mrb[0].mxu0
        %v3578 = vadd.f32 %v3417, %v3577
        %v3579 = vpop.f32.mrb[0].mxu0
        %v3580 = vpop.f32.mrb[0].mxu0
        %v3581 = vadd.f32 %v3420, %v3580
        %v3582 = vpop.f32.mrb[0].mxu0
        %3583 = vmatprep.mubr.bf16.mxu0 0
        %3584 = vmatmul.mubr.bf16.gmra.mrb[0].mxu0 %v3087
        %v3585 = vpop.f32.mrb[0].mxu0
        %v3586 = vadd.f32 %v3425, %v3585
        %v3587 = vpop.f32.mrb[0].mxu0
        %v3588 = vpop.f32.mrb[0].mxu0
        %v3589 = vadd.f32 %v3428, %v3588
        %v3590 = vpop.f32.mrb[0].mxu0
        %3591 = vmatprep.mubr.bf16.mxu0 0
        %3592 = vmatmul.mubr.bf16.gmra.mrb[0].mxu0 %v3090
        %v3593 = vpop.f32.mrb[0].mxu0
        %v3594 = vadd.f32 %v3433, %v3593
        %v3595 = vpop.f32.mrb[0].mxu0
        %v3596 = vpop.f32.mrb[0].mxu0
        %v3597 = vadd.f32 %v3436, %v3596
        %v3598 = vpop.f32.mrb[0].mxu0
        %3599 = vmatprep.mubr.bf16.mxu0 0
        %3600 = vmatmul.mubr.bf16.gmra.mrb[0].mxu0 %v3093
        %v3601 = vpop.f32.mrb[0].mxu0
        %v3602 = vadd.f32 %v3441, %v3601
        %v3603 = vpop.f32.mrb[0].mxu0
        %v3604 = vpop.f32.mrb[0].mxu0
        %v3605 = vadd.f32 %v3444, %v3604
        %v3606 = vpop.f32.mrb[0].mxu0
        %3607 = vdwg.mxu0
        %3608 = vst [vmem:[#allocation3] sm:$0xff] %v3482
        %3609 = vst [vmem:[#allocation3 + $0x8] sm:$0xff] %v3485
        %3610 = vst [vmem:[#allocation3 + $0x10] sm:$0xff] %v3490
        %3611 = vst [vmem:[#allocation3 + $0x18] sm:$0xff] %v3493
        %3612 = vst [vmem:[#allocation3 + $0x20] sm:$0xff] %v3498
        %3613 = vst [vmem:[#allocation3 + $0x28] sm:$0xff] %v3501
        %3614 = vst [vmem:[#allocation3 + $0x30] sm:$0xff] %v3506
        %3615 = vst [vmem:[#allocation3 + $0x38] sm:$0xff] %v3509
        %3616 = vst [vmem:[#allocation3 + $0x40] sm:$0xff] %v3514
        %3617 = vst [vmem:[#allocation3 + $0x48] sm:$0xff] %v3517
        %3618 = vst [vmem:[#allocation3 + $0x50] sm:$0xff] %v3522
        %3619 = vst [vmem:[#allocation3 + $0x58] sm:$0xff] %v3525
        %3620 = vst [vmem:[#allocation3 + $0x60] sm:$0xff] %v3530
        %3621 = vst [vmem:[#allocation3 + $0x68] sm:$0xff] %v3533
        %3622 = vst [vmem:[#allocation3 + $0x70] sm:$0xff] %v3538
        %3623 = vst [vmem:[#allocation3 + $0x78] sm:$0xff] %v3541
        %3624 = vst [vmem:[#allocation3 + $0x80] sm:$0xff] %v3546
        %3625 = vst [vmem:[#allocation3 + $0x88] sm:$0xff] %v3549
        %3626 = vst [vmem:[#allocation3 + $0x90] sm:$0xff] %v3554
        %3627 = vst [vmem:[#allocation3 + $0x98] sm:$0xff] %v3557
        %3628 = vst [vmem:[#allocation3 + $0xa0] sm:$0xff] %v3562
        %3629 = vst [vmem:[#allocation3 + $0xa8] sm:$0xff] %v3565
        %3630 = vst [vmem:[#allocation3 + $0xb0] sm:$0xff] %v3570
        %3631 = vst [vmem:[#allocation3 + $0xb8] sm:$0xff] %v3573
        %3632 = vst [vmem:[#allocation3 + $0xc0] sm:$0xff] %v3578
        %3633 = vst [vmem:[#allocation3 + $0xc8] sm:$0xff] %v3581
        %3634 = vst [vmem:[#allocation3 + $0xd0] sm:$0xff] %v3586
        %3635 = vst [vmem:[#allocation3 + $0xd8] sm:$0xff] %v3589
        %3636 = vst [vmem:[#allocation3 + $0xe0] sm:$0xff] %v3594
        %3637 = vst [vmem:[#allocation3 + $0xe8] sm:$0xff] %v3597
        %3638 = vst [vmem:[#allocation3 + $0xf0] sm:$0xff] %v3602
        %3639 = vst [vmem:[#allocation3 + $0xf8] sm:$0xff] %v3605
        %v3640 = vld [vmem:[%s282] sm:$0xff]
        %v3641 = vld [vmem:[%s282 + $0x8] sm:$0xff]
        %v3642 = vld [vmem:[%s282 + $0x10] sm:$0xff]
        %v3643 = vld [vmem:[%s282 + $0x18] sm:$0xff]
        %v3644 = vld [vmem:[%s282 + $0x20] sm:$0xff]
        %v3645 = vld [vmem:[%s282 + $0x28] sm:$0xff]
        %v3646 = vld [vmem:[%s282 + $0x30] sm:$0xff]
        %v3647 = vld [vmem:[%s282 + $0x38] sm:$0xff]
        %v3648 = vld [vmem:[%s282 + $0x40] sm:$0xff]
        %v3649 = vld [vmem:[%s282 + $0x48] sm:$0xff]
        %v3650 = vld [vmem:[%s282 + $0x50] sm:$0xff]
        %v3651 = vld [vmem:[%s282 + $0x58] sm:$0xff]
        %v3652 = vld [vmem:[%s282 + $0x60] sm:$0xff]
        %v3653 = vld [vmem:[%s282 + $0x68] sm:$0xff]
        %v3654 = vld [vmem:[%s282 + $0x70] sm:$0xff]
        %v3655 = vld [vmem:[%s282 + $0x78] sm:$0xff]
        %v3656 = vld [vmem:[%s282 + $0x80] sm:$0xff]
        %v3657 = vld [vmem:[%s282 + $0x88] sm:$0xff]
        %v3658 = vld [vmem:[%s282 + $0x90] sm:$0xff]
        %v3659 = vld [vmem:[%s282 + $0x98] sm:$0xff]
        %v3660 = vld [vmem:[%s282 + $0xa0] sm:$0xff]
        %v3661 = vld [vmem:[%s282 + $0xa8] sm:$0xff]
        %v3662 = vld [vmem:[%s282 + $0xb0] sm:$0xff]
        %v3663 = vld [vmem:[%s282 + $0xb8] sm:$0xff]
        %v3664 = vld [vmem:[%s282 + $0xc0] sm:$0xff]
        %v3665 = vld [vmem:[%s282 + $0xc8] sm:$0xff]
        %v3666 = vld [vmem:[%s282 + $0xd0] sm:$0xff]
        %v3667 = vld [vmem:[%s282 + $0xd8] sm:$0xff]
        %v3668 = vld [vmem:[%s282 + $0xe0] sm:$0xff]
        %v3669 = vld [vmem:[%s282 + $0xe8] sm:$0xff]
        %v3670 = vld [vmem:[%s282 + $0xf0] sm:$0xff]
        %v3671 = vld [vmem:[%s282 + $0xf8] sm:$0xff]
        %v3672 = vld [vmem:[%s282 + $0x100] sm:$0xff]
        %v3673 = vld [vmem:[%s282 + $0x108] sm:$0xff]
        %v3674 = vld [vmem:[%s282 + $0x110] sm:$0xff]
        %v3675 = vld [vmem:[%s282 + $0x118] sm:$0xff]
        %v3676 = vld [vmem:[%s282 + $0x120] sm:$0xff]
        %v3677 = vld [vmem:[%s282 + $0x128] sm:$0xff]
        %v3678 = vld [vmem:[%s282 + $0x130] sm:$0xff]
        %v3679 = vld [vmem:[%s282 + $0x138] sm:$0xff]
        %v3680 = vld [vmem:[%s282 + $0x140] sm:$0xff]
        %v3681 = vld [vmem:[%s282 + $0x148] sm:$0xff]
        %v3682 = vld [vmem:[%s282 + $0x150] sm:$0xff]
        %v3683 = vld [vmem:[%s282 + $0x158] sm:$0xff]
        %v3684 = vld [vmem:[%s282 + $0x160] sm:$0xff]
        %v3685 = vld [vmem:[%s282 + $0x168] sm:$0xff]
        %v3686 = vld [vmem:[%s282 + $0x170] sm:$0xff]
        %v3687 = vld [vmem:[%s282 + $0x178] sm:$0xff]
        %s3688 = scalar_lea.vmem [#allocation8], 192
        %v3689 = vld [vmem:[%s3688] sm:$0xf]
        %v3690 = vld [vmem:[%s3688 + $0x4] sm:$0xf]
        %v3691 = vld [vmem:[%s3688 + $0x8] sm:$0xf]
        %v3692 = vld [vmem:[%s3688 + $0xc] sm:$0xf]
        %v3693 = vld [vmem:[%s3688 + $0x10] sm:$0xf]
        %v3694 = vld [vmem:[%s3688 + $0x14] sm:$0xf]
        %v3695 = vld [vmem:[%s3688 + $0x18] sm:$0xf]
        %v3696 = vld [vmem:[%s3688 + $0x1c] sm:$0xf]
        %v3697 = vld [vmem:[%s3688 + $0x20] sm:$0xf]
        %v3698 = vld [vmem:[%s3688 + $0x24] sm:$0xf]
        %v3699 = vld [vmem:[%s3688 + $0x28] sm:$0xf]
        %v3700 = vld [vmem:[%s3688 + $0x2c] sm:$0xf]
        %v3701 = vld [vmem:[%s3688 + $0x30] sm:$0xf]
        %v3702 = vld [vmem:[%s3688 + $0x34] sm:$0xf]
        %v3703 = vld [vmem:[%s3688 + $0x38] sm:$0xf]
        %v3704 = vld [vmem:[%s3688 + $0x3c] sm:$0xf]
        %v3705 = vld [vmem:[%s3688 + $0x40] sm:$0xf]
        %v3706 = vld [vmem:[%s3688 + $0x44] sm:$0xf]
        %v3707 = vld [vmem:[%s3688 + $0x48] sm:$0xf]
        %v3708 = vld [vmem:[%s3688 + $0x4c] sm:$0xf]
        %v3709 = vld [vmem:[%s3688 + $0x50] sm:$0xf]
        %v3710 = vld [vmem:[%s3688 + $0x54] sm:$0xf]
        %v3711 = vld [vmem:[%s3688 + $0x58] sm:$0xf]
        %v3712 = vld [vmem:[%s3688 + $0x5c] sm:$0xf]
        %v3713 = vld [vmem:[%s3688 + $0x60] sm:$0xf]
        %v3714 = vld [vmem:[%s3688 + $0x64] sm:$0xf]
        %v3715 = vld [vmem:[%s3688 + $0x68] sm:$0xf]
        %v3716 = vld [vmem:[%s3688 + $0x6c] sm:$0xf]
        %v3717 = vld [vmem:[%s3688 + $0x70] sm:$0xf]
        %v3718 = vld [vmem:[%s3688 + $0x74] sm:$0xf]
        %v3719 = vld [vmem:[%s3688 + $0x78] sm:$0xf]
        %v3720 = vld [vmem:[%s3688 + $0x7c] sm:$0xf]
        %v3721 = vld [vmem:[%s3688 + $0x80] sm:$0xf]
        %v3722 = vld [vmem:[%s3688 + $0x84] sm:$0xf]
        %v3723 = vld [vmem:[%s3688 + $0x88] sm:$0xf]
        %v3724 = vld [vmem:[%s3688 + $0x8c] sm:$0xf]
        %v3725 = vld [vmem:[%s3688 + $0x90] sm:$0xf]
        %v3726 = vld [vmem:[%s3688 + $0x94] sm:$0xf]
        %v3727 = vld [vmem:[%s3688 + $0x98] sm:$0xf]
        %v3728 = vld [vmem:[%s3688 + $0x9c] sm:$0xf]
        %v3729 = vld [vmem:[%s3688 + $0xa0] sm:$0xf]
        %v3730 = vld [vmem:[%s3688 + $0xa4] sm:$0xf]
        %v3731 = vld [vmem:[%s3688 + $0xa8] sm:$0xf]
        %v3732 = vld [vmem:[%s3688 + $0xac] sm:$0xf]
        %v3733 = vld [vmem:[%s3688 + $0xb0] sm:$0xf]
        %v3734 = vld [vmem:[%s3688 + $0xb4] sm:$0xf]
        %v3735 = vld [vmem:[%s3688 + $0xb8] sm:$0xf]
        %v3736 = vld [vmem:[%s3688 + $0xbc] sm:$0xf]
        %v3785 = vunpack.c.l.b16 %v3689
        %v3786 = vunpack.c.l.b16 %v3690
        %v3787 = vunpack.c.l.b16 %v3691
        %v3788 = vunpack.c.l.b16 %v3692
        %v3789 = vunpack.c.l.b16 %v3693
        %v3790 = vunpack.c.l.b16 %v3694
        %v3791 = vunpack.c.l.b16 %v3695
        %v3792 = vunpack.c.l.b16 %v3696
        %v3793 = vunpack.c.l.b16 %v3697
        %v3794 = vunpack.c.l.b16 %v3698
        %v3795 = vunpack.c.l.b16 %v3699
        %v3796 = vunpack.c.l.b16 %v3700
        %v3797 = vunpack.c.l.b16 %v3701
        %v3798 = vunpack.c.l.b16 %v3702
        %v3799 = vunpack.c.l.b16 %v3703
        %v3800 = vunpack.c.l.b16 %v3704
        %v3801 = vunpack.c.l.b16 %v3705
        %v3802 = vunpack.c.l.b16 %v3706
        %v3803 = vunpack.c.l.b16 %v3707
        %v3804 = vunpack.c.l.b16 %v3708
        %v3805 = vunpack.c.l.b16 %v3709
        %v3806 = vunpack.c.l.b16 %v3710
        %v3807 = vunpack.c.l.b16 %v3711
        %v3808 = vunpack.c.l.b16 %v3712
        %v3809 = vunpack.c.l.b16 %v3713
        %v3810 = vunpack.c.l.b16 %v3714
        %v3811 = vunpack.c.l.b16 %v3715
        %v3812 = vunpack.c.l.b16 %v3716
        %v3813 = vunpack.c.l.b16 %v3717
        %v3814 = vunpack.c.l.b16 %v3718
        %v3815 = vunpack.c.l.b16 %v3719
        %v3816 = vunpack.c.l.b16 %v3720
        %v3817 = vunpack.c.l.b16 %v3721
        %v3818 = vunpack.c.l.b16 %v3722
        %v3819 = vunpack.c.l.b16 %v3723
        %v3820 = vunpack.c.l.b16 %v3724
        %v3821 = vunpack.c.l.b16 %v3725
        %v3822 = vunpack.c.l.b16 %v3726
        %v3823 = vunpack.c.l.b16 %v3727
        %v3824 = vunpack.c.l.b16 %v3728
        %v3825 = vunpack.c.l.b16 %v3729
        %v3826 = vunpack.c.l.b16 %v3730
        %v3827 = vunpack.c.l.b16 %v3731
        %v3828 = vunpack.c.l.b16 %v3732
        %v3829 = vunpack.c.l.b16 %v3733
        %v3830 = vunpack.c.l.b16 %v3734
        %v3831 = vunpack.c.l.b16 %v3735
        %v3832 = vunpack.c.l.b16 %v3736
        %v3833 = vpack.c.b16 %v3786, %v3785
        %v3834 = vpack.c.b16 %v3788, %v3787
        %v3835 = vpack.c.b16 %v3790, %v3789
        %v3836 = vpack.c.b16 %v3792, %v3791
        %v3837 = vpack.c.b16 %v3794, %v3793
        %v3838 = vpack.c.b16 %v3796, %v3795
        %v3839 = vpack.c.b16 %v3798, %v3797
        %v3840 = vpack.c.b16 %v3800, %v3799
        %v3841 = vpack.c.b16 %v3802, %v3801
        %v3842 = vpack.c.b16 %v3804, %v3803
        %v3843 = vpack.c.b16 %v3806, %v3805
        %v3844 = vpack.c.b16 %v3808, %v3807
        %v3845 = vpack.c.b16 %v3810, %v3809
        %v3846 = vpack.c.b16 %v3812, %v3811
        %v3847 = vpack.c.b16 %v3814, %v3813
        %v3848 = vpack.c.b16 %v3816, %v3815
        %v3849 = vpack.c.b16 %v3818, %v3817
        %v3850 = vpack.c.b16 %v3820, %v3819
        %v3851 = vpack.c.b16 %v3822, %v3821
        %v3852 = vpack.c.b16 %v3824, %v3823
        %v3853 = vpack.c.b16 %v3826, %v3825
        %v3854 = vpack.c.b16 %v3828, %v3827
        %v3855 = vpack.c.b16 %v3830, %v3829
        %v3856 = vpack.c.b16 %v3832, %v3831
        %3881 = vmatprep.subr.bf16.mxu0 0
        %3882 = vmatpush1.bf16.msra.mxu0 %v3833
        %3883 = vmatprep.subr.bf16.mxu0 0
        %3884 = vmatpush1.bf16.msra.mxu0 %v3834
        %3885 = vmatprep.subr.bf16.mxu0 0
        %3886 = vmatpush1.bf16.msra.mxu0 %v3835
        %3887 = vmatprep.subr.bf16.mxu0 0
        %3888 = vmatpush1.bf16.msra.mxu0 %v3836
        %3889 = vmatprep.subr.bf16.mxu0 0
        %3890 = vmatpush1.bf16.msra.mxu0 %v3837
        %3891 = vmatprep.subr.bf16.mxu0 0
        %3892 = vmatpush1.bf16.msra.mxu0 %v3838
        %3893 = vmatprep.subr.bf16.mxu0 0
        %3894 = vmatpush1.bf16.msra.mxu0 %v3839
        %3895 = vmatprep.subr.bf16.mxu0 0
        %3896 = vmatpush1.bf16.msra.mxu0 %v3840
        %3897 = vmatprep.subr.bf16.mxu0 0
        %3898 = vmatpush1.bf16.msra.mxu0 %v3841
        %3899 = vmatprep.subr.bf16.mxu0 0
        %3900 = vmatpush1.bf16.msra.mxu0 %v3842
        %3901 = vmatprep.subr.bf16.mxu0 0
        %3902 = vmatpush1.bf16.msra.mxu0 %v3843
        %3903 = vmatprep.subr.bf16.mxu0 0
        %3904 = vmatpush1.bf16.msra.mxu0 %v3844
        %3905 = vmatprep.subr.bf16.mxu0 0
        %3906 = vmatpush1.bf16.msra.mxu0 %v3845
        %3907 = vmatprep.subr.bf16.mxu0 0
        %3908 = vmatpush1.bf16.msra.mxu0 %v3846
        %3909 = vmatprep.subr.bf16.mxu0 0
        %3910 = vmatpush1.bf16.msra.mxu0 %v3847
        %3911 = vmatprep.subr.bf16.mxu0 0
        %3912 = vmatpush1.bf16.msra.mxu0 %v3848
        %3913 = vmatprep.mubr.bf16.mxu0 %v3641
        %3914 = vmatmul.mubr.bf16.gmra.mrb[0].mxu0 %v3640
        %v3915 = vpop.f32.mrb[0].mxu0
        %v3916 = vadd.f32 0.0, %v3915
        %v3917 = vpop.f32.mrb[0].mxu0
        %v3918 = vpop.f32.mrb[0].mxu0
        %v3919 = vadd.f32 0.0, %v3918
        %v3920 = vpop.f32.mrb[0].mxu0
        %3921 = vmatprep.mubr.bf16.mxu0 %v3644
        %3922 = vmatmul.mubr.bf16.gmra.mrb[0].mxu0 %v3643
        %v3923 = vpop.f32.mrb[0].mxu0
        %v3924 = vadd.f32 0.0, %v3923
        %v3925 = vpop.f32.mrb[0].mxu0
        %v3926 = vpop.f32.mrb[0].mxu0
        %v3927 = vadd.f32 0.0, %v3926
        %v3928 = vpop.f32.mrb[0].mxu0
        %3929 = vmatprep.mubr.bf16.mxu0 %v3647
        %3930 = vmatmul.mubr.bf16.gmra.mrb[0].mxu0 %v3646
        %v3931 = vpop.f32.mrb[0].mxu0
        %v3932 = vadd.f32 0.0, %v3931
        %v3933 = vpop.f32.mrb[0].mxu0
        %v3934 = vpop.f32.mrb[0].mxu0
        %v3935 = vadd.f32 0.0, %v3934
        %v3936 = vpop.f32.mrb[0].mxu0
        %3937 = vmatprep.mubr.bf16.mxu0 %v3650
        %3938 = vmatmul.mubr.bf16.gmra.mrb[0].mxu0 %v3649
        %v3939 = vpop.f32.mrb[0].mxu0
        %v3940 = vadd.f32 0.0, %v3939
        %v3941 = vpop.f32.mrb[0].mxu0
        %v3942 = vpop.f32.mrb[0].mxu0
        %v3943 = vadd.f32 0.0, %v3942
        %v3944 = vpop.f32.mrb[0].mxu0
        %3945 = vmatprep.mubr.bf16.mxu0 %v3653
        %3946 = vmatmul.mubr.bf16.gmra.mrb[0].mxu0 %v3652
        %v3947 = vpop.f32.mrb[0].mxu0
        %v3948 = vadd.f32 0.0, %v3947
        %v3949 = vpop.f32.mrb[0].mxu0
        %v3950 = vpop.f32.mrb[0].mxu0
        %v3951 = vadd.f32 0.0, %v3950
        %v3952 = vpop.f32.mrb[0].mxu0
        %3953 = vmatprep.mubr.bf16.mxu0 %v3656
        %3954 = vmatmul.mubr.bf16.gmra.mrb[0].mxu0 %v3655
        %v3955 = vpop.f32.mrb[0].mxu0
        %v3956 = vadd.f32 0.0, %v3955
        %v3957 = vpop.f32.mrb[0].mxu0
        %v3958 = vpop.f32.mrb[0].mxu0
        %v3959 = vadd.f32 0.0, %v3958
        %v3960 = vpop.f32.mrb[0].mxu0
        %3961 = vmatprep.mubr.bf16.mxu0 %v3659
        %3962 = vmatmul.mubr.bf16.gmra.mrb[0].mxu0 %v3658
        %v3963 = vpop.f32.mrb[0].mxu0
        %v3964 = vadd.f32 0.0, %v3963
        %v3965 = vpop.f32.mrb[0].mxu0
        %v3966 = vpop.f32.mrb[0].mxu0
        %v3967 = vadd.f32 0.0, %v3966
        %v3968 = vpop.f32.mrb[0].mxu0
        %3969 = vmatprep.mubr.bf16.mxu0 %v3662
        %3970 = vmatmul.mubr.bf16.gmra.mrb[0].mxu0 %v3661
        %v3971 = vpop.f32.mrb[0].mxu0
        %v3972 = vadd.f32 0.0, %v3971
        %v3973 = vpop.f32.mrb[0].mxu0
        %v3974 = vpop.f32.mrb[0].mxu0
        %v3975 = vadd.f32 0.0, %v3974
        %v3976 = vpop.f32.mrb[0].mxu0
        %3977 = vmatprep.mubr.bf16.mxu0 %v3665
        %3978 = vmatmul.mubr.bf16.gmra.mrb[0].mxu0 %v3664
        %v3979 = vpop.f32.mrb[0].mxu0
        %v3980 = vadd.f32 0.0, %v3979
        %v3981 = vpop.f32.mrb[0].mxu0
        %v3982 = vpop.f32.mrb[0].mxu0
        %v3983 = vadd.f32 0.0, %v3982
        %v3984 = vpop.f32.mrb[0].mxu0
        %3985 = vmatprep.mubr.bf16.mxu0 %v3668
        %3986 = vmatmul.mubr.bf16.gmra.mrb[0].mxu0 %v3667
        %v3987 = vpop.f32.mrb[0].mxu0
        %v3988 = vadd.f32 0.0, %v3987
        %v3989 = vpop.f32.mrb[0].mxu0
        %v3990 = vpop.f32.mrb[0].mxu0
        %v3991 = vadd.f32 0.0, %v3990
        %v3992 = vpop.f32.mrb[0].mxu0
        %3993 = vmatprep.mubr.bf16.mxu0 %v3671
        %3994 = vmatmul.mubr.bf16.gmra.mrb[0].mxu0 %v3670
        %v3995 = vpop.f32.mrb[0].mxu0
        %v3996 = vadd.f32 0.0, %v3995
        %v3997 = vpop.f32.mrb[0].mxu0
        %v3998 = vpop.f32.mrb[0].mxu0
        %v3999 = vadd.f32 0.0, %v3998
        %v4000 = vpop.f32.mrb[0].mxu0
        %4001 = vmatprep.mubr.bf16.mxu0 %v3674
        %4002 = vmatmul.mubr.bf16.gmra.mrb[0].mxu0 %v3673
        %v4003 = vpop.f32.mrb[0].mxu0
        %v4004 = vadd.f32 0.0, %v4003
        %v4005 = vpop.f32.mrb[0].mxu0
        %v4006 = vpop.f32.mrb[0].mxu0
        %v4007 = vadd.f32 0.0, %v4006
        %v4008 = vpop.f32.mrb[0].mxu0
        %4009 = vmatprep.mubr.bf16.mxu0 %v3677
        %4010 = vmatmul.mubr.bf16.gmra.mrb[0].mxu0 %v3676
        %v4011 = vpop.f32.mrb[0].mxu0
        %v4012 = vadd.f32 0.0, %v4011
        %v4013 = vpop.f32.mrb[0].mxu0
        %v4014 = vpop.f32.mrb[0].mxu0
        %v4015 = vadd.f32 0.0, %v4014
        %v4016 = vpop.f32.mrb[0].mxu0
        %4017 = vmatprep.mubr.bf16.mxu0 %v3680
        %4018 = vmatmul.mubr.bf16.gmra.mrb[0].mxu0 %v3679
        %v4019 = vpop.f32.mrb[0].mxu0
        %v4020 = vadd.f32 0.0, %v4019
        %v4021 = vpop.f32.mrb[0].mxu0
        %v4022 = vpop.f32.mrb[0].mxu0
        %v4023 = vadd.f32 0.0, %v4022
        %v4024 = vpop.f32.mrb[0].mxu0
        %4025 = vmatprep.mubr.bf16.mxu0 %v3683
        %4026 = vmatmul.mubr.bf16.gmra.mrb[0].mxu0 %v3682
        %v4027 = vpop.f32.mrb[0].mxu0
        %v4028 = vadd.f32 0.0, %v4027
        %v4029 = vpop.f32.mrb[0].mxu0
        %v4030 = vpop.f32.mrb[0].mxu0
        %v4031 = vadd.f32 0.0, %v4030
        %v4032 = vpop.f32.mrb[0].mxu0
        %4033 = vmatprep.mubr.bf16.mxu0 %v3686
        %4034 = vmatmul.mubr.bf16.gmra.mrb[0].mxu0 %v3685
        %v4035 = vpop.f32.mrb[0].mxu0
        %v4036 = vadd.f32 0.0, %v4035
        %v4037 = vpop.f32.mrb[0].mxu0
        %v4038 = vpop.f32.mrb[0].mxu0
        %v4039 = vadd.f32 0.0, %v4038
        %v4040 = vpop.f32.mrb[0].mxu0
        %4041 = vdwg.mxu0
        %4042 = vmatprep.subr.bf16.mxu0 0
        %4043 = vmatpush1.bf16.msra.mxu0 %v3849
        %4044 = vmatprep.subr.bf16.mxu0 0
        %4045 = vmatpush1.bf16.msra.mxu0 %v3850
        %4046 = vmatprep.subr.bf16.mxu0 0
        %4047 = vmatpush1.bf16.msra.mxu0 %v3851
        %4048 = vmatprep.subr.bf16.mxu0 0
        %4049 = vmatpush1.bf16.msra.mxu0 %v3852
        %4050 = vmatprep.subr.bf16.mxu0 0
        %4051 = vmatpush1.bf16.msra.mxu0 %v3853
        %4052 = vmatprep.subr.bf16.mxu0 0
        %4053 = vmatpush1.bf16.msra.mxu0 %v3854
        %4054 = vmatprep.subr.bf16.mxu0 0
        %4055 = vmatpush1.bf16.msra.mxu0 %v3855
        %4056 = vmatprep.subr.bf16.mxu0 0
        %4057 = vmatpush1.bf16.msra.mxu0 %v3856
        %4058 = vmatprep.subr.bf16.mxu0 0
        %4059 = vmatpush1.bf16.msra.mxu0 0
        %4060 = vmatprep.subr.bf16.mxu0 0
        %4061 = vmatpush1.bf16.msra.mxu0 0
        %4062 = vmatprep.subr.bf16.mxu0 0
        %4063 = vmatpush1.bf16.msra.mxu0 0
        %4064 = vmatprep.subr.bf16.mxu0 0
        %4065 = vmatpush1.bf16.msra.mxu0 0
        %4066 = vmatprep.subr.bf16.mxu0 0
        %4067 = vmatpush1.bf16.msra.mxu0 0
        %4068 = vmatprep.subr.bf16.mxu0 0
        %4069 = vmatpush1.bf16.msra.mxu0 0
        %4070 = vmatprep.subr.bf16.mxu0 0
        %4071 = vmatpush1.bf16.msra.mxu0 0
        %4072 = vmatprep.subr.bf16.mxu0 0
        %4073 = vmatpush1.bf16.msra.mxu0 0
        %4074 = vmatprep.mubr.bf16.mxu0 0
        %4075 = vmatmul.mubr.bf16.gmra.mrb[0].mxu0 %v3642
        %v4076 = vpop.f32.mrb[0].mxu0
        %v4077 = vadd.f32 %v3916, %v4076
        %v4078 = vpop.f32.mrb[0].mxu0
        %v4079 = vpop.f32.mrb[0].mxu0
        %v4080 = vadd.f32 %v3919, %v4079
        %v4081 = vpop.f32.mrb[0].mxu0
        %4082 = vmatprep.mubr.bf16.mxu0 0
        %4083 = vmatmul.mubr.bf16.gmra.mrb[0].mxu0 %v3645
        %v4084 = vpop.f32.mrb[0].mxu0
        %v4085 = vadd.f32 %v3924, %v4084
        %v4086 = vpop.f32.mrb[0].mxu0
        %v4087 = vpop.f32.mrb[0].mxu0
        %v4088 = vadd.f32 %v3927, %v4087
        %v4089 = vpop.f32.mrb[0].mxu0
        %4090 = vmatprep.mubr.bf16.mxu0 0
        %4091 = vmatmul.mubr.bf16.gmra.mrb[0].mxu0 %v3648
        %v4092 = vpop.f32.mrb[0].mxu0
        %v4093 = vadd.f32 %v3932, %v4092
        %v4094 = vpop.f32.mrb[0].mxu0
        %v4095 = vpop.f32.mrb[0].mxu0
        %v4096 = vadd.f32 %v3935, %v4095
        %v4097 = vpop.f32.mrb[0].mxu0
        %4098 = vmatprep.mubr.bf16.mxu0 0
        %4099 = vmatmul.mubr.bf16.gmra.mrb[0].mxu0 %v3651
        %v4100 = vpop.f32.mrb[0].mxu0
        %v4101 = vadd.f32 %v3940, %v4100
        %v4102 = vpop.f32.mrb[0].mxu0
        %v4103 = vpop.f32.mrb[0].mxu0
        %v4104 = vadd.f32 %v3943, %v4103
        %v4105 = vpop.f32.mrb[0].mxu0
        %4106 = vmatprep.mubr.bf16.mxu0 0
        %4107 = vmatmul.mubr.bf16.gmra.mrb[0].mxu0 %v3654
        %v4108 = vpop.f32.mrb[0].mxu0
        %v4109 = vadd.f32 %v3948, %v4108
        %v4110 = vpop.f32.mrb[0].mxu0
        %v4111 = vpop.f32.mrb[0].mxu0
        %v4112 = vadd.f32 %v3951, %v4111
        %v4113 = vpop.f32.mrb[0].mxu0
        %4114 = vmatprep.mubr.bf16.mxu0 0
        %4115 = vmatmul.mubr.bf16.gmra.mrb[0].mxu0 %v3657
        %v4116 = vpop.f32.mrb[0].mxu0
        %v4117 = vadd.f32 %v3956, %v4116
        %v4118 = vpop.f32.mrb[0].mxu0
        %v4119 = vpop.f32.mrb[0].mxu0
        %v4120 = vadd.f32 %v3959, %v4119
        %v4121 = vpop.f32.mrb[0].mxu0
        %4122 = vmatprep.mubr.bf16.mxu0 0
        %4123 = vmatmul.mubr.bf16.gmra.mrb[0].mxu0 %v3660
        %v4124 = vpop.f32.mrb[0].mxu0
        %v4125 = vadd.f32 %v3964, %v4124
        %v4126 = vpop.f32.mrb[0].mxu0
        %v4127 = vpop.f32.mrb[0].mxu0
        %v4128 = vadd.f32 %v3967, %v4127
        %v4129 = vpop.f32.mrb[0].mxu0
        %4130 = vmatprep.mubr.bf16.mxu0 0
        %4131 = vmatmul.mubr.bf16.gmra.mrb[0].mxu0 %v3663
        %v4132 = vpop.f32.mrb[0].mxu0
        %v4133 = vadd.f32 %v3972, %v4132
        %v4134 = vpop.f32.mrb[0].mxu0
        %v4135 = vpop.f32.mrb[0].mxu0
        %v4136 = vadd.f32 %v3975, %v4135
        %v4137 = vpop.f32.mrb[0].mxu0
        %4138 = vmatprep.mubr.bf16.mxu0 0
        %4139 = vmatmul.mubr.bf16.gmra.mrb[0].mxu0 %v3666
        %v4140 = vpop.f32.mrb[0].mxu0
        %v4141 = vadd.f32 %v3980, %v4140
        %v4142 = vpop.f32.mrb[0].mxu0
        %v4143 = vpop.f32.mrb[0].mxu0
        %v4144 = vadd.f32 %v3983, %v4143
        %v4145 = vpop.f32.mrb[0].mxu0
        %4146 = vmatprep.mubr.bf16.mxu0 0
        %4147 = vmatmul.mubr.bf16.gmra.mrb[0].mxu0 %v3669
        %v4148 = vpop.f32.mrb[0].mxu0
        %v4149 = vadd.f32 %v3988, %v4148
        %v4150 = vpop.f32.mrb[0].mxu0
        %v4151 = vpop.f32.mrb[0].mxu0
        %v4152 = vadd.f32 %v3991, %v4151
        %v4153 = vpop.f32.mrb[0].mxu0
        %4154 = vmatprep.mubr.bf16.mxu0 0
        %4155 = vmatmul.mubr.bf16.gmra.mrb[0].mxu0 %v3672
        %v4156 = vpop.f32.mrb[0].mxu0
        %v4157 = vadd.f32 %v3996, %v4156
        %v4158 = vpop.f32.mrb[0].mxu0
        %v4159 = vpop.f32.mrb[0].mxu0
        %v4160 = vadd.f32 %v3999, %v4159
        %v4161 = vpop.f32.mrb[0].mxu0
        %4162 = vmatprep.mubr.bf16.mxu0 0
        %4163 = vmatmul.mubr.bf16.gmra.mrb[0].mxu0 %v3675
        %v4164 = vpop.f32.mrb[0].mxu0
        %v4165 = vadd.f32 %v4004, %v4164
        %v4166 = vpop.f32.mrb[0].mxu0
        %v4167 = vpop.f32.mrb[0].mxu0
        %v4168 = vadd.f32 %v4007, %v4167
        %v4169 = vpop.f32.mrb[0].mxu0
        %4170 = vmatprep.mubr.bf16.mxu0 0
        %4171 = vmatmul.mubr.bf16.gmra.mrb[0].mxu0 %v3678
        %v4172 = vpop.f32.mrb[0].mxu0
        %v4173 = vadd.f32 %v4012, %v4172
        %v4174 = vpop.f32.mrb[0].mxu0
        %v4175 = vpop.f32.mrb[0].mxu0
        %v4176 = vadd.f32 %v4015, %v4175
        %v4177 = vpop.f32.mrb[0].mxu0
        %4178 = vmatprep.mubr.bf16.mxu0 0
        %4179 = vmatmul.mubr.bf16.gmra.mrb[0].mxu0 %v3681
        %v4180 = vpop.f32.mrb[0].mxu0
        %v4181 = vadd.f32 %v4020, %v4180
        %v4182 = vpop.f32.mrb[0].mxu0
        %v4183 = vpop.f32.mrb[0].mxu0
        %v4184 = vadd.f32 %v4023, %v4183
        %v4185 = vpop.f32.mrb[0].mxu0
        %4186 = vmatprep.mubr.bf16.mxu0 0
        %4187 = vmatmul.mubr.bf16.gmra.mrb[0].mxu0 %v3684
        %v4188 = vpop.f32.mrb[0].mxu0
        %v4189 = vadd.f32 %v4028, %v4188
        %v4190 = vpop.f32.mrb[0].mxu0
        %v4191 = vpop.f32.mrb[0].mxu0
        %v4192 = vadd.f32 %v4031, %v4191
        %v4193 = vpop.f32.mrb[0].mxu0
        %4194 = vmatprep.mubr.bf16.mxu0 0
        %4195 = vmatmul.mubr.bf16.gmra.mrb[0].mxu0 %v3687
        %v4196 = vpop.f32.mrb[0].mxu0
        %v4197 = vadd.f32 %v4036, %v4196
        %v4198 = vpop.f32.mrb[0].mxu0
        %v4199 = vpop.f32.mrb[0].mxu0
        %v4200 = vadd.f32 %v4039, %v4199
        %v4201 = vpop.f32.mrb[0].mxu0
        %4202 = vdwg.mxu0
        %v4203 = vld [vmem:[#allocation3] sm:$0xff]
        %v4204 = vld [vmem:[#allocation3 + $0x8] sm:$0xff]
        %v4205 = vld [vmem:[#allocation3 + $0x10] sm:$0xff]
        %v4206 = vld [vmem:[#allocation3 + $0x18] sm:$0xff]
        %v4207 = vld [vmem:[#allocation3 + $0x20] sm:$0xff]
        %v4208 = vld [vmem:[#allocation3 + $0x28] sm:$0xff]
        %v4209 = vld [vmem:[#allocation3 + $0x30] sm:$0xff]
        %v4210 = vld [vmem:[#allocation3 + $0x38] sm:$0xff]
        %v4211 = vld [vmem:[#allocation3 + $0x40] sm:$0xff]
        %v4212 = vld [vmem:[#allocation3 + $0x48] sm:$0xff]
        %v4213 = vld [vmem:[#allocation3 + $0x50] sm:$0xff]
        %v4214 = vld [vmem:[#allocation3 + $0x58] sm:$0xff]
        %v4215 = vld [vmem:[#allocation3 + $0x60] sm:$0xff]
        %v4216 = vld [vmem:[#allocation3 + $0x68] sm:$0xff]
        %v4217 = vld [vmem:[#allocation3 + $0x70] sm:$0xff]
        %v4218 = vld [vmem:[#allocation3 + $0x78] sm:$0xff]
        %v4219 = vld [vmem:[#allocation3 + $0x80] sm:$0xff]
        %v4220 = vld [vmem:[#allocation3 + $0x88] sm:$0xff]
        %v4221 = vld [vmem:[#allocation3 + $0x90] sm:$0xff]
        %v4222 = vld [vmem:[#allocation3 + $0x98] sm:$0xff]
        %v4223 = vld [vmem:[#allocation3 + $0xa0] sm:$0xff]
        %v4224 = vld [vmem:[#allocation3 + $0xa8] sm:$0xff]
        %v4225 = vld [vmem:[#allocation3 + $0xb0] sm:$0xff]
        %v4226 = vld [vmem:[#allocation3 + $0xb8] sm:$0xff]
        %v4227 = vld [vmem:[#allocation3 + $0xc0] sm:$0xff]
        %v4228 = vld [vmem:[#allocation3 + $0xc8] sm:$0xff]
        %v4229 = vld [vmem:[#allocation3 + $0xd0] sm:$0xff]
        %v4230 = vld [vmem:[#allocation3 + $0xd8] sm:$0xff]
        %v4231 = vld [vmem:[#allocation3 + $0xe0] sm:$0xff]
        %v4232 = vld [vmem:[#allocation3 + $0xe8] sm:$0xff]
        %v4233 = vld [vmem:[#allocation3 + $0xf0] sm:$0xff]
        %v4234 = vld [vmem:[#allocation3 + $0xf8] sm:$0xff]
        %v4235 = vadd.f32 %v4203, %v4077
        %v4236 = vadd.f32 %v4204, %v4080
        %v4237 = vadd.f32 %v4205, %v4085
        %v4238 = vadd.f32 %v4206, %v4088
        %v4239 = vadd.f32 %v4207, %v4093
        %v4240 = vadd.f32 %v4208, %v4096
        %v4241 = vadd.f32 %v4209, %v4101
        %v4242 = vadd.f32 %v4210, %v4104
        %v4243 = vadd.f32 %v4211, %v4109
        %v4244 = vadd.f32 %v4212, %v4112
        %v4245 = vadd.f32 %v4213, %v4117
        %v4246 = vadd.f32 %v4214, %v4120
        %v4247 = vadd.f32 %v4215, %v4125
        %v4248 = vadd.f32 %v4216, %v4128
        %v4249 = vadd.f32 %v4217, %v4133
        %v4250 = vadd.f32 %v4218, %v4136
        %v4251 = vadd.f32 %v4219, %v4141
        %v4252 = vadd.f32 %v4220, %v4144
        %v4253 = vadd.f32 %v4221, %v4149
        %v4254 = vadd.f32 %v4222, %v4152
        %v4255 = vadd.f32 %v4223, %v4157
        %v4256 = vadd.f32 %v4224, %v4160
        %v4257 = vadd.f32 %v4225, %v4165
        %v4258 = vadd.f32 %v4226, %v4168
        %v4259 = vadd.f32 %v4227, %v4173
        %v4260 = vadd.f32 %v4228, %v4176
        %v4261 = vadd.f32 %v4229, %v4181
        %v4262 = vadd.f32 %v4230, %v4184
        %v4263 = vadd.f32 %v4231, %v4189
        %v4264 = vadd.f32 %v4232, %v4192
        %v4265 = vadd.f32 %v4233, %v4197
        %v4266 = vadd.f32 %v4234, %v4200
        %4267 = vst [vmem:[#allocation3] sm:$0xff] %v4235
        %4268 = vst [vmem:[#allocation3 + $0x8] sm:$0xff] %v4236
        %4269 = vst [vmem:[#allocation3 + $0x10] sm:$0xff] %v4237
        %4270 = vst [vmem:[#allocation3 + $0x18] sm:$0xff] %v4238
        %4271 = vst [vmem:[#allocation3 + $0x20] sm:$0xff] %v4239
        %4272 = vst [vmem:[#allocation3 + $0x28] sm:$0xff] %v4240
        %4273 = vst [vmem:[#allocation3 + $0x30] sm:$0xff] %v4241
        %4274 = vst [vmem:[#allocation3 + $0x38] sm:$0xff] %v4242
        %4275 = vst [vmem:[#allocation3 + $0x40] sm:$0xff] %v4243
        %4276 = vst [vmem:[#allocation3 + $0x48] sm:$0xff] %v4244
        %4277 = vst [vmem:[#allocation3 + $0x50] sm:$0xff] %v4245
        %4278 = vst [vmem:[#allocation3 + $0x58] sm:$0xff] %v4246
        %4279 = vst [vmem:[#allocation3 + $0x60] sm:$0xff] %v4247
        %4280 = vst [vmem:[#allocation3 + $0x68] sm:$0xff] %v4248
        %4281 = vst [vmem:[#allocation3 + $0x70] sm:$0xff] %v4249
        %4282 = vst [vmem:[#allocation3 + $0x78] sm:$0xff] %v4250
        %4283 = vst [vmem:[#allocation3 + $0x80] sm:$0xff] %v4251
        %4284 = vst [vmem:[#allocation3 + $0x88] sm:$0xff] %v4252
        %4285 = vst [vmem:[#allocation3 + $0x90] sm:$0xff] %v4253
        %4286 = vst [vmem:[#allocation3 + $0x98] sm:$0xff] %v4254
        %4287 = vst [vmem:[#allocation3 + $0xa0] sm:$0xff] %v4255
        %4288 = vst [vmem:[#allocation3 + $0xa8] sm:$0xff] %v4256
        %4289 = vst [vmem:[#allocation3 + $0xb0] sm:$0xff] %v4257
        %4290 = vst [vmem:[#allocation3 + $0xb8] sm:$0xff] %v4258
        %4291 = vst [vmem:[#allocation3 + $0xc0] sm:$0xff] %v4259
        %4292 = vst [vmem:[#allocation3 + $0xc8] sm:$0xff] %v4260
        %4293 = vst [vmem:[#allocation3 + $0xd0] sm:$0xff] %v4261
        %4294 = vst [vmem:[#allocation3 + $0xd8] sm:$0xff] %v4262
        %4295 = vst [vmem:[#allocation3 + $0xe0] sm:$0xff] %v4263
        %4296 = vst [vmem:[#allocation3 + $0xe8] sm:$0xff] %v4264
        %4297 = vst [vmem:[#allocation3 + $0xf0] sm:$0xff] %v4265
        %4298 = vst [vmem:[#allocation3 + $0xf8] sm:$0xff] %v4266
        %v4299 = vld [vmem:[%s1979] sm:$0xff]
        %v4300 = vld [vmem:[%s1979 + $0x8] sm:$0xff]
        %v4301 = vld [vmem:[%s1979 + $0x10] sm:$0xff]
        %v4302 = vld [vmem:[%s1979 + $0x18] sm:$0xff]
        %v4303 = vld [vmem:[%s1979 + $0x20] sm:$0xff]
        %v4304 = vld [vmem:[%s1979 + $0x28] sm:$0xff]
        %v4305 = vld [vmem:[%s1979 + $0x30] sm:$0xff]
        %v4306 = vld [vmem:[%s1979 + $0x38] sm:$0xff]
        %v4307 = vld [vmem:[%s1979 + $0x40] sm:$0xff]
        %v4308 = vld [vmem:[%s1979 + $0x48] sm:$0xff]
        %v4309 = vld [vmem:[%s1979 + $0x50] sm:$0xff]
        %v4310 = vld [vmem:[%s1979 + $0x58] sm:$0xff]
        %v4311 = vld [vmem:[%s1979 + $0x60] sm:$0xff]
        %v4312 = vld [vmem:[%s1979 + $0x68] sm:$0xff]
        %v4313 = vld [vmem:[%s1979 + $0x70] sm:$0xff]
        %v4314 = vld [vmem:[%s1979 + $0x78] sm:$0xff]
        %v4315 = vld [vmem:[%s1979 + $0x80] sm:$0xff]
        %v4316 = vld [vmem:[%s1979 + $0x88] sm:$0xff]
        %v4317 = vld [vmem:[%s1979 + $0x90] sm:$0xff]
        %v4318 = vld [vmem:[%s1979 + $0x98] sm:$0xff]
        %v4319 = vld [vmem:[%s1979 + $0xa0] sm:$0xff]
        %v4320 = vld [vmem:[%s1979 + $0xa8] sm:$0xff]
        %v4321 = vld [vmem:[%s1979 + $0xb0] sm:$0xff]
        %v4322 = vld [vmem:[%s1979 + $0xb8] sm:$0xff]
        %v4323 = vld [vmem:[%s1979 + $0xc0] sm:$0xff]
        %v4324 = vld [vmem:[%s1979 + $0xc8] sm:$0xff]
        %v4325 = vld [vmem:[%s1979 + $0xd0] sm:$0xff]
        %v4326 = vld [vmem:[%s1979 + $0xd8] sm:$0xff]
        %v4327 = vld [vmem:[%s1979 + $0xe0] sm:$0xff]
        %v4328 = vld [vmem:[%s1979 + $0xe8] sm:$0xff]
        %v4329 = vld [vmem:[%s1979 + $0xf0] sm:$0xff]
        %v4330 = vld [vmem:[%s1979 + $0xf8] sm:$0xff]
        %v4331 = vld [vmem:[%s1979 + $0x100] sm:$0xff]
        %v4332 = vld [vmem:[%s1979 + $0x108] sm:$0xff]
        %v4333 = vld [vmem:[%s1979 + $0x110] sm:$0xff]
        %v4334 = vld [vmem:[%s1979 + $0x118] sm:$0xff]
        %v4335 = vld [vmem:[%s1979 + $0x120] sm:$0xff]
        %v4336 = vld [vmem:[%s1979 + $0x128] sm:$0xff]
        %v4337 = vld [vmem:[%s1979 + $0x130] sm:$0xff]
        %v4338 = vld [vmem:[%s1979 + $0x138] sm:$0xff]
        %v4339 = vld [vmem:[%s1979 + $0x140] sm:$0xff]
        %v4340 = vld [vmem:[%s1979 + $0x148] sm:$0xff]
        %v4341 = vld [vmem:[%s1979 + $0x150] sm:$0xff]
        %v4342 = vld [vmem:[%s1979 + $0x158] sm:$0xff]
        %v4343 = vld [vmem:[%s1979 + $0x160] sm:$0xff]
        %v4344 = vld [vmem:[%s1979 + $0x168] sm:$0xff]
        %v4345 = vld [vmem:[%s1979 + $0x170] sm:$0xff]
        %v4346 = vld [vmem:[%s1979 + $0x178] sm:$0xff]
        %s4347 = scalar_lea.vmem [#allocation8], 384
        %v4348 = vld [vmem:[%s4347] sm:$0xf]
        %v4349 = vld [vmem:[%s4347 + $0x4] sm:$0xf]
        %v4350 = vld [vmem:[%s4347 + $0x8] sm:$0xf]
        %v4351 = vld [vmem:[%s4347 + $0xc] sm:$0xf]
        %v4352 = vld [vmem:[%s4347 + $0x10] sm:$0xf]
        %v4353 = vld [vmem:[%s4347 + $0x14] sm:$0xf]
        %v4354 = vld [vmem:[%s4347 + $0x18] sm:$0xf]
        %v4355 = vld [vmem:[%s4347 + $0x1c] sm:$0xf]
        %v4356 = vld [vmem:[%s4347 + $0x20] sm:$0xf]
        %v4357 = vld [vmem:[%s4347 + $0x24] sm:$0xf]
        %v4358 = vld [vmem:[%s4347 + $0x28] sm:$0xf]
        %v4359 = vld [vmem:[%s4347 + $0x2c] sm:$0xf]
        %v4360 = vld [vmem:[%s4347 + $0x30] sm:$0xf]
        %v4361 = vld [vmem:[%s4347 + $0x34] sm:$0xf]
        %v4362 = vld [vmem:[%s4347 + $0x38] sm:$0xf]
        %v4363 = vld [vmem:[%s4347 + $0x3c] sm:$0xf]
        %v4364 = vld [vmem:[%s4347 + $0x40] sm:$0xf]
        %v4365 = vld [vmem:[%s4347 + $0x44] sm:$0xf]
        %v4366 = vld [vmem:[%s4347 + $0x48] sm:$0xf]
        %v4367 = vld [vmem:[%s4347 + $0x4c] sm:$0xf]
        %v4368 = vld [vmem:[%s4347 + $0x50] sm:$0xf]
        %v4369 = vld [vmem:[%s4347 + $0x54] sm:$0xf]
        %v4370 = vld [vmem:[%s4347 + $0x58] sm:$0xf]
        %v4371 = vld [vmem:[%s4347 + $0x5c] sm:$0xf]
        %v4372 = vld [vmem:[%s4347 + $0x60] sm:$0xf]
        %v4373 = vld [vmem:[%s4347 + $0x64] sm:$0xf]
        %v4374 = vld [vmem:[%s4347 + $0x68] sm:$0xf]
        %v4375 = vld [vmem:[%s4347 + $0x6c] sm:$0xf]
        %v4376 = vld [vmem:[%s4347 + $0x70] sm:$0xf]
        %v4377 = vld [vmem:[%s4347 + $0x74] sm:$0xf]
        %v4378 = vld [vmem:[%s4347 + $0x78] sm:$0xf]
        %v4379 = vld [vmem:[%s4347 + $0x7c] sm:$0xf]
        %v4380 = vld [vmem:[%s4347 + $0x80] sm:$0xf]
        %v4381 = vld [vmem:[%s4347 + $0x84] sm:$0xf]
        %v4382 = vld [vmem:[%s4347 + $0x88] sm:$0xf]
        %v4383 = vld [vmem:[%s4347 + $0x8c] sm:$0xf]
        %v4384 = vld [vmem:[%s4347 + $0x90] sm:$0xf]
        %v4385 = vld [vmem:[%s4347 + $0x94] sm:$0xf]
        %v4386 = vld [vmem:[%s4347 + $0x98] sm:$0xf]
        %v4387 = vld [vmem:[%s4347 + $0x9c] sm:$0xf]
        %v4388 = vld [vmem:[%s4347 + $0xa0] sm:$0xf]
        %v4389 = vld [vmem:[%s4347 + $0xa4] sm:$0xf]
        %v4390 = vld [vmem:[%s4347 + $0xa8] sm:$0xf]
        %v4391 = vld [vmem:[%s4347 + $0xac] sm:$0xf]
        %v4392 = vld [vmem:[%s4347 + $0xb0] sm:$0xf]
        %v4393 = vld [vmem:[%s4347 + $0xb4] sm:$0xf]
        %v4394 = vld [vmem:[%s4347 + $0xb8] sm:$0xf]
        %v4395 = vld [vmem:[%s4347 + $0xbc] sm:$0xf]
        %v4444 = vunpack.c.l.b16 %v4348
        %v4445 = vunpack.c.l.b16 %v4349
        %v4446 = vunpack.c.l.b16 %v4350
        %v4447 = vunpack.c.l.b16 %v4351
        %v4448 = vunpack.c.l.b16 %v4352
        %v4449 = vunpack.c.l.b16 %v4353
        %v4450 = vunpack.c.l.b16 %v4354
        %v4451 = vunpack.c.l.b16 %v4355
        %v4452 = vunpack.c.l.b16 %v4356
        %v4453 = vunpack.c.l.b16 %v4357
        %v4454 = vunpack.c.l.b16 %v4358
        %v4455 = vunpack.c.l.b16 %v4359
        %v4456 = vunpack.c.l.b16 %v4360
        %v4457 = vunpack.c.l.b16 %v4361
        %v4458 = vunpack.c.l.b16 %v4362
        %v4459 = vunpack.c.l.b16 %v4363
        %v4460 = vunpack.c.l.b16 %v4364
        %v4461 = vunpack.c.l.b16 %v4365
        %v4462 = vunpack.c.l.b16 %v4366
        %v4463 = vunpack.c.l.b16 %v4367
        %v4464 = vunpack.c.l.b16 %v4368
        %v4465 = vunpack.c.l.b16 %v4369
        %v4466 = vunpack.c.l.b16 %v4370
        %v4467 = vunpack.c.l.b16 %v4371
        %v4468 = vunpack.c.l.b16 %v4372
        %v4469 = vunpack.c.l.b16 %v4373
        %v4470 = vunpack.c.l.b16 %v4374
        %v4471 = vunpack.c.l.b16 %v4375
        %v4472 = vunpack.c.l.b16 %v4376
        %v4473 = vunpack.c.l.b16 %v4377
        %v4474 = vunpack.c.l.b16 %v4378
        %v4475 = vunpack.c.l.b16 %v4379
        %v4476 = vunpack.c.l.b16 %v4380
        %v4477 = vunpack.c.l.b16 %v4381
        %v4478 = vunpack.c.l.b16 %v4382
        %v4479 = vunpack.c.l.b16 %v4383
        %v4480 = vunpack.c.l.b16 %v4384
        %v4481 = vunpack.c.l.b16 %v4385
        %v4482 = vunpack.c.l.b16 %v4386
        %v4483 = vunpack.c.l.b16 %v4387
        %v4484 = vunpack.c.l.b16 %v4388
        %v4485 = vunpack.c.l.b16 %v4389
        %v4486 = vunpack.c.l.b16 %v4390
        %v4487 = vunpack.c.l.b16 %v4391
        %v4488 = vunpack.c.l.b16 %v4392
        %v4489 = vunpack.c.l.b16 %v4393
        %v4490 = vunpack.c.l.b16 %v4394
        %v4491 = vunpack.c.l.b16 %v4395
        %v4492 = vpack.c.b16 %v4445, %v4444
        %v4493 = vpack.c.b16 %v4447, %v4446
        %v4494 = vpack.c.b16 %v4449, %v4448
        %v4495 = vpack.c.b16 %v4451, %v4450
        %v4496 = vpack.c.b16 %v4453, %v4452
        %v4497 = vpack.c.b16 %v4455, %v4454
        %v4498 = vpack.c.b16 %v4457, %v4456
        %v4499 = vpack.c.b16 %v4459, %v4458
        %v4500 = vpack.c.b16 %v4461, %v4460
        %v4501 = vpack.c.b16 %v4463, %v4462
        %v4502 = vpack.c.b16 %v4465, %v4464
        %v4503 = vpack.c.b16 %v4467, %v4466
        %v4504 = vpack.c.b16 %v4469, %v4468
        %v4505 = vpack.c.b16 %v4471, %v4470
        %v4506 = vpack.c.b16 %v4473, %v4472
        %v4507 = vpack.c.b16 %v4475, %v4474
        %v4508 = vpack.c.b16 %v4477, %v4476
        %v4509 = vpack.c.b16 %v4479, %v4478
        %v4510 = vpack.c.b16 %v4481, %v4480
        %v4511 = vpack.c.b16 %v4483, %v4482
        %v4512 = vpack.c.b16 %v4485, %v4484
        %v4513 = vpack.c.b16 %v4487, %v4486
        %v4514 = vpack.c.b16 %v4489, %v4488
        %v4515 = vpack.c.b16 %v4491, %v4490
        %4540 = vmatprep.subr.bf16.mxu0 0
        %4541 = vmatpush1.bf16.msra.mxu0 %v4492
        %4542 = vmatprep.subr.bf16.mxu0 0
        %4543 = vmatpush1.bf16.msra.mxu0 %v4493
        %4544 = vmatprep.subr.bf16.mxu0 0
        %4545 = vmatpush1.bf16.msra.mxu0 %v4494
        %4546 = vmatprep.subr.bf16.mxu0 0
        %4547 = vmatpush1.bf16.msra.mxu0 %v4495
        %4548 = vmatprep.subr.bf16.mxu0 0
        %4549 = vmatpush1.bf16.msra.mxu0 %v4496
        %4550 = vmatprep.subr.bf16.mxu0 0
        %4551 = vmatpush1.bf16.msra.mxu0 %v4497
        %4552 = vmatprep.subr.bf16.mxu0 0
        %4553 = vmatpush1.bf16.msra.mxu0 %v4498
        %4554 = vmatprep.subr.bf16.mxu0 0
        %4555 = vmatpush1.bf16.msra.mxu0 %v4499
        %4556 = vmatprep.subr.bf16.mxu0 0
        %4557 = vmatpush1.bf16.msra.mxu0 %v4500
        %4558 = vmatprep.subr.bf16.mxu0 0
        %4559 = vmatpush1.bf16.msra.mxu0 %v4501
        %4560 = vmatprep.subr.bf16.mxu0 0
        %4561 = vmatpush1.bf16.msra.mxu0 %v4502
        %4562 = vmatprep.subr.bf16.mxu0 0
        %4563 = vmatpush1.bf16.msra.mxu0 %v4503
        %4564 = vmatprep.subr.bf16.mxu0 0
        %4565 = vmatpush1.bf16.msra.mxu0 %v4504
        %4566 = vmatprep.subr.bf16.mxu0 0
        %4567 = vmatpush1.bf16.msra.mxu0 %v4505
        %4568 = vmatprep.subr.bf16.mxu0 0
        %4569 = vmatpush1.bf16.msra.mxu0 %v4506
        %4570 = vmatprep.subr.bf16.mxu0 0
        %4571 = vmatpush1.bf16.msra.mxu0 %v4507
        %4572 = vmatprep.mubr.bf16.mxu0 %v4300
        %4573 = vmatmul.mubr.bf16.gmra.mrb[0].mxu0 %v4299
        %v4574 = vpop.f32.mrb[0].mxu0
        %v4575 = vadd.f32 0.0, %v4574
        %v4576 = vpop.f32.mrb[0].mxu0
        %v4577 = vpop.f32.mrb[0].mxu0
        %v4578 = vadd.f32 0.0, %v4577
        %v4579 = vpop.f32.mrb[0].mxu0
        %4580 = vmatprep.mubr.bf16.mxu0 %v4303
        %4581 = vmatmul.mubr.bf16.gmra.mrb[0].mxu0 %v4302
        %v4582 = vpop.f32.mrb[0].mxu0
        %v4583 = vadd.f32 0.0, %v4582
        %v4584 = vpop.f32.mrb[0].mxu0
        %v4585 = vpop.f32.mrb[0].mxu0
        %v4586 = vadd.f32 0.0, %v4585
        %v4587 = vpop.f32.mrb[0].mxu0
        %4588 = vmatprep.mubr.bf16.mxu0 %v4306
        %4589 = vmatmul.mubr.bf16.gmra.mrb[0].mxu0 %v4305
        %v4590 = vpop.f32.mrb[0].mxu0
        %v4591 = vadd.f32 0.0, %v4590
        %v4592 = vpop.f32.mrb[0].mxu0
        %v4593 = vpop.f32.mrb[0].mxu0
        %v4594 = vadd.f32 0.0, %v4593
        %v4595 = vpop.f32.mrb[0].mxu0
        %4596 = vmatprep.mubr.bf16.mxu0 %v4309
        %4597 = vmatmul.mubr.bf16.gmra.mrb[0].mxu0 %v4308
        %v4598 = vpop.f32.mrb[0].mxu0
        %v4599 = vadd.f32 0.0, %v4598
        %v4600 = vpop.f32.mrb[0].mxu0
        %v4601 = vpop.f32.mrb[0].mxu0
        %v4602 = vadd.f32 0.0, %v4601
        %v4603 = vpop.f32.mrb[0].mxu0
        %4604 = vmatprep.mubr.bf16.mxu0 %v4312
        %4605 = vmatmul.mubr.bf16.gmra.mrb[0].mxu0 %v4311
        %v4606 = vpop.f32.mrb[0].mxu0
        %v4607 = vadd.f32 0.0, %v4606
        %v4608 = vpop.f32.mrb[0].mxu0
        %v4609 = vpop.f32.mrb[0].mxu0
        %v4610 = vadd.f32 0.0, %v4609
        %v4611 = vpop.f32.mrb[0].mxu0
        %4612 = vmatprep.mubr.bf16.mxu0 %v4315
        %4613 = vmatmul.mubr.bf16.gmra.mrb[0].mxu0 %v4314
        %v4614 = vpop.f32.mrb[0].mxu0
        %v4615 = vadd.f32 0.0, %v4614
        %v4616 = vpop.f32.mrb[0].mxu0
        %v4617 = vpop.f32.mrb[0].mxu0
        %v4618 = vadd.f32 0.0, %v4617
        %v4619 = vpop.f32.mrb[0].mxu0
        %4620 = vmatprep.mubr.bf16.mxu0 %v4318
        %4621 = vmatmul.mubr.bf16.gmra.mrb[0].mxu0 %v4317
        %v4622 = vpop.f32.mrb[0].mxu0
        %v4623 = vadd.f32 0.0, %v4622
        %v4624 = vpop.f32.mrb[0].mxu0
        %v4625 = vpop.f32.mrb[0].mxu0
        %v4626 = vadd.f32 0.0, %v4625
        %v4627 = vpop.f32.mrb[0].mxu0
        %4628 = vmatprep.mubr.bf16.mxu0 %v4321
        %4629 = vmatmul.mubr.bf16.gmra.mrb[0].mxu0 %v4320
        %v4630 = vpop.f32.mrb[0].mxu0
        %v4631 = vadd.f32 0.0, %v4630
        %v4632 = vpop.f32.mrb[0].mxu0
        %v4633 = vpop.f32.mrb[0].mxu0
        %v4634 = vadd.f32 0.0, %v4633
        %v4635 = vpop.f32.mrb[0].mxu0
        %4636 = vmatprep.mubr.bf16.mxu0 %v4324
        %4637 = vmatmul.mubr.bf16.gmra.mrb[0].mxu0 %v4323
        %v4638 = vpop.f32.mrb[0].mxu0
        %v4639 = vadd.f32 0.0, %v4638
        %v4640 = vpop.f32.mrb[0].mxu0
        %v4641 = vpop.f32.mrb[0].mxu0
        %v4642 = vadd.f32 0.0, %v4641
        %v4643 = vpop.f32.mrb[0].mxu0
        %4644 = vmatprep.mubr.bf16.mxu0 %v4327
        %4645 = vmatmul.mubr.bf16.gmra.mrb[0].mxu0 %v4326
        %v4646 = vpop.f32.mrb[0].mxu0
        %v4647 = vadd.f32 0.0, %v4646
        %v4648 = vpop.f32.mrb[0].mxu0
        %v4649 = vpop.f32.mrb[0].mxu0
        %v4650 = vadd.f32 0.0, %v4649
        %v4651 = vpop.f32.mrb[0].mxu0
        %4652 = vmatprep.mubr.bf16.mxu0 %v4330
        %4653 = vmatmul.mubr.bf16.gmra.mrb[0].mxu0 %v4329
        %v4654 = vpop.f32.mrb[0].mxu0
        %v4655 = vadd.f32 0.0, %v4654
        %v4656 = vpop.f32.mrb[0].mxu0
        %v4657 = vpop.f32.mrb[0].mxu0
        %v4658 = vadd.f32 0.0, %v4657
        %v4659 = vpop.f32.mrb[0].mxu0
        %4660 = vmatprep.mubr.bf16.mxu0 %v4333
        %4661 = vmatmul.mubr.bf16.gmra.mrb[0].mxu0 %v4332
        %v4662 = vpop.f32.mrb[0].mxu0
        %v4663 = vadd.f32 0.0, %v4662
        %v4664 = vpop.f32.mrb[0].mxu0
        %v4665 = vpop.f32.mrb[0].mxu0
        %v4666 = vadd.f32 0.0, %v4665
        %v4667 = vpop.f32.mrb[0].mxu0
        %4668 = vmatprep.mubr.bf16.mxu0 %v4336
        %4669 = vmatmul.mubr.bf16.gmra.mrb[0].mxu0 %v4335
        %v4670 = vpop.f32.mrb[0].mxu0
        %v4671 = vadd.f32 0.0, %v4670
        %v4672 = vpop.f32.mrb[0].mxu0
        %v4673 = vpop.f32.mrb[0].mxu0
        %v4674 = vadd.f32 0.0, %v4673
        %v4675 = vpop.f32.mrb[0].mxu0
        %4676 = vmatprep.mubr.bf16.mxu0 %v4339
        %4677 = vmatmul.mubr.bf16.gmra.mrb[0].mxu0 %v4338
        %v4678 = vpop.f32.mrb[0].mxu0
        %v4679 = vadd.f32 0.0, %v4678
        %v4680 = vpop.f32.mrb[0].mxu0
        %v4681 = vpop.f32.mrb[0].mxu0
        %v4682 = vadd.f32 0.0, %v4681
        %v4683 = vpop.f32.mrb[0].mxu0
        %4684 = vmatprep.mubr.bf16.mxu0 %v4342
        %4685 = vmatmul.mubr.bf16.gmra.mrb[0].mxu0 %v4341
        %v4686 = vpop.f32.mrb[0].mxu0
        %v4687 = vadd.f32 0.0, %v4686
        %v4688 = vpop.f32.mrb[0].mxu0
        %v4689 = vpop.f32.mrb[0].mxu0
        %v4690 = vadd.f32 0.0, %v4689
        %v4691 = vpop.f32.mrb[0].mxu0
        %4692 = vmatprep.mubr.bf16.mxu0 %v4345
        %4693 = vmatmul.mubr.bf16.gmra.mrb[0].mxu0 %v4344
        %v4694 = vpop.f32.mrb[0].mxu0
        %v4695 = vadd.f32 0.0, %v4694
        %v4696 = vpop.f32.mrb[0].mxu0
        %v4697 = vpop.f32.mrb[0].mxu0
        %v4698 = vadd.f32 0.0, %v4697
        %v4699 = vpop.f32.mrb[0].mxu0
        %4700 = vdwg.mxu0
        %4701 = vmatprep.subr.bf16.mxu0 0
        %4702 = vmatpush1.bf16.msra.mxu0 %v4508
        %4703 = vmatprep.subr.bf16.mxu0 0
        %4704 = vmatpush1.bf16.msra.mxu0 %v4509
        %4705 = vmatprep.subr.bf16.mxu0 0
        %4706 = vmatpush1.bf16.msra.mxu0 %v4510
        %4707 = vmatprep.subr.bf16.mxu0 0
        %4708 = vmatpush1.bf16.msra.mxu0 %v4511
        %4709 = vmatprep.subr.bf16.mxu0 0
        %4710 = vmatpush1.bf16.msra.mxu0 %v4512
        %4711 = vmatprep.subr.bf16.mxu0 0
        %4712 = vmatpush1.bf16.msra.mxu0 %v4513
        %4713 = vmatprep.subr.bf16.mxu0 0
        %4714 = vmatpush1.bf16.msra.mxu0 %v4514
        %4715 = vmatprep.subr.bf16.mxu0 0
        %4716 = vmatpush1.bf16.msra.mxu0 %v4515
        %4717 = vmatprep.subr.bf16.mxu0 0
        %4718 = vmatpush1.bf16.msra.mxu0 0
        %4719 = vmatprep.subr.bf16.mxu0 0
        %4720 = vmatpush1.bf16.msra.mxu0 0
        %4721 = vmatprep.subr.bf16.mxu0 0
        %4722 = vmatpush1.bf16.msra.mxu0 0
        %4723 = vmatprep.subr.bf16.mxu0 0
        %4724 = vmatpush1.bf16.msra.mxu0 0
        %4725 = vmatprep.subr.bf16.mxu0 0
        %4726 = vmatpush1.bf16.msra.mxu0 0
        %4727 = vmatprep.subr.bf16.mxu0 0
        %4728 = vmatpush1.bf16.msra.mxu0 0
        %4729 = vmatprep.subr.bf16.mxu0 0
        %4730 = vmatpush1.bf16.msra.mxu0 0
        %4731 = vmatprep.subr.bf16.mxu0 0
        %4732 = vmatpush1.bf16.msra.mxu0 0
        %4733 = vmatprep.mubr.bf16.mxu0 0
        %4734 = vmatmul.mubr.bf16.gmra.mrb[0].mxu0 %v4301
        %v4735 = vpop.f32.mrb[0].mxu0
        %v4736 = vadd.f32 %v4575, %v4735
        %v4737 = vpop.f32.mrb[0].mxu0
        %v4738 = vpop.f32.mrb[0].mxu0
        %v4739 = vadd.f32 %v4578, %v4738
        %v4740 = vpop.f32.mrb[0].mxu0
        %4741 = vmatprep.mubr.bf16.mxu0 0
        %4742 = vmatmul.mubr.bf16.gmra.mrb[0].mxu0 %v4304
        %v4743 = vpop.f32.mrb[0].mxu0
        %v4744 = vadd.f32 %v4583, %v4743
        %v4745 = vpop.f32.mrb[0].mxu0
        %v4746 = vpop.f32.mrb[0].mxu0
        %v4747 = vadd.f32 %v4586, %v4746
        %v4748 = vpop.f32.mrb[0].mxu0
        %4749 = vmatprep.mubr.bf16.mxu0 0
        %4750 = vmatmul.mubr.bf16.gmra.mrb[0].mxu0 %v4307
        %v4751 = vpop.f32.mrb[0].mxu0
        %v4752 = vadd.f32 %v4591, %v4751
        %v4753 = vpop.f32.mrb[0].mxu0
        %v4754 = vpop.f32.mrb[0].mxu0
        %v4755 = vadd.f32 %v4594, %v4754
        %v4756 = vpop.f32.mrb[0].mxu0
        %4757 = vmatprep.mubr.bf16.mxu0 0
        %4758 = vmatmul.mubr.bf16.gmra.mrb[0].mxu0 %v4310
        %v4759 = vpop.f32.mrb[0].mxu0
        %v4760 = vadd.f32 %v4599, %v4759
        %v4761 = vpop.f32.mrb[0].mxu0
        %v4762 = vpop.f32.mrb[0].mxu0
        %v4763 = vadd.f32 %v4602, %v4762
        %v4764 = vpop.f32.mrb[0].mxu0
        %4765 = vmatprep.mubr.bf16.mxu0 0
        %4766 = vmatmul.mubr.bf16.gmra.mrb[0].mxu0 %v4313
        %v4767 = vpop.f32.mrb[0].mxu0
        %v4768 = vadd.f32 %v4607, %v4767
        %v4769 = vpop.f32.mrb[0].mxu0
        %v4770 = vpop.f32.mrb[0].mxu0
        %v4771 = vadd.f32 %v4610, %v4770
        %v4772 = vpop.f32.mrb[0].mxu0
        %4773 = vmatprep.mubr.bf16.mxu0 0
        %4774 = vmatmul.mubr.bf16.gmra.mrb[0].mxu0 %v4316
        %v4775 = vpop.f32.mrb[0].mxu0
        %v4776 = vadd.f32 %v4615, %v4775
        %v4777 = vpop.f32.mrb[0].mxu0
        %v4778 = vpop.f32.mrb[0].mxu0
        %v4779 = vadd.f32 %v4618, %v4778
        %v4780 = vpop.f32.mrb[0].mxu0
        %4781 = vmatprep.mubr.bf16.mxu0 0
        %4782 = vmatmul.mubr.bf16.gmra.mrb[0].mxu0 %v4319
        %v4783 = vpop.f32.mrb[0].mxu0
        %v4784 = vadd.f32 %v4623, %v4783
        %v4785 = vpop.f32.mrb[0].mxu0
        %v4786 = vpop.f32.mrb[0].mxu0
        %v4787 = vadd.f32 %v4626, %v4786
        %v4788 = vpop.f32.mrb[0].mxu0
        %4789 = vmatprep.mubr.bf16.mxu0 0
        %4790 = vmatmul.mubr.bf16.gmra.mrb[0].mxu0 %v4322
        %v4791 = vpop.f32.mrb[0].mxu0
        %v4792 = vadd.f32 %v4631, %v4791
        %v4793 = vpop.f32.mrb[0].mxu0
        %v4794 = vpop.f32.mrb[0].mxu0
        %v4795 = vadd.f32 %v4634, %v4794
        %v4796 = vpop.f32.mrb[0].mxu0
        %4797 = vmatprep.mubr.bf16.mxu0 0
        %4798 = vmatmul.mubr.bf16.gmra.mrb[0].mxu0 %v4325
        %v4799 = vpop.f32.mrb[0].mxu0
        %v4800 = vadd.f32 %v4639, %v4799
        %v4801 = vpop.f32.mrb[0].mxu0
        %v4802 = vpop.f32.mrb[0].mxu0
        %v4803 = vadd.f32 %v4642, %v4802
        %v4804 = vpop.f32.mrb[0].mxu0
        %4805 = vmatprep.mubr.bf16.mxu0 0
        %4806 = vmatmul.mubr.bf16.gmra.mrb[0].mxu0 %v4328
        %v4807 = vpop.f32.mrb[0].mxu0
        %v4808 = vadd.f32 %v4647, %v4807
        %v4809 = vpop.f32.mrb[0].mxu0
        %v4810 = vpop.f32.mrb[0].mxu0
        %v4811 = vadd.f32 %v4650, %v4810
        %v4812 = vpop.f32.mrb[0].mxu0
        %4813 = vmatprep.mubr.bf16.mxu0 0
        %4814 = vmatmul.mubr.bf16.gmra.mrb[0].mxu0 %v4331
        %v4815 = vpop.f32.mrb[0].mxu0
        %v4816 = vadd.f32 %v4655, %v4815
        %v4817 = vpop.f32.mrb[0].mxu0
        %v4818 = vpop.f32.mrb[0].mxu0
        %v4819 = vadd.f32 %v4658, %v4818
        %v4820 = vpop.f32.mrb[0].mxu0
        %4821 = vmatprep.mubr.bf16.mxu0 0
        %4822 = vmatmul.mubr.bf16.gmra.mrb[0].mxu0 %v4334
        %v4823 = vpop.f32.mrb[0].mxu0
        %v4824 = vadd.f32 %v4663, %v4823
        %v4825 = vpop.f32.mrb[0].mxu0
        %v4826 = vpop.f32.mrb[0].mxu0
        %v4827 = vadd.f32 %v4666, %v4826
        %v4828 = vpop.f32.mrb[0].mxu0
        %4829 = vmatprep.mubr.bf16.mxu0 0
        %4830 = vmatmul.mubr.bf16.gmra.mrb[0].mxu0 %v4337
        %v4831 = vpop.f32.mrb[0].mxu0
        %v4832 = vadd.f32 %v4671, %v4831
        %v4833 = vpop.f32.mrb[0].mxu0
        %v4834 = vpop.f32.mrb[0].mxu0
        %v4835 = vadd.f32 %v4674, %v4834
        %v4836 = vpop.f32.mrb[0].mxu0
        %4837 = vmatprep.mubr.bf16.mxu0 0
        %4838 = vmatmul.mubr.bf16.gmra.mrb[0].mxu0 %v4340
        %v4839 = vpop.f32.mrb[0].mxu0
        %v4840 = vadd.f32 %v4679, %v4839
        %v4841 = vpop.f32.mrb[0].mxu0
        %v4842 = vpop.f32.mrb[0].mxu0
        %v4843 = vadd.f32 %v4682, %v4842
        %v4844 = vpop.f32.mrb[0].mxu0
        %4845 = vmatprep.mubr.bf16.mxu0 0
        %4846 = vmatmul.mubr.bf16.gmra.mrb[0].mxu0 %v4343
        %v4847 = vpop.f32.mrb[0].mxu0
        %v4848 = vadd.f32 %v4687, %v4847
        %v4849 = vpop.f32.mrb[0].mxu0
        %v4850 = vpop.f32.mrb[0].mxu0
        %v4851 = vadd.f32 %v4690, %v4850
        %v4852 = vpop.f32.mrb[0].mxu0
        %4853 = vmatprep.mubr.bf16.mxu0 0
        %4854 = vmatmul.mubr.bf16.gmra.mrb[0].mxu0 %v4346
        %v4855 = vpop.f32.mrb[0].mxu0
        %v4856 = vadd.f32 %v4695, %v4855
        %v4857 = vpop.f32.mrb[0].mxu0
        %v4858 = vpop.f32.mrb[0].mxu0
        %v4859 = vadd.f32 %v4698, %v4858
        %v4860 = vpop.f32.mrb[0].mxu0
        %4861 = vdwg.mxu0
        %v4862 = vld [vmem:[#allocation3] sm:$0xff]
        %v4863 = vld [vmem:[#allocation3 + $0x8] sm:$0xff]
        %v4864 = vld [vmem:[#allocation3 + $0x10] sm:$0xff]
        %v4865 = vld [vmem:[#allocation3 + $0x18] sm:$0xff]
        %v4866 = vld [vmem:[#allocation3 + $0x20] sm:$0xff]
        %v4867 = vld [vmem:[#allocation3 + $0x28] sm:$0xff]
        %v4868 = vld [vmem:[#allocation3 + $0x30] sm:$0xff]
        %v4869 = vld [vmem:[#allocation3 + $0x38] sm:$0xff]
        %v4870 = vld [vmem:[#allocation3 + $0x40] sm:$0xff]
        %v4871 = vld [vmem:[#allocation3 + $0x48] sm:$0xff]
        %v4872 = vld [vmem:[#allocation3 + $0x50] sm:$0xff]
        %v4873 = vld [vmem:[#allocation3 + $0x58] sm:$0xff]
        %v4874 = vld [vmem:[#allocation3 + $0x60] sm:$0xff]
        %v4875 = vld [vmem:[#allocation3 + $0x68] sm:$0xff]
        %v4876 = vld [vmem:[#allocation3 + $0x70] sm:$0xff]
        %v4877 = vld [vmem:[#allocation3 + $0x78] sm:$0xff]
        %v4878 = vld [vmem:[#allocation3 + $0x80] sm:$0xff]
        %v4879 = vld [vmem:[#allocation3 + $0x88] sm:$0xff]
        %v4880 = vld [vmem:[#allocation3 + $0x90] sm:$0xff]
        %v4881 = vld [vmem:[#allocation3 + $0x98] sm:$0xff]
        %v4882 = vld [vmem:[#allocation3 + $0xa0] sm:$0xff]
        %v4883 = vld [vmem:[#allocation3 + $0xa8] sm:$0xff]
        %v4884 = vld [vmem:[#allocation3 + $0xb0] sm:$0xff]
        %v4885 = vld [vmem:[#allocation3 + $0xb8] sm:$0xff]
        %v4886 = vld [vmem:[#allocation3 + $0xc0] sm:$0xff]
        %v4887 = vld [vmem:[#allocation3 + $0xc8] sm:$0xff]
        %v4888 = vld [vmem:[#allocation3 + $0xd0] sm:$0xff]
        %v4889 = vld [vmem:[#allocation3 + $0xd8] sm:$0xff]
        %v4890 = vld [vmem:[#allocation3 + $0xe0] sm:$0xff]
        %v4891 = vld [vmem:[#allocation3 + $0xe8] sm:$0xff]
        %v4892 = vld [vmem:[#allocation3 + $0xf0] sm:$0xff]
        %v4893 = vld [vmem:[#allocation3 + $0xf8] sm:$0xff]
        %v4894 = vadd.f32 %v4862, %v4736
        %v4895 = vadd.f32 %v4863, %v4739
        %v4896 = vadd.f32 %v4864, %v4744
        %v4897 = vadd.f32 %v4865, %v4747
        %v4898 = vadd.f32 %v4866, %v4752
        %v4899 = vadd.f32 %v4867, %v4755
        %v4900 = vadd.f32 %v4868, %v4760
        %v4901 = vadd.f32 %v4869, %v4763
        %v4902 = vadd.f32 %v4870, %v4768
        %v4903 = vadd.f32 %v4871, %v4771
        %v4904 = vadd.f32 %v4872, %v4776
        %v4905 = vadd.f32 %v4873, %v4779
        %v4906 = vadd.f32 %v4874, %v4784
        %v4907 = vadd.f32 %v4875, %v4787
        %v4908 = vadd.f32 %v4876, %v4792
        %v4909 = vadd.f32 %v4877, %v4795
        %v4910 = vadd.f32 %v4878, %v4800
        %v4911 = vadd.f32 %v4879, %v4803
        %v4912 = vadd.f32 %v4880, %v4808
        %v4913 = vadd.f32 %v4881, %v4811
        %v4914 = vadd.f32 %v4882, %v4816
        %v4915 = vadd.f32 %v4883, %v4819
        %v4916 = vadd.f32 %v4884, %v4824
        %v4917 = vadd.f32 %v4885, %v4827
        %v4918 = vadd.f32 %v4886, %v4832
        %v4919 = vadd.f32 %v4887, %v4835
        %v4920 = vadd.f32 %v4888, %v4840
        %v4921 = vadd.f32 %v4889, %v4843
        %v4922 = vadd.f32 %v4890, %v4848
        %v4923 = vadd.f32 %v4891, %v4851
        %v4924 = vadd.f32 %v4892, %v4856
        %v4925 = vadd.f32 %v4893, %v4859
        %4926 = vst [vmem:[#allocation3] sm:$0xff] %v4894
        %4927 = vst [vmem:[#allocation3 + $0x8] sm:$0xff] %v4895
        %4928 = vst [vmem:[#allocation3 + $0x10] sm:$0xff] %v4896
        %4929 = vst [vmem:[#allocation3 + $0x18] sm:$0xff] %v4897
        %4930 = vst [vmem:[#allocation3 + $0x20] sm:$0xff] %v4898
        %4931 = vst [vmem:[#allocation3 + $0x28] sm:$0xff] %v4899
        %4932 = vst [vmem:[#allocation3 + $0x30] sm:$0xff] %v4900
        %4933 = vst [vmem:[#allocation3 + $0x38] sm:$0xff] %v4901
        %4934 = vst [vmem:[#allocation3 + $0x40] sm:$0xff] %v4902
        %4935 = vst [vmem:[#allocation3 + $0x48] sm:$0xff] %v4903
        %4936 = vst [vmem:[#allocation3 + $0x50] sm:$0xff] %v4904
        %4937 = vst [vmem:[#allocation3 + $0x58] sm:$0xff] %v4905
        %4938 = vst [vmem:[#allocation3 + $0x60] sm:$0xff] %v4906
        %4939 = vst [vmem:[#allocation3 + $0x68] sm:$0xff] %v4907
        %4940 = vst [vmem:[#allocation3 + $0x70] sm:$0xff] %v4908
        %4941 = vst [vmem:[#allocation3 + $0x78] sm:$0xff] %v4909
        %4942 = vst [vmem:[#allocation3 + $0x80] sm:$0xff] %v4910
        %4943 = vst [vmem:[#allocation3 + $0x88] sm:$0xff] %v4911
        %4944 = vst [vmem:[#allocation3 + $0x90] sm:$0xff] %v4912
        %4945 = vst [vmem:[#allocation3 + $0x98] sm:$0xff] %v4913
        %4946 = vst [vmem:[#allocation3 + $0xa0] sm:$0xff] %v4914
        %4947 = vst [vmem:[#allocation3 + $0xa8] sm:$0xff] %v4915
        %4948 = vst [vmem:[#allocation3 + $0xb0] sm:$0xff] %v4916
        %4949 = vst [vmem:[#allocation3 + $0xb8] sm:$0xff] %v4917
        %4950 = vst [vmem:[#allocation3 + $0xc0] sm:$0xff] %v4918
        %4951 = vst [vmem:[#allocation3 + $0xc8] sm:$0xff] %v4919
        %4952 = vst [vmem:[#allocation3 + $0xd0] sm:$0xff] %v4920
        %4953 = vst [vmem:[#allocation3 + $0xd8] sm:$0xff] %v4921
        %4954 = vst [vmem:[#allocation3 + $0xe0] sm:$0xff] %v4922
        %4955 = vst [vmem:[#allocation3 + $0xe8] sm:$0xff] %v4923
        %4956 = vst [vmem:[#allocation3 + $0xf0] sm:$0xff] %v4924
        %4957 = vst [vmem:[#allocation3 + $0xf8] sm:$0xff] %v4925
        %v4958 = vld [vmem:[#allocation3] sm:$0xff]
        %v4959 = vld [vmem:[#allocation3 + $0x8] sm:$0xff]
        %v4960 = vld [vmem:[#allocation3 + $0x10] sm:$0xff]
        %v4961 = vld [vmem:[#allocation3 + $0x18] sm:$0xff]
        %v4962 = vld [vmem:[#allocation3 + $0x20] sm:$0xff]
        %v4963 = vld [vmem:[#allocation3 + $0x28] sm:$0xff]
        %v4964 = vld [vmem:[#allocation3 + $0x30] sm:$0xff]
        %v4965 = vld [vmem:[#allocation3 + $0x38] sm:$0xff]
        %v4966 = vld [vmem:[#allocation3 + $0x40] sm:$0xff]
        %v4967 = vld [vmem:[#allocation3 + $0x48] sm:$0xff]
        %v4968 = vld [vmem:[#allocation3 + $0x50] sm:$0xff]
        %v4969 = vld [vmem:[#allocation3 + $0x58] sm:$0xff]
        %v4970 = vld [vmem:[#allocation3 + $0x60] sm:$0xff]
        %v4971 = vld [vmem:[#allocation3 + $0x68] sm:$0xff]
        %v4972 = vld [vmem:[#allocation3 + $0x70] sm:$0xff]
        %v4973 = vld [vmem:[#allocation3 + $0x78] sm:$0xff]
        %v4974 = vld [vmem:[#allocation3 + $0x80] sm:$0xff]
        %v4975 = vld [vmem:[#allocation3 + $0x88] sm:$0xff]
        %v4976 = vld [vmem:[#allocation3 + $0x90] sm:$0xff]
        %v4977 = vld [vmem:[#allocation3 + $0x98] sm:$0xff]
        %v4978 = vld [vmem:[#allocation3 + $0xa0] sm:$0xff]
        %v4979 = vld [vmem:[#allocation3 + $0xa8] sm:$0xff]
        %v4980 = vld [vmem:[#allocation3 + $0xb0] sm:$0xff]
        %v4981 = vld [vmem:[#allocation3 + $0xb8] sm:$0xff]
        %v4982 = vld [vmem:[#allocation3 + $0xc0] sm:$0xff]
        %v4983 = vld [vmem:[#allocation3 + $0xc8] sm:$0xff]
        %v4984 = vld [vmem:[#allocation3 + $0xd0] sm:$0xff]
        %v4985 = vld [vmem:[#allocation3 + $0xd8] sm:$0xff]
        %v4986 = vld [vmem:[#allocation3 + $0xe0] sm:$0xff]
        %v4987 = vld [vmem:[#allocation3 + $0xe8] sm:$0xff]
        %v4988 = vld [vmem:[#allocation3 + $0xf0] sm:$0xff]
        %v4989 = vld [vmem:[#allocation3 + $0xf8] sm:$0xff]
        %v4990 = vld [vmem:[%s4] sm:$0x1]
        %v4992 = vlaneseq
        %v4993 = vshrl.u32 %v4992, 7
        %v4994 = vsub.s32 0, %v4993
        %v4995 = vrot.slane %v4990, %v4994
        %v4997 = vadd.f32 %v4958, %v4995
        %v4998 = vadd.f32 %v4959, %v4995
        %v4999 = vadd.f32 %v4960, %v4995
        %v5000 = vadd.f32 %v4961, %v4995
        %v5001 = vadd.f32 %v4962, %v4995
        %v5002 = vadd.f32 %v4963, %v4995
        %v5003 = vadd.f32 %v4964, %v4995
        %v5004 = vadd.f32 %v4965, %v4995
        %v5005 = vadd.f32 %v4966, %v4995
        %v5006 = vadd.f32 %v4967, %v4995
        %v5007 = vadd.f32 %v4968, %v4995
        %v5008 = vadd.f32 %v4969, %v4995
        %v5009 = vadd.f32 %v4970, %v4995
        %v5010 = vadd.f32 %v4971, %v4995
        %v5011 = vadd.f32 %v4972, %v4995
        %v5012 = vadd.f32 %v4973, %v4995
        %v5013 = vadd.f32 %v4974, %v4995
        %v5014 = vadd.f32 %v4975, %v4995
        %v5015 = vadd.f32 %v4976, %v4995
        %v5016 = vadd.f32 %v4977, %v4995
        %v5017 = vadd.f32 %v4978, %v4995
        %v5018 = vadd.f32 %v4979, %v4995
        %v5019 = vadd.f32 %v4980, %v4995
        %v5020 = vadd.f32 %v4981, %v4995
        %v5021 = vadd.f32 %v4982, %v4995
        %v5022 = vadd.f32 %v4983, %v4995
        %v5023 = vadd.f32 %v4984, %v4995
        %v5024 = vadd.f32 %v4985, %v4995
        %v5025 = vadd.f32 %v4986, %v4995
        %v5026 = vadd.f32 %v4987, %v4995
        %v5027 = vadd.f32 %v4988, %v4995
        %v5028 = vadd.f32 %v4989, %v4995
        %v5029 = vld [vmem:[%s234] sm:$0xff]
        %v5030 = vld [vmem:[%s234 + $0x8] sm:$0xff]
        %v5031 = vld [vmem:[%s234 + $0x10] sm:$0xff]
        %v5032 = vld [vmem:[%s234 + $0x18] sm:$0xff]
        %v5033 = vld [vmem:[%s234 + $0x20] sm:$0xff]
        %v5034 = vld [vmem:[%s234 + $0x28] sm:$0xff]
        %v5035 = vld [vmem:[%s234 + $0x30] sm:$0xff]
        %v5036 = vld [vmem:[%s234 + $0x38] sm:$0xff]
        %v5037 = vld [vmem:[%s234 + $0x40] sm:$0xff]
        %v5038 = vld [vmem:[%s234 + $0x48] sm:$0xff]
        %v5039 = vld [vmem:[%s234 + $0x50] sm:$0xff]
        %v5040 = vld [vmem:[%s234 + $0x58] sm:$0xff]
        %v5041 = vld [vmem:[%s234 + $0x60] sm:$0xff]
        %v5042 = vld [vmem:[%s234 + $0x68] sm:$0xff]
        %v5043 = vld [vmem:[%s234 + $0x70] sm:$0xff]
        %v5044 = vld [vmem:[%s234 + $0x78] sm:$0xff]
        %v5045 = vld [vmem:[%s234 + $0x80] sm:$0xff]
        %v5046 = vld [vmem:[%s234 + $0x88] sm:$0xff]
        %v5047 = vld [vmem:[%s234 + $0x90] sm:$0xff]
        %v5048 = vld [vmem:[%s234 + $0x98] sm:$0xff]
        %v5049 = vld [vmem:[%s234 + $0xa0] sm:$0xff]
        %v5050 = vld [vmem:[%s234 + $0xa8] sm:$0xff]
        %v5051 = vld [vmem:[%s234 + $0xb0] sm:$0xff]
        %v5052 = vld [vmem:[%s234 + $0xb8] sm:$0xff]
        %v5053 = vld [vmem:[%s234 + $0xc0] sm:$0xff]
        %v5054 = vld [vmem:[%s234 + $0xc8] sm:$0xff]
        %v5055 = vld [vmem:[%s234 + $0xd0] sm:$0xff]
        %v5056 = vld [vmem:[%s234 + $0xd8] sm:$0xff]
        %v5057 = vld [vmem:[%s234 + $0xe0] sm:$0xff]
        %v5058 = vld [vmem:[%s234 + $0xe8] sm:$0xff]
        %v5059 = vld [vmem:[%s234 + $0xf0] sm:$0xff]
        %v5060 = vld [vmem:[%s234 + $0xf8] sm:$0xff]
        %v5061 = vadd.f32 %v4997, %v5029
        %v5062 = vadd.f32 %v4998, %v5030
        %v5063 = vadd.f32 %v4999, %v5031
        %v5064 = vadd.f32 %v5000, %v5032
        %v5065 = vadd.f32 %v5001, %v5033
        %v5066 = vadd.f32 %v5002, %v5034
        %v5067 = vadd.f32 %v5003, %v5035
        %v5068 = vadd.f32 %v5004, %v5036
        %v5069 = vadd.f32 %v5005, %v5037
        %v5070 = vadd.f32 %v5006, %v5038
        %v5071 = vadd.f32 %v5007, %v5039
        %v5072 = vadd.f32 %v5008, %v5040
        %v5073 = vadd.f32 %v5009, %v5041
        %v5074 = vadd.f32 %v5010, %v5042
        %v5075 = vadd.f32 %v5011, %v5043
        %v5076 = vadd.f32 %v5012, %v5044
        %v5077 = vadd.f32 %v5013, %v5045
        %v5078 = vadd.f32 %v5014, %v5046
        %v5079 = vadd.f32 %v5015, %v5047
        %v5080 = vadd.f32 %v5016, %v5048
        %v5081 = vadd.f32 %v5017, %v5049
        %v5082 = vadd.f32 %v5018, %v5050
        %v5083 = vadd.f32 %v5019, %v5051
        %v5084 = vadd.f32 %v5020, %v5052
        %v5085 = vadd.f32 %v5021, %v5053
        %v5086 = vadd.f32 %v5022, %v5054
        %v5087 = vadd.f32 %v5023, %v5055
        %v5088 = vadd.f32 %v5024, %v5056
        %v5089 = vadd.f32 %v5025, %v5057
        %v5090 = vadd.f32 %v5026, %v5058
        %v5091 = vadd.f32 %v5027, %v5059
        %v5092 = vadd.f32 %v5028, %v5060
        %v5093 = vmax.f32 %v5061, 0.0
        %v5094 = vmax.f32 %v5062, 0.0
        %v5095 = vmax.f32 %v5063, 0.0
        %v5096 = vmax.f32 %v5064, 0.0
        %v5097 = vmax.f32 %v5065, 0.0
        %v5098 = vmax.f32 %v5066, 0.0
        %v5099 = vmax.f32 %v5067, 0.0
        %v5100 = vmax.f32 %v5068, 0.0
        %v5101 = vmax.f32 %v5069, 0.0
        %v5102 = vmax.f32 %v5070, 0.0
        %v5103 = vmax.f32 %v5071, 0.0
        %v5104 = vmax.f32 %v5072, 0.0
        %v5105 = vmax.f32 %v5073, 0.0
        %v5106 = vmax.f32 %v5074, 0.0
        %v5107 = vmax.f32 %v5075, 0.0
        %v5108 = vmax.f32 %v5076, 0.0
        %v5109 = vmax.f32 %v5077, 0.0
        %v5110 = vmax.f32 %v5078, 0.0
        %v5111 = vmax.f32 %v5079, 0.0
        %v5112 = vmax.f32 %v5080, 0.0
        %v5113 = vmax.f32 %v5081, 0.0
        %v5114 = vmax.f32 %v5082, 0.0
        %v5115 = vmax.f32 %v5083, 0.0
        %v5116 = vmax.f32 %v5084, 0.0
        %v5117 = vmax.f32 %v5085, 0.0
        %v5118 = vmax.f32 %v5086, 0.0
        %v5119 = vmax.f32 %v5087, 0.0
        %v5120 = vmax.f32 %v5088, 0.0
        %v5121 = vmax.f32 %v5089, 0.0
        %v5122 = vmax.f32 %v5090, 0.0
        %v5123 = vmax.f32 %v5091, 0.0
        %v5124 = vmax.f32 %v5092, 0.0
        %vm5125 = vcmask 31744
        %5126 = vst.msk [vmem:[%s273] sm:$0xff] %vm5125, %v5093
        %5127 = vst.msk [vmem:[%s273 + $0x8] sm:$0xff] %vm5125, %v5094
        %5128 = vst.msk [vmem:[%s273 + $0x10] sm:$0xff] %vm5125, %v5095
        %5129 = vst.msk [vmem:[%s273 + $0x18] sm:$0xff] %vm5125, %v5096
        %5130 = vst.msk [vmem:[%s273 + $0x20] sm:$0xff] %vm5125, %v5097
        %5131 = vst.msk [vmem:[%s273 + $0x28] sm:$0xff] %vm5125, %v5098
        %5132 = vst.msk [vmem:[%s273 + $0x30] sm:$0xff] %vm5125, %v5099
        %5133 = vst.msk [vmem:[%s273 + $0x38] sm:$0xff] %vm5125, %v5100
        %5134 = vst.msk [vmem:[%s273 + $0x40] sm:$0xff] %vm5125, %v5101
        %5135 = vst.msk [vmem:[%s273 + $0x48] sm:$0xff] %vm5125, %v5102
        %5136 = vst.msk [vmem:[%s273 + $0x50] sm:$0xff] %vm5125, %v5103
        %5137 = vst.msk [vmem:[%s273 + $0x58] sm:$0xff] %vm5125, %v5104
        %5138 = vst.msk [vmem:[%s273 + $0x60] sm:$0xff] %vm5125, %v5105
        %5139 = vst.msk [vmem:[%s273 + $0x68] sm:$0xff] %vm5125, %v5106
        %5140 = vst.msk [vmem:[%s273 + $0x70] sm:$0xff] %vm5125, %v5107
        %5141 = vst.msk [vmem:[%s273 + $0x78] sm:$0xff] %vm5125, %v5108
        %5142 = vst.msk [vmem:[%s273 + $0x80] sm:$0xff] %vm5125, %v5109
        %5143 = vst.msk [vmem:[%s273 + $0x88] sm:$0xff] %vm5125, %v5110
        %5144 = vst.msk [vmem:[%s273 + $0x90] sm:$0xff] %vm5125, %v5111
        %5145 = vst.msk [vmem:[%s273 + $0x98] sm:$0xff] %vm5125, %v5112
        %5146 = vst.msk [vmem:[%s273 + $0xa0] sm:$0xff] %vm5125, %v5113
        %5147 = vst.msk [vmem:[%s273 + $0xa8] sm:$0xff] %vm5125, %v5114
        %5148 = vst.msk [vmem:[%s273 + $0xb0] sm:$0xff] %vm5125, %v5115
        %5149 = vst.msk [vmem:[%s273 + $0xb8] sm:$0xff] %vm5125, %v5116
        %5150 = vst.msk [vmem:[%s273 + $0xc0] sm:$0xff] %vm5125, %v5117
        %5151 = vst.msk [vmem:[%s273 + $0xc8] sm:$0xff] %vm5125, %v5118
        %5152 = vst.msk [vmem:[%s273 + $0xd0] sm:$0xff] %vm5125, %v5119
        %5153 = vst.msk [vmem:[%s273 + $0xd8] sm:$0xff] %vm5125, %v5120
        %5154 = vst.msk [vmem:[%s273 + $0xe0] sm:$0xff] %vm5125, %v5121
        %5155 = vst.msk [vmem:[%s273 + $0xe8] sm:$0xff] %vm5125, %v5122
        %5156 = vst.msk [vmem:[%s273 + $0xf0] sm:$0xff] %vm5125, %v5123
        %5157 = vst.msk [vmem:[%s273 + $0xf8] sm:$0xff] %vm5125, %v5124
        %p5158 = scmp.lt.s32.totalorder %s20, 1
        %s5159 = scalar_select %p5158, %s20, 1
        %s5160 = smul.addr %s5159, 32
        %s5161 = smul.addr %s5160, 8
        %s5162 = scalar_lea.vmem %s5, %s5161
        // Predicated region
        $region53: #{tpu_custom_call.1} parent=39 // pred_check
          %p5163 = pneg %p148
        $region54: #{tpu_custom_call.1} parent=39 // pred_check_branch
          %5165 = sbr.rel (%p5163) target = $region56
        $region55: #{tpu_custom_call.1} parent=39 // pred_region
          _
        $region56: #{tpu_custom_call.1} parent=39 // pred_fallthru
          _
      $region40: #{tpu_custom_call.1} parent=5 // pred_fallthru
        _
      %p5166 = scmp.le.s32.totalorder 2, %s15
      // Predicated region
      $region57: #{tpu_custom_call.1} parent=5 // pred_check
        %p5167 = pneg %p5166
      $region58: #{tpu_custom_call.1} parent=5 // pred_check_branch
        %5169 = sbr.rel (%p5167) target = $region60
      $region59: #{tpu_custom_call.1} parent=5 // pred_region
        %s5170 = ssub.s32 %s15, 2
        // Predicated region
        $region61: #{tpu_custom_call.1} parent=59 // pred_check
          %p5171 = pneg %p154
        $region62: #{tpu_custom_call.1} parent=59 // pred_check_branch
          %5173 = sbr.rel (%p5171) target = $region64
        $region63: #{tpu_custom_call.1} parent=59 // pred_region
          %p5174 = scmp.lt.s32.totalorder %s21, 1
          %s5175 = scalar_select %p5174, %s21, 1
          %s5176 = smul.addr %s5175, 32
          %s5177 = smul.addr %s5176, 8
          %s5178 = scalar_lea.vmem %s5, %s5177
        $region64: #{tpu_custom_call.1} parent=59 // pred_fallthru
          _
      $region60: #{tpu_custom_call.1} parent=5 // pred_fallthru
        _
    $region6: #{tpu_custom_call.1} parent=1 // loop_footer
      %s19 = sadd.s32 1, %s15
    $region7: #{tpu_custom_call.1} parent=1 // loop_footer_branch
      %14 = sbr.rel target = $region3
    $region8: #{tpu_custom_call.1} parent=1 // loop_exit
      _
    %5179 = vsyncpa [#allocation5], 1
    %s5180 = scalar_lea.sflag [#allocation5], 1
    %5181 = vsyncpa %s5180, 1
    %5182 = vsyncpa [#allocation7], 1

</llo_original>
